<compile_context>
chip_gen: v6e
topology: v6e:2x2x1
jax: 0.10.0
libtpu: 0.0.40
codegen_flags: <defaults>
</compile_context>

<pallas_src>
import numpy as np
import jax
import jax.numpy as jnp
from jax import lax
from jax.experimental import pallas as pl

HIDDEN = 64
LAYERS = 2
BIDIR = True


# ------------------------------- Fused kernel ----------------------------------- #
def make_fused_kernel(T, B, H):
    G = 4 * H

    def kernel(x_ref,                        # (T*B, F) time-major flattened input
               wih1_ref, lb1_ref, whh1_ref,  # layer 1: (F, 8H), (1, 8H), (2H, 4H)
               wih2_ref, lb2_ref, whh2_ref,  # layer 2: (2H, 8H), (1, 8H), (2H, 4H)
               ln_g_ref, ln_b_ref,           # LayerNorm affine (1, 2H)
               w1_ref, bh1_ref,              # head Linear(2H, 32): (2H, 32), (1, 32)
               w2_ref, bh2_ref,              # head Linear(32, 1): (1, 32), (1, 1)
               out_ref):                     # (B, 1)
        f32 = jnp.float32

        # Block mask: fwd rows keep columns [0, H), bwd rows keep columns [H, 2H) of
        # the stacked "wide" hidden state (makes one matmul serve both directions).
        row = lax.broadcasted_iota(jnp.int32, (2 * B, 2 * H), 0)
        col = lax.broadcasted_iota(jnp.int32, (2 * B, 2 * H), 1)
        fwd_row = (row < B).astype(f32)
        left_col = (col < H).astype(f32)
        mask_wide = fwd_row * left_col + (1.0 - fwd_row) * (1.0 - left_col)

        def bidir_steps(gx_all, whh_ref):
            """One bidirectional LSTM layer.

            gx_all : (T*B, 8H) precomputed input-projection gates,
                     columns = [fwd 4H | bwd 4H], gate order (i, f, o, g).
            whh_ref: (2H, 4H) row-stacked recurrent weights [Whh_fwd^T ; Whh_bwd^T].
            Returns list of per-step hidden states, each (2B, H):
                     rows [0, B) = fwd at time s, rows [B, 2B) = bwd at time T-1-s.
            """
            h_wide = jnp.zeros((2 * B, 2 * H), f32)
            c = jnp.zeros((2 * B, H), f32)
            hs = []
            for s in range(T):  # fully unrolled; T is a trace-time constant
                gx = jnp.concatenate(
                    [gx_all[s * B:(s + 1) * B, :G],               # fwd: time s
                     gx_all[(T - 1 - s) * B:(T - s) * B, G:]],    # bwd: time T-1-s
                    axis=0)                                       # (2B, 4H)
                gates = gx + jnp.dot(h_wide, whh_ref[...],
                                     preferred_element_type=f32)  # (2B, 4H)
                # gate order (i, f, o, g): sigmoid on one contiguous 3H block
                sig = jax.nn.sigmoid(gates[:, :3 * H])
                i_g = sig[:, :H]
                f_g = sig[:, H:2 * H]
                o_g = sig[:, 2 * H:3 * H]
                g_g = jnp.tanh(gates[:, 3 * H:])
                c = f_g * c + i_g * g_g
                h = o_g * jnp.tanh(c)                             # (2B, H)
                # rebuild the block-structured wide state for the next step
                h_wide = jnp.concatenate([h, h], axis=-1) * mask_wide
                hs.append(h)
            return hs

        # ---------- layer 1: hoisted input projection + recurrence ----------
        gx1 = jnp.dot(x_ref[...], wih1_ref[...],
                      preferred_element_type=f32) + lb1_ref[...]       # (T*B, 8H)
        hs1 = bidir_steps(gx1, whh1_ref)
        # layer-1 sequence output (VMEM only), row t*B+b = [h_fwd(t) | h_bwd(t)]
        fw1 = jnp.concatenate([hs1[t][:B] for t in range(T)], axis=0)          # (T*B, H)
        bw1 = jnp.concatenate([hs1[T - 1 - t][B:] for t in range(T)], axis=0)  # (T*B, H)
        y1 = jnp.concatenate([fw1, bw1], axis=-1)                              # (T*B, 2H)
        # nn.LSTM inter-layer Dropout(0.1) is identity in eval mode.

        # ---------- layer 2: only out[:, -1, :] is needed downstream ----------
        gx2 = jnp.dot(y1, wih2_ref[...],
                      preferred_element_type=f32) + lb2_ref[...]       # (T*B, 8H)
        hs2 = bidir_steps(gx2, whh2_ref)
        # out[:, -1, :] = [fwd h at time T-1 | bwd h at time T-1 (its first step)]
        last = jnp.concatenate([hs2[T - 1][:B], hs2[0][B:]], axis=-1)  # (B, 2H)

        # ---------- head: LayerNorm(2H) -> Linear(2H,32) -> Tanh -> Linear(32,1) ----
        mean = jnp.mean(last, axis=-1, keepdims=True)
        cent = last - mean
        var = jnp.mean(cent * cent, axis=-1, keepdims=True)
        normed = cent * lax.rsqrt(var + 1e-5) * ln_g_ref[...] + ln_b_ref[...]
        h1 = jnp.tanh(jnp.dot(normed, w1_ref[...],
                              preferred_element_type=f32) + bh1_ref[...])      # (B, 32)
        out_ref[...] = (jnp.sum(h1 * w2_ref[...], axis=-1, keepdims=True)
                        + bh2_ref[...])

    return kernel


# --------------------------- Host-side weight packing ---------------------------- #
def _reorder_gates(a, H):
    """Permute PyTorch gate blocks (i, f, g, o) -> (i, f, o, g) along axis 0."""
    return jnp.concatenate([a[:2 * H], a[3 * H:4 * H], a[2 * H:3 * H]], axis=0)


def _prep_direction(w_ih, w_hh, b_ih, b_hh):
    H = w_hh.shape[1]
    wih_t = jnp.transpose(_reorder_gates(w_ih, H))               # (in, 4H)
    whh_t = jnp.transpose(_reorder_gates(w_hh, H))               # (H, 4H)
    bias = _reorder_gates(b_ih + b_hh, H).reshape(1, 4 * H)      # (1, 4H)
    return wih_t, whh_t, bias


def _prep_layer(layer):
    wf, hf, bf = _prep_direction(*layer["fwd"])
    wb, hb, bb = _prep_direction(*layer["bwd"])
    wih_cat = jnp.concatenate([wf, wb], axis=1)     # (in, 8H)  [fwd | bwd]
    bias_cat = jnp.concatenate([bf, bb], axis=1)    # (1, 8H)
    whh_stack = jnp.concatenate([hf, hb], axis=0)   # (2H, 4H)  [fwd ; bwd]
    return wih_cat, bias_cat, whh_stack


# ------------------------------- Full forward pass ------------------------------ #
def lstm_reg_forward(x_btf, params):
    """x_btf: (B, T, n_feat) fp32 (PyTorch batch_first).  Returns (B, 1)."""
    B, T, F = x_btf.shape
    H = HIDDEN
    # time-major flattened input: row t*B + b = x[b, t]
    x_flat = jnp.transpose(x_btf, (1, 0, 2)).astype(jnp.float32).reshape(T * B, F)
    wih1, lb1, whh1 = _prep_layer(params["lstm"][0])
    wih2, lb2, whh2 = _prep_layer(params["lstm"][1])
    kernel = make_fused_kernel(T, B, H)
    return pl.pallas_call(
        kernel,
        out_shape=jax.ShapeDtypeStruct((B, 1), jnp.float32),
    )(x_flat, wih1, lb1, whh1, wih2, lb2, whh2,
      params["ln_g"].reshape(1, -1), params["ln_b"].reshape(1, -1),
      jnp.transpose(params["w1"]), params["b1"].reshape(1, -1),
      params["w2"].reshape(1, -1), params["b2"].reshape(1, 1))


# --------------------------- Deterministic parameter init ----------------------- #
def init_params(key, n_feat, hidden=HIDDEN, layers=LAYERS, bidir=BIDIR):
    factor = 2 if bidir else 1
    k_lstm = 1.0 / float(np.sqrt(hidden))
    keys = jax.random.split(key, 64)
    ki = 0
    params = {"lstm": []}
    dirs = ["fwd", "bwd"] if bidir else ["fwd"]
    for l in range(layers):
        in_size = n_feat if l == 0 else hidden * factor
        layer = {}
        for d in dirs:
            w_ih = jax.random.uniform(keys[ki], (4 * hidden, in_size), jnp.float32,
                                      -k_lstm, k_lstm); ki += 1
            w_hh = jax.random.uniform(keys[ki], (4 * hidden, hidden), jnp.float32,
                                      -k_lstm, k_lstm); ki += 1
            b_ih = jax.random.uniform(keys[ki], (4 * hidden,), jnp.float32,
                                      -k_lstm, k_lstm); ki += 1
            b_hh = jax.random.uniform(keys[ki], (4 * hidden,), jnp.float32,
                                      -k_lstm, k_lstm); ki += 1
            layer[d] = (w_ih, w_hh, b_ih, b_hh)
        params["lstm"].append(layer)
    params["ln_g"] = jnp.ones((hidden * factor,), jnp.float32)
    params["ln_b"] = jnp.zeros((hidden * factor,), jnp.float32)
    k1 = 1.0 / float(np.sqrt(hidden * factor))
    params["w1"] = jax.random.uniform(keys[ki], (32, hidden * factor), jnp.float32, -k1, k1); ki += 1
    params["b1"] = jax.random.uniform(keys[ki], (32,), jnp.float32, -k1, k1); ki += 1
    k2 = 1.0 / float(np.sqrt(32))
    params["w2"] = jax.random.uniform(keys[ki], (1, 32), jnp.float32, -k2, k2); ki += 1
    params["b2"] = jax.random.uniform(keys[ki], (1,), jnp.float32, -k2, k2); ki += 1
    return params


# ------------------------------- Pure-JAX reference ------------------------------ #
def ref_forward(x_btf, params):
    B, T, _ = x_btf.shape
    H = HIDDEN
    inp = x_btf.astype(jnp.float32)

    def run(xs, w_ih, w_hh, b_ih, b_hh):
        h = jnp.zeros((B, H), jnp.float32)
        c = jnp.zeros((B, H), jnp.float32)
        outs = []
        for t in range(xs.shape[1]):
            gates = xs[:, t] @ w_ih.T + h @ w_hh.T + b_ih + b_hh
            i = jax.nn.sigmoid(gates[:, :H]); f = jax.nn.sigmoid(gates[:, H:2 * H])
            g = jnp.tanh(gates[:, 2 * H:3 * H]); o = jax.nn.sigmoid(gates[:, 3 * H:])
            c = f * c + i * g
            h = o * jnp.tanh(c)
            outs.append(h)
        return jnp.stack(outs, axis=1)

    for l in range(LAYERS):
        layer = params["lstm"][l]
        fw = run(inp, *layer["fwd"])
        if BIDIR:
            bw = run(inp[:, ::-1], *layer["bwd"])[:, ::-1]
            inp = jnp.concatenate([fw, bw], axis=-1)
        else:
            inp = fw
    last = inp[:, -1]
    mean = last.mean(-1, keepdims=True)
    var = ((last - mean) ** 2).mean(-1, keepdims=True)
    normed = (last - mean) / jnp.sqrt(var + 1e-5) * params["ln_g"] + params["ln_b"]
    h1 = jnp.tanh(normed @ params["w1"].T + params["b1"])
    return h1 @ params["w2"].T + params["b2"]


if __name__ == "__main__":
    key = jax.random.PRNGKey(0)
    kx, kp = jax.random.split(key)
    B, T, F = 2, 8, 8                       # batch=2, seq=8, n_feat=8
    x = jax.random.normal(kx, (B, T, F), jnp.float32)
    params = init_params(kp, F)

    out = lstm_reg_forward(x, params)
    out = jax.block_until_ready(out)
    assert out.shape == (B, 1)

    ref = ref_forward(x, params)
    np.testing.assert_allclose(np.asarray(out), np.asarray(ref), rtol=2e-2, atol=2e-2)

    print("KERNEL_OK")
</pallas_src>

<mosaic_0001>
module attributes {stable_mosaic.version = 11 : i64} {
  func.func @kernel(%arg0: memref<16x8xf32, #tpu.memory_space<vmem>>, %arg1: memref<8x512xf32, #tpu.memory_space<vmem>>, %arg2: memref<1x512xf32, #tpu.memory_space<vmem>>, %arg3: memref<128x256xf32, #tpu.memory_space<vmem>>, %arg4: memref<128x512xf32, #tpu.memory_space<vmem>>, %arg5: memref<1x512xf32, #tpu.memory_space<vmem>>, %arg6: memref<128x256xf32, #tpu.memory_space<vmem>>, %arg7: memref<1x128xf32, #tpu.memory_space<vmem>>, %arg8: memref<1x128xf32, #tpu.memory_space<vmem>>, %arg9: memref<128x32xf32, #tpu.memory_space<vmem>>, %arg10: memref<1x32xf32, #tpu.memory_space<vmem>>, %arg11: memref<1x32xf32, #tpu.memory_space<vmem>>, %arg12: memref<1x1xf32, #tpu.memory_space<vmem>>, %arg13: memref<2x1xf32, #tpu.memory_space<vmem>>) attributes {dimension_semantics = [], scalar_prefetch = 0 : i64, scratch_operands = 0 : i64, tpu.core_type = #tpu.core_type<tc>} {
    %0 = tpu.iota {dimensions = array<i32: 0>} : vector<4x128xi32>
    %1 = tpu.iota {dimensions = array<i32: 1>} : vector<4x128xi32>
    %c2_i32 = arith.constant 2 : i32
    %2 = vector.broadcast %c2_i32 : i32 to vector<4x128xi32>
    %3 = arith.cmpi slt, %0, %2 : vector<4x128xi32>
    %4 = arith.extui %3 : vector<4x128xi1> to vector<4x128xi32>
    %5 = arith.sitofp %4 : vector<4x128xi32> to vector<4x128xf32>
    %c64_i32 = arith.constant 64 : i32
    %6 = vector.broadcast %c64_i32 : i32 to vector<4x128xi32>
    %7 = arith.cmpi slt, %1, %6 : vector<4x128xi32>
    %8 = arith.extui %7 : vector<4x128xi1> to vector<4x128xi32>
    %9 = arith.sitofp %8 : vector<4x128xi32> to vector<4x128xf32>
    %10 = arith.mulf %5, %9 : vector<4x128xf32>
    %cst = arith.constant 1.000000e+00 : f32
    %11 = vector.broadcast %cst : f32 to vector<4x128xf32>
    %12 = arith.subf %11, %5 : vector<4x128xf32>
    %cst_0 = arith.constant 1.000000e+00 : f32
    %13 = vector.broadcast %cst_0 : f32 to vector<4x128xf32>
    %14 = arith.subf %13, %9 : vector<4x128xf32>
    %15 = arith.mulf %12, %14 : vector<4x128xf32>
    %16 = arith.addf %10, %15 : vector<4x128xf32>
    %c0 = arith.constant 0 : index
    %c0_1 = arith.constant 0 : index
    %17 = vector.load %arg0[%c0, %c0_1] : memref<16x8xf32, #tpu.memory_space<vmem>>, vector<16x8xf32>
    %c0_2 = arith.constant 0 : index
    %c0_3 = arith.constant 0 : index
    %18 = vector.load %arg1[%c0_2, %c0_3] : memref<8x512xf32, #tpu.memory_space<vmem>>, vector<8x512xf32>
    %cst_4 = arith.constant dense<0.000000e+00> : vector<16x512xf32>
    %19 = tpu.matmul %17, %18, %cst_4 {dimension_numbers = #tpu.dot_dimension_numbers<[1], [0], [0], [1], [0, 0, 1, 1], [], []>} : vector<16x8xf32>, vector<8x512xf32>, vector<16x512xf32> -> vector<16x512xf32>
    %c0_5 = arith.constant 0 : index
    %c0_6 = arith.constant 0 : index
    %20 = vector.load %arg2[%c0_5, %c0_6] : memref<1x512xf32, #tpu.memory_space<vmem>>, vector<1x512xf32>
    %21 = vector.broadcast %20 : vector<1x512xf32> to vector<16x512xf32>
    %22 = arith.addf %19, %21 : vector<16x512xf32>
    %cst_7 = arith.constant 0.000000e+00 : f32
    %23 = vector.broadcast %cst_7 : f32 to vector<4x128xf32>
    %cst_8 = arith.constant 0.000000e+00 : f32
    %24 = vector.broadcast %cst_8 : f32 to vector<4x64xf32>
    %25 = vector.extract_strided_slice %22 {offsets = [0, 0], sizes = [2, 256], strides = [1, 1]} : vector<16x512xf32> to vector<2x256xf32>
    %26 = vector.extract_strided_slice %22 {offsets = [14, 256], sizes = [2, 256], strides = [1, 1]} : vector<16x512xf32> to vector<2x256xf32>
    %27 = tpu.concatenate %25, %26 in 0 : vector<2x256xf32>, vector<2x256xf32> -> vector<4x256xf32>
    %c0_9 = arith.constant 0 : index
    %c0_10 = arith.constant 0 : index
    %28 = vector.load %arg3[%c0_9, %c0_10] : memref<128x256xf32, #tpu.memory_space<vmem>>, vector<128x256xf32>
    %cst_11 = arith.constant dense<0.000000e+00> : vector<4x256xf32>
    %29 = tpu.matmul %23, %28, %cst_11 {dimension_numbers = #tpu.dot_dimension_numbers<[1], [0], [0], [1], [0, 0, 1, 1], [], []>} : vector<4x128xf32>, vector<128x256xf32>, vector<4x256xf32> -> vector<4x256xf32>
    %30 = arith.addf %27, %29 : vector<4x256xf32>
    %31 = vector.extract_strided_slice %30 {offsets = [0, 0], sizes = [4, 192], strides = [1, 1]} : vector<4x256xf32> to vector<4x192xf32>
    %32 = arith.negf %31 : vector<4x192xf32>
    %33 = math.exp %32 : vector<4x192xf32>
    %cst_12 = arith.constant 1.000000e+00 : f32
    %34 = vector.broadcast %cst_12 : f32 to vector<4x192xf32>
    %35 = arith.addf %34, %33 : vector<4x192xf32>
    %36 = arith.divf %34, %35 : vector<4x192xf32>
    %37 = vector.extract_strided_slice %36 {offsets = [0, 0], sizes = [4, 64], strides = [1, 1]} : vector<4x192xf32> to vector<4x64xf32>
    %38 = vector.extract_strided_slice %36 {offsets = [0, 64], sizes = [4, 64], strides = [1, 1]} : vector<4x192xf32> to vector<4x64xf32>
    %39 = vector.extract_strided_slice %36 {offsets = [0, 128], sizes = [4, 64], strides = [1, 1]} : vector<4x192xf32> to vector<4x64xf32>
    %40 = vector.extract_strided_slice %30 {offsets = [0, 192], sizes = [4, 64], strides = [1, 1]} : vector<4x256xf32> to vector<4x64xf32>
    %41 = math.tanh %40 : vector<4x64xf32>
    %42 = arith.mulf %38, %24 : vector<4x64xf32>
    %43 = arith.mulf %37, %41 : vector<4x64xf32>
    %44 = arith.addf %42, %43 : vector<4x64xf32>
    %45 = math.tanh %44 : vector<4x64xf32>
    %46 = arith.mulf %39, %45 : vector<4x64xf32>
    %47 = tpu.concatenate %46, %46 in 1 : vector<4x64xf32>, vector<4x64xf32> -> vector<4x128xf32>
    %48 = arith.mulf %47, %16 : vector<4x128xf32>
    %49 = vector.extract_strided_slice %22 {offsets = [2, 0], sizes = [2, 256], strides = [1, 1]} : vector<16x512xf32> to vector<2x256xf32>
    %50 = vector.extract_strided_slice %22 {offsets = [12, 256], sizes = [2, 256], strides = [1, 1]} : vector<16x512xf32> to vector<2x256xf32>
    %51 = tpu.concatenate %49, %50 in 0 : vector<2x256xf32>, vector<2x256xf32> -> vector<4x256xf32>
    %c0_13 = arith.constant 0 : index
    %c0_14 = arith.constant 0 : index
    %52 = vector.load %arg3[%c0_13, %c0_14] : memref<128x256xf32, #tpu.memory_space<vmem>>, vector<128x256xf32>
    %cst_15 = arith.constant dense<0.000000e+00> : vector<4x256xf32>
    %53 = tpu.matmul %48, %52, %cst_15 {dimension_numbers = #tpu.dot_dimension_numbers<[1], [0], [0], [1], [0, 0, 1, 1], [], []>} : vector<4x128xf32>, vector<128x256xf32>, vector<4x256xf32> -> vector<4x256xf32>
    %54 = arith.addf %51, %53 : vector<4x256xf32>
    %55 = vector.extract_strided_slice %54 {offsets = [0, 0], sizes = [4, 192], strides = [1, 1]} : vector<4x256xf32> to vector<4x192xf32>
    %56 = arith.negf %55 : vector<4x192xf32>
    %57 = math.exp %56 : vector<4x192xf32>
    %cst_16 = arith.constant 1.000000e+00 : f32
    %58 = vector.broadcast %cst_16 : f32 to vector<4x192xf32>
    %59 = arith.addf %58, %57 : vector<4x192xf32>
    %60 = arith.divf %58, %59 : vector<4x192xf32>
    %61 = vector.extract_strided_slice %60 {offsets = [0, 0], sizes = [4, 64], strides = [1, 1]} : vector<4x192xf32> to vector<4x64xf32>
    %62 = vector.extract_strided_slice %60 {offsets = [0, 64], sizes = [4, 64], strides = [1, 1]} : vector<4x192xf32> to vector<4x64xf32>
    %63 = vector.extract_strided_slice %60 {offsets = [0, 128], sizes = [4, 64], strides = [1, 1]} : vector<4x192xf32> to vector<4x64xf32>
    %64 = vector.extract_strided_slice %54 {offsets = [0, 192], sizes = [4, 64], strides = [1, 1]} : vector<4x256xf32> to vector<4x64xf32>
    %65 = math.tanh %64 : vector<4x64xf32>
    %66 = arith.mulf %62, %44 : vector<4x64xf32>
    %67 = arith.mulf %61, %65 : vector<4x64xf32>
    %68 = arith.addf %66, %67 : vector<4x64xf32>
    %69 = math.tanh %68 : vector<4x64xf32>
    %70 = arith.mulf %63, %69 : vector<4x64xf32>
    %71 = tpu.concatenate %70, %70 in 1 : vector<4x64xf32>, vector<4x64xf32> -> vector<4x128xf32>
    %72 = arith.mulf %71, %16 : vector<4x128xf32>
    %73 = vector.extract_strided_slice %22 {offsets = [4, 0], sizes = [2, 256], strides = [1, 1]} : vector<16x512xf32> to vector<2x256xf32>
    %74 = vector.extract_strided_slice %22 {offsets = [10, 256], sizes = [2, 256], strides = [1, 1]} : vector<16x512xf32> to vector<2x256xf32>
    %75 = tpu.concatenate %73, %74 in 0 : vector<2x256xf32>, vector<2x256xf32> -> vector<4x256xf32>
    %c0_17 = arith.constant 0 : index
    %c0_18 = arith.constant 0 : index
    %76 = vector.load %arg3[%c0_17, %c0_18] : memref<128x256xf32, #tpu.memory_space<vmem>>, vector<128x256xf32>
    %cst_19 = arith.constant dense<0.000000e+00> : vector<4x256xf32>
    %77 = tpu.matmul %72, %76, %cst_19 {dimension_numbers = #tpu.dot_dimension_numbers<[1], [0], [0], [1], [0, 0, 1, 1], [], []>} : vector<4x128xf32>, vector<128x256xf32>, vector<4x256xf32> -> vector<4x256xf32>
    %78 = arith.addf %75, %77 : vector<4x256xf32>
    %79 = vector.extract_strided_slice %78 {offsets = [0, 0], sizes = [4, 192], strides = [1, 1]} : vector<4x256xf32> to vector<4x192xf32>
    %80 = arith.negf %79 : vector<4x192xf32>
    %81 = math.exp %80 : vector<4x192xf32>
    %cst_20 = arith.constant 1.000000e+00 : f32
    %82 = vector.broadcast %cst_20 : f32 to vector<4x192xf32>
    %83 = arith.addf %82, %81 : vector<4x192xf32>
    %84 = arith.divf %82, %83 : vector<4x192xf32>
    %85 = vector.extract_strided_slice %84 {offsets = [0, 0], sizes = [4, 64], strides = [1, 1]} : vector<4x192xf32> to vector<4x64xf32>
    %86 = vector.extract_strided_slice %84 {offsets = [0, 64], sizes = [4, 64], strides = [1, 1]} : vector<4x192xf32> to vector<4x64xf32>
    %87 = vector.extract_strided_slice %84 {offsets = [0, 128], sizes = [4, 64], strides = [1, 1]} : vector<4x192xf32> to vector<4x64xf32>
    %88 = vector.extract_strided_slice %78 {offsets = [0, 192], sizes = [4, 64], strides = [1, 1]} : vector<4x256xf32> to vector<4x64xf32>
    %89 = math.tanh %88 : vector<4x64xf32>
    %90 = arith.mulf %86, %68 : vector<4x64xf32>
    %91 = arith.mulf %85, %89 : vector<4x64xf32>
    %92 = arith.addf %90, %91 : vector<4x64xf32>
    %93 = math.tanh %92 : vector<4x64xf32>
    %94 = arith.mulf %87, %93 : vector<4x64xf32>
    %95 = tpu.concatenate %94, %94 in 1 : vector<4x64xf32>, vector<4x64xf32> -> vector<4x128xf32>
    %96 = arith.mulf %95, %16 : vector<4x128xf32>
    %97 = vector.extract_strided_slice %22 {offsets = [6, 0], sizes = [2, 256], strides = [1, 1]} : vector<16x512xf32> to vector<2x256xf32>
    %98 = vector.extract_strided_slice %22 {offsets = [8, 256], sizes = [2, 256], strides = [1, 1]} : vector<16x512xf32> to vector<2x256xf32>
    %99 = tpu.concatenate %97, %98 in 0 : vector<2x256xf32>, vector<2x256xf32> -> vector<4x256xf32>
    %c0_21 = arith.constant 0 : index
    %c0_22 = arith.constant 0 : index
    %100 = vector.load %arg3[%c0_21, %c0_22] : memref<128x256xf32, #tpu.memory_space<vmem>>, vector<128x256xf32>
    %cst_23 = arith.constant dense<0.000000e+00> : vector<4x256xf32>
    %101 = tpu.matmul %96, %100, %cst_23 {dimension_numbers = #tpu.dot_dimension_numbers<[1], [0], [0], [1], [0, 0, 1, 1], [], []>} : vector<4x128xf32>, vector<128x256xf32>, vector<4x256xf32> -> vector<4x256xf32>
    %102 = arith.addf %99, %101 : vector<4x256xf32>
    %103 = vector.extract_strided_slice %102 {offsets = [0, 0], sizes = [4, 192], strides = [1, 1]} : vector<4x256xf32> to vector<4x192xf32>
    %104 = arith.negf %103 : vector<4x192xf32>
    %105 = math.exp %104 : vector<4x192xf32>
    %cst_24 = arith.constant 1.000000e+00 : f32
    %106 = vector.broadcast %cst_24 : f32 to vector<4x192xf32>
    %107 = arith.addf %106, %105 : vector<4x192xf32>
    %108 = arith.divf %106, %107 : vector<4x192xf32>
    %109 = vector.extract_strided_slice %108 {offsets = [0, 0], sizes = [4, 64], strides = [1, 1]} : vector<4x192xf32> to vector<4x64xf32>
    %110 = vector.extract_strided_slice %108 {offsets = [0, 64], sizes = [4, 64], strides = [1, 1]} : vector<4x192xf32> to vector<4x64xf32>
    %111 = vector.extract_strided_slice %108 {offsets = [0, 128], sizes = [4, 64], strides = [1, 1]} : vector<4x192xf32> to vector<4x64xf32>
    %112 = vector.extract_strided_slice %102 {offsets = [0, 192], sizes = [4, 64], strides = [1, 1]} : vector<4x256xf32> to vector<4x64xf32>
    %113 = math.tanh %112 : vector<4x64xf32>
    %114 = arith.mulf %110, %92 : vector<4x64xf32>
    %115 = arith.mulf %109, %113 : vector<4x64xf32>
    %116 = arith.addf %114, %115 : vector<4x64xf32>
    %117 = math.tanh %116 : vector<4x64xf32>
    %118 = arith.mulf %111, %117 : vector<4x64xf32>
    %119 = tpu.concatenate %118, %118 in 1 : vector<4x64xf32>, vector<4x64xf32> -> vector<4x128xf32>
    %120 = arith.mulf %119, %16 : vector<4x128xf32>
    %121 = vector.extract_strided_slice %22 {offsets = [8, 0], sizes = [2, 256], strides = [1, 1]} : vector<16x512xf32> to vector<2x256xf32>
    %122 = vector.extract_strided_slice %22 {offsets = [6, 256], sizes = [2, 256], strides = [1, 1]} : vector<16x512xf32> to vector<2x256xf32>
    %123 = tpu.concatenate %121, %122 in 0 : vector<2x256xf32>, vector<2x256xf32> -> vector<4x256xf32>
    %c0_25 = arith.constant 0 : index
    %c0_26 = arith.constant 0 : index
    %124 = vector.load %arg3[%c0_25, %c0_26] : memref<128x256xf32, #tpu.memory_space<vmem>>, vector<128x256xf32>
    %cst_27 = arith.constant dense<0.000000e+00> : vector<4x256xf32>
    %125 = tpu.matmul %120, %124, %cst_27 {dimension_numbers = #tpu.dot_dimension_numbers<[1], [0], [0], [1], [0, 0, 1, 1], [], []>} : vector<4x128xf32>, vector<128x256xf32>, vector<4x256xf32> -> vector<4x256xf32>
    %126 = arith.addf %123, %125 : vector<4x256xf32>
    %127 = vector.extract_strided_slice %126 {offsets = [0, 0], sizes = [4, 192], strides = [1, 1]} : vector<4x256xf32> to vector<4x192xf32>
    %128 = arith.negf %127 : vector<4x192xf32>
    %129 = math.exp %128 : vector<4x192xf32>
    %cst_28 = arith.constant 1.000000e+00 : f32
    %130 = vector.broadcast %cst_28 : f32 to vector<4x192xf32>
    %131 = arith.addf %130, %129 : vector<4x192xf32>
    %132 = arith.divf %130, %131 : vector<4x192xf32>
    %133 = vector.extract_strided_slice %132 {offsets = [0, 0], sizes = [4, 64], strides = [1, 1]} : vector<4x192xf32> to vector<4x64xf32>
    %134 = vector.extract_strided_slice %132 {offsets = [0, 64], sizes = [4, 64], strides = [1, 1]} : vector<4x192xf32> to vector<4x64xf32>
    %135 = vector.extract_strided_slice %132 {offsets = [0, 128], sizes = [4, 64], strides = [1, 1]} : vector<4x192xf32> to vector<4x64xf32>
    %136 = vector.extract_strided_slice %126 {offsets = [0, 192], sizes = [4, 64], strides = [1, 1]} : vector<4x256xf32> to vector<4x64xf32>
    %137 = math.tanh %136 : vector<4x64xf32>
    %138 = arith.mulf %134, %116 : vector<4x64xf32>
    %139 = arith.mulf %133, %137 : vector<4x64xf32>
    %140 = arith.addf %138, %139 : vector<4x64xf32>
    %141 = math.tanh %140 : vector<4x64xf32>
    %142 = arith.mulf %135, %141 : vector<4x64xf32>
    %143 = tpu.concatenate %142, %142 in 1 : vector<4x64xf32>, vector<4x64xf32> -> vector<4x128xf32>
    %144 = arith.mulf %143, %16 : vector<4x128xf32>
    %145 = vector.extract_strided_slice %22 {offsets = [10, 0], sizes = [2, 256], strides = [1, 1]} : vector<16x512xf32> to vector<2x256xf32>
    %146 = vector.extract_strided_slice %22 {offsets = [4, 256], sizes = [2, 256], strides = [1, 1]} : vector<16x512xf32> to vector<2x256xf32>
    %147 = tpu.concatenate %145, %146 in 0 : vector<2x256xf32>, vector<2x256xf32> -> vector<4x256xf32>
    %c0_29 = arith.constant 0 : index
    %c0_30 = arith.constant 0 : index
    %148 = vector.load %arg3[%c0_29, %c0_30] : memref<128x256xf32, #tpu.memory_space<vmem>>, vector<128x256xf32>
    %cst_31 = arith.constant dense<0.000000e+00> : vector<4x256xf32>
    %149 = tpu.matmul %144, %148, %cst_31 {dimension_numbers = #tpu.dot_dimension_numbers<[1], [0], [0], [1], [0, 0, 1, 1], [], []>} : vector<4x128xf32>, vector<128x256xf32>, vector<4x256xf32> -> vector<4x256xf32>
    %150 = arith.addf %147, %149 : vector<4x256xf32>
    %151 = vector.extract_strided_slice %150 {offsets = [0, 0], sizes = [4, 192], strides = [1, 1]} : vector<4x256xf32> to vector<4x192xf32>
    %152 = arith.negf %151 : vector<4x192xf32>
    %153 = math.exp %152 : vector<4x192xf32>
    %cst_32 = arith.constant 1.000000e+00 : f32
    %154 = vector.broadcast %cst_32 : f32 to vector<4x192xf32>
    %155 = arith.addf %154, %153 : vector<4x192xf32>
    %156 = arith.divf %154, %155 : vector<4x192xf32>
    %157 = vector.extract_strided_slice %156 {offsets = [0, 0], sizes = [4, 64], strides = [1, 1]} : vector<4x192xf32> to vector<4x64xf32>
    %158 = vector.extract_strided_slice %156 {offsets = [0, 64], sizes = [4, 64], strides = [1, 1]} : vector<4x192xf32> to vector<4x64xf32>
    %159 = vector.extract_strided_slice %156 {offsets = [0, 128], sizes = [4, 64], strides = [1, 1]} : vector<4x192xf32> to vector<4x64xf32>
    %160 = vector.extract_strided_slice %150 {offsets = [0, 192], sizes = [4, 64], strides = [1, 1]} : vector<4x256xf32> to vector<4x64xf32>
    %161 = math.tanh %160 : vector<4x64xf32>
    %162 = arith.mulf %158, %140 : vector<4x64xf32>
    %163 = arith.mulf %157, %161 : vector<4x64xf32>
    %164 = arith.addf %162, %163 : vector<4x64xf32>
    %165 = math.tanh %164 : vector<4x64xf32>
    %166 = arith.mulf %159, %165 : vector<4x64xf32>
    %167 = tpu.concatenate %166, %166 in 1 : vector<4x64xf32>, vector<4x64xf32> -> vector<4x128xf32>
    %168 = arith.mulf %167, %16 : vector<4x128xf32>
    %169 = vector.extract_strided_slice %22 {offsets = [12, 0], sizes = [2, 256], strides = [1, 1]} : vector<16x512xf32> to vector<2x256xf32>
    %170 = vector.extract_strided_slice %22 {offsets = [2, 256], sizes = [2, 256], strides = [1, 1]} : vector<16x512xf32> to vector<2x256xf32>
    %171 = tpu.concatenate %169, %170 in 0 : vector<2x256xf32>, vector<2x256xf32> -> vector<4x256xf32>
    %c0_33 = arith.constant 0 : index
    %c0_34 = arith.constant 0 : index
    %172 = vector.load %arg3[%c0_33, %c0_34] : memref<128x256xf32, #tpu.memory_space<vmem>>, vector<128x256xf32>
    %cst_35 = arith.constant dense<0.000000e+00> : vector<4x256xf32>
    %173 = tpu.matmul %168, %172, %cst_35 {dimension_numbers = #tpu.dot_dimension_numbers<[1], [0], [0], [1], [0, 0, 1, 1], [], []>} : vector<4x128xf32>, vector<128x256xf32>, vector<4x256xf32> -> vector<4x256xf32>
    %174 = arith.addf %171, %173 : vector<4x256xf32>
    %175 = vector.extract_strided_slice %174 {offsets = [0, 0], sizes = [4, 192], strides = [1, 1]} : vector<4x256xf32> to vector<4x192xf32>
    %176 = arith.negf %175 : vector<4x192xf32>
    %177 = math.exp %176 : vector<4x192xf32>
    %cst_36 = arith.constant 1.000000e+00 : f32
    %178 = vector.broadcast %cst_36 : f32 to vector<4x192xf32>
    %179 = arith.addf %178, %177 : vector<4x192xf32>
    %180 = arith.divf %178, %179 : vector<4x192xf32>
    %181 = vector.extract_strided_slice %180 {offsets = [0, 0], sizes = [4, 64], strides = [1, 1]} : vector<4x192xf32> to vector<4x64xf32>
    %182 = vector.extract_strided_slice %180 {offsets = [0, 64], sizes = [4, 64], strides = [1, 1]} : vector<4x192xf32> to vector<4x64xf32>
    %183 = vector.extract_strided_slice %180 {offsets = [0, 128], sizes = [4, 64], strides = [1, 1]} : vector<4x192xf32> to vector<4x64xf32>
    %184 = vector.extract_strided_slice %174 {offsets = [0, 192], sizes = [4, 64], strides = [1, 1]} : vector<4x256xf32> to vector<4x64xf32>
    %185 = math.tanh %184 : vector<4x64xf32>
    %186 = arith.mulf %182, %164 : vector<4x64xf32>
    %187 = arith.mulf %181, %185 : vector<4x64xf32>
    %188 = arith.addf %186, %187 : vector<4x64xf32>
    %189 = math.tanh %188 : vector<4x64xf32>
    %190 = arith.mulf %183, %189 : vector<4x64xf32>
    %191 = tpu.concatenate %190, %190 in 1 : vector<4x64xf32>, vector<4x64xf32> -> vector<4x128xf32>
    %192 = arith.mulf %191, %16 : vector<4x128xf32>
    %193 = vector.extract_strided_slice %22 {offsets = [14, 0], sizes = [2, 256], strides = [1, 1]} : vector<16x512xf32> to vector<2x256xf32>
    %194 = vector.extract_strided_slice %22 {offsets = [0, 256], sizes = [2, 256], strides = [1, 1]} : vector<16x512xf32> to vector<2x256xf32>
    %195 = tpu.concatenate %193, %194 in 0 : vector<2x256xf32>, vector<2x256xf32> -> vector<4x256xf32>
    %c0_37 = arith.constant 0 : index
    %c0_38 = arith.constant 0 : index
    %196 = vector.load %arg3[%c0_37, %c0_38] : memref<128x256xf32, #tpu.memory_space<vmem>>, vector<128x256xf32>
    %cst_39 = arith.constant dense<0.000000e+00> : vector<4x256xf32>
    %197 = tpu.matmul %192, %196, %cst_39 {dimension_numbers = #tpu.dot_dimension_numbers<[1], [0], [0], [1], [0, 0, 1, 1], [], []>} : vector<4x128xf32>, vector<128x256xf32>, vector<4x256xf32> -> vector<4x256xf32>
    %198 = arith.addf %195, %197 : vector<4x256xf32>
    %199 = vector.extract_strided_slice %198 {offsets = [0, 0], sizes = [4, 192], strides = [1, 1]} : vector<4x256xf32> to vector<4x192xf32>
    %200 = arith.negf %199 : vector<4x192xf32>
    %201 = math.exp %200 : vector<4x192xf32>
    %cst_40 = arith.constant 1.000000e+00 : f32
    %202 = vector.broadcast %cst_40 : f32 to vector<4x192xf32>
    %203 = arith.addf %202, %201 : vector<4x192xf32>
    %204 = arith.divf %202, %203 : vector<4x192xf32>
    %205 = vector.extract_strided_slice %204 {offsets = [0, 0], sizes = [4, 64], strides = [1, 1]} : vector<4x192xf32> to vector<4x64xf32>
    %206 = vector.extract_strided_slice %204 {offsets = [0, 64], sizes = [4, 64], strides = [1, 1]} : vector<4x192xf32> to vector<4x64xf32>
    %207 = vector.extract_strided_slice %204 {offsets = [0, 128], sizes = [4, 64], strides = [1, 1]} : vector<4x192xf32> to vector<4x64xf32>
    %208 = vector.extract_strided_slice %198 {offsets = [0, 192], sizes = [4, 64], strides = [1, 1]} : vector<4x256xf32> to vector<4x64xf32>
    %209 = math.tanh %208 : vector<4x64xf32>
    %210 = arith.mulf %206, %188 : vector<4x64xf32>
    %211 = arith.mulf %205, %209 : vector<4x64xf32>
    %212 = arith.addf %210, %211 : vector<4x64xf32>
    %213 = math.tanh %212 : vector<4x64xf32>
    %214 = arith.mulf %207, %213 : vector<4x64xf32>
    %215 = vector.extract_strided_slice %46 {offsets = [0, 0], sizes = [2, 64], strides = [1, 1]} : vector<4x64xf32> to vector<2x64xf32>
    %216 = vector.extract_strided_slice %70 {offsets = [0, 0], sizes = [2, 64], strides = [1, 1]} : vector<4x64xf32> to vector<2x64xf32>
    %217 = vector.extract_strided_slice %94 {offsets = [0, 0], sizes = [2, 64], strides = [1, 1]} : vector<4x64xf32> to vector<2x64xf32>
    %218 = vector.extract_strided_slice %118 {offsets = [0, 0], sizes = [2, 64], strides = [1, 1]} : vector<4x64xf32> to vector<2x64xf32>
    %219 = vector.extract_strided_slice %142 {offsets = [0, 0], sizes = [2, 64], strides = [1, 1]} : vector<4x64xf32> to vector<2x64xf32>
    %220 = vector.extract_strided_slice %166 {offsets = [0, 0], sizes = [2, 64], strides = [1, 1]} : vector<4x64xf32> to vector<2x64xf32>
    %221 = vector.extract_strided_slice %190 {offsets = [0, 0], sizes = [2, 64], strides = [1, 1]} : vector<4x64xf32> to vector<2x64xf32>
    %222 = vector.extract_strided_slice %214 {offsets = [0, 0], sizes = [2, 64], strides = [1, 1]} : vector<4x64xf32> to vector<2x64xf32>
    %223 = tpu.concatenate %215, %216, %217, %218, %219, %220, %221, %222 in 0 : vector<2x64xf32>, vector<2x64xf32>, vector<2x64xf32>, vector<2x64xf32>, vector<2x64xf32>, vector<2x64xf32>, vector<2x64xf32>, vector<2x64xf32> -> vector<16x64xf32>
    %224 = vector.extract_strided_slice %214 {offsets = [2, 0], sizes = [2, 64], strides = [1, 1]} : vector<4x64xf32> to vector<2x64xf32>
    %225 = vector.extract_strided_slice %190 {offsets = [2, 0], sizes = [2, 64], strides = [1, 1]} : vector<4x64xf32> to vector<2x64xf32>
    %226 = vector.extract_strided_slice %166 {offsets = [2, 0], sizes = [2, 64], strides = [1, 1]} : vector<4x64xf32> to vector<2x64xf32>
    %227 = vector.extract_strided_slice %142 {offsets = [2, 0], sizes = [2, 64], strides = [1, 1]} : vector<4x64xf32> to vector<2x64xf32>
    %228 = vector.extract_strided_slice %118 {offsets = [2, 0], sizes = [2, 64], strides = [1, 1]} : vector<4x64xf32> to vector<2x64xf32>
    %229 = vector.extract_strided_slice %94 {offsets = [2, 0], sizes = [2, 64], strides = [1, 1]} : vector<4x64xf32> to vector<2x64xf32>
    %230 = vector.extract_strided_slice %70 {offsets = [2, 0], sizes = [2, 64], strides = [1, 1]} : vector<4x64xf32> to vector<2x64xf32>
    %231 = vector.extract_strided_slice %46 {offsets = [2, 0], sizes = [2, 64], strides = [1, 1]} : vector<4x64xf32> to vector<2x64xf32>
    %232 = tpu.concatenate %224, %225, %226, %227, %228, %229, %230, %231 in 0 : vector<2x64xf32>, vector<2x64xf32>, vector<2x64xf32>, vector<2x64xf32>, vector<2x64xf32>, vector<2x64xf32>, vector<2x64xf32>, vector<2x64xf32> -> vector<16x64xf32>
    %233 = tpu.concatenate %223, %232 in 1 : vector<16x64xf32>, vector<16x64xf32> -> vector<16x128xf32>
    %c0_41 = arith.constant 0 : index
    %c0_42 = arith.constant 0 : index
    %234 = vector.load %arg4[%c0_41, %c0_42] : memref<128x512xf32, #tpu.memory_space<vmem>>, vector<128x512xf32>
    %cst_43 = arith.constant dense<0.000000e+00> : vector<16x512xf32>
    %235 = tpu.matmul %233, %234, %cst_43 {dimension_numbers = #tpu.dot_dimension_numbers<[1], [0], [0], [1], [0, 0, 1, 1], [], []>} : vector<16x128xf32>, vector<128x512xf32>, vector<16x512xf32> -> vector<16x512xf32>
    %c0_44 = arith.constant 0 : index
    %c0_45 = arith.constant 0 : index
    %236 = vector.load %arg5[%c0_44, %c0_45] : memref<1x512xf32, #tpu.memory_space<vmem>>, vector<1x512xf32>
    %237 = vector.broadcast %236 : vector<1x512xf32> to vector<16x512xf32>
    %238 = arith.addf %235, %237 : vector<16x512xf32>
    %cst_46 = arith.constant 0.000000e+00 : f32
    %239 = vector.broadcast %cst_46 : f32 to vector<4x128xf32>
    %cst_47 = arith.constant 0.000000e+00 : f32
    %240 = vector.broadcast %cst_47 : f32 to vector<4x64xf32>
    %241 = vector.extract_strided_slice %238 {offsets = [0, 0], sizes = [2, 256], strides = [1, 1]} : vector<16x512xf32> to vector<2x256xf32>
    %242 = vector.extract_strided_slice %238 {offsets = [14, 256], sizes = [2, 256], strides = [1, 1]} : vector<16x512xf32> to vector<2x256xf32>
    %243 = tpu.concatenate %241, %242 in 0 : vector<2x256xf32>, vector<2x256xf32> -> vector<4x256xf32>
    %c0_48 = arith.constant 0 : index
    %c0_49 = arith.constant 0 : index
    %244 = vector.load %arg6[%c0_48, %c0_49] : memref<128x256xf32, #tpu.memory_space<vmem>>, vector<128x256xf32>
    %cst_50 = arith.constant dense<0.000000e+00> : vector<4x256xf32>
    %245 = tpu.matmul %239, %244, %cst_50 {dimension_numbers = #tpu.dot_dimension_numbers<[1], [0], [0], [1], [0, 0, 1, 1], [], []>} : vector<4x128xf32>, vector<128x256xf32>, vector<4x256xf32> -> vector<4x256xf32>
    %246 = arith.addf %243, %245 : vector<4x256xf32>
    %247 = vector.extract_strided_slice %246 {offsets = [0, 0], sizes = [4, 192], strides = [1, 1]} : vector<4x256xf32> to vector<4x192xf32>
    %248 = arith.negf %247 : vector<4x192xf32>
    %249 = math.exp %248 : vector<4x192xf32>
    %cst_51 = arith.constant 1.000000e+00 : f32
    %250 = vector.broadcast %cst_51 : f32 to vector<4x192xf32>
    %251 = arith.addf %250, %249 : vector<4x192xf32>
    %252 = arith.divf %250, %251 : vector<4x192xf32>
    %253 = vector.extract_strided_slice %252 {offsets = [0, 0], sizes = [4, 64], strides = [1, 1]} : vector<4x192xf32> to vector<4x64xf32>
    %254 = vector.extract_strided_slice %252 {offsets = [0, 64], sizes = [4, 64], strides = [1, 1]} : vector<4x192xf32> to vector<4x64xf32>
    %255 = vector.extract_strided_slice %252 {offsets = [0, 128], sizes = [4, 64], strides = [1, 1]} : vector<4x192xf32> to vector<4x64xf32>
    %256 = vector.extract_strided_slice %246 {offsets = [0, 192], sizes = [4, 64], strides = [1, 1]} : vector<4x256xf32> to vector<4x64xf32>
    %257 = math.tanh %256 : vector<4x64xf32>
    %258 = arith.mulf %254, %240 : vector<4x64xf32>
    %259 = arith.mulf %253, %257 : vector<4x64xf32>
    %260 = arith.addf %258, %259 : vector<4x64xf32>
    %261 = math.tanh %260 : vector<4x64xf32>
    %262 = arith.mulf %255, %261 : vector<4x64xf32>
    %263 = tpu.concatenate %262, %262 in 1 : vector<4x64xf32>, vector<4x64xf32> -> vector<4x128xf32>
    %264 = arith.mulf %263, %16 : vector<4x128xf32>
    %265 = vector.extract_strided_slice %238 {offsets = [2, 0], sizes = [2, 256], strides = [1, 1]} : vector<16x512xf32> to vector<2x256xf32>
    %266 = vector.extract_strided_slice %238 {offsets = [12, 256], sizes = [2, 256], strides = [1, 1]} : vector<16x512xf32> to vector<2x256xf32>
    %267 = tpu.concatenate %265, %266 in 0 : vector<2x256xf32>, vector<2x256xf32> -> vector<4x256xf32>
    %c0_52 = arith.constant 0 : index
    %c0_53 = arith.constant 0 : index
    %268 = vector.load %arg6[%c0_52, %c0_53] : memref<128x256xf32, #tpu.memory_space<vmem>>, vector<128x256xf32>
    %cst_54 = arith.constant dense<0.000000e+00> : vector<4x256xf32>
    %269 = tpu.matmul %264, %268, %cst_54 {dimension_numbers = #tpu.dot_dimension_numbers<[1], [0], [0], [1], [0, 0, 1, 1], [], []>} : vector<4x128xf32>, vector<128x256xf32>, vector<4x256xf32> -> vector<4x256xf32>
    %270 = arith.addf %267, %269 : vector<4x256xf32>
    %271 = vector.extract_strided_slice %270 {offsets = [0, 0], sizes = [4, 192], strides = [1, 1]} : vector<4x256xf32> to vector<4x192xf32>
    %272 = arith.negf %271 : vector<4x192xf32>
    %273 = math.exp %272 : vector<4x192xf32>
    %cst_55 = arith.constant 1.000000e+00 : f32
    %274 = vector.broadcast %cst_55 : f32 to vector<4x192xf32>
    %275 = arith.addf %274, %273 : vector<4x192xf32>
    %276 = arith.divf %274, %275 : vector<4x192xf32>
    %277 = vector.extract_strided_slice %276 {offsets = [0, 0], sizes = [4, 64], strides = [1, 1]} : vector<4x192xf32> to vector<4x64xf32>
    %278 = vector.extract_strided_slice %276 {offsets = [0, 64], sizes = [4, 64], strides = [1, 1]} : vector<4x192xf32> to vector<4x64xf32>
    %279 = vector.extract_strided_slice %276 {offsets = [0, 128], sizes = [4, 64], strides = [1, 1]} : vector<4x192xf32> to vector<4x64xf32>
    %280 = vector.extract_strided_slice %270 {offsets = [0, 192], sizes = [4, 64], strides = [1, 1]} : vector<4x256xf32> to vector<4x64xf32>
    %281 = math.tanh %280 : vector<4x64xf32>
    %282 = arith.mulf %278, %260 : vector<4x64xf32>
    %283 = arith.mulf %277, %281 : vector<4x64xf32>
    %284 = arith.addf %282, %283 : vector<4x64xf32>
    %285 = math.tanh %284 : vector<4x64xf32>
    %286 = arith.mulf %279, %285 : vector<4x64xf32>
    %287 = tpu.concatenate %286, %286 in 1 : vector<4x64xf32>, vector<4x64xf32> -> vector<4x128xf32>
    %288 = arith.mulf %287, %16 : vector<4x128xf32>
    %289 = vector.extract_strided_slice %238 {offsets = [4, 0], sizes = [2, 256], strides = [1, 1]} : vector<16x512xf32> to vector<2x256xf32>
    %290 = vector.extract_strided_slice %238 {offsets = [10, 256], sizes = [2, 256], strides = [1, 1]} : vector<16x512xf32> to vector<2x256xf32>
    %291 = tpu.concatenate %289, %290 in 0 : vector<2x256xf32>, vector<2x256xf32> -> vector<4x256xf32>
    %c0_56 = arith.constant 0 : index
    %c0_57 = arith.constant 0 : index
    %292 = vector.load %arg6[%c0_56, %c0_57] : memref<128x256xf32, #tpu.memory_space<vmem>>, vector<128x256xf32>
    %cst_58 = arith.constant dense<0.000000e+00> : vector<4x256xf32>
    %293 = tpu.matmul %288, %292, %cst_58 {dimension_numbers = #tpu.dot_dimension_numbers<[1], [0], [0], [1], [0, 0, 1, 1], [], []>} : vector<4x128xf32>, vector<128x256xf32>, vector<4x256xf32> -> vector<4x256xf32>
    %294 = arith.addf %291, %293 : vector<4x256xf32>
    %295 = vector.extract_strided_slice %294 {offsets = [0, 0], sizes = [4, 192], strides = [1, 1]} : vector<4x256xf32> to vector<4x192xf32>
    %296 = arith.negf %295 : vector<4x192xf32>
    %297 = math.exp %296 : vector<4x192xf32>
    %cst_59 = arith.constant 1.000000e+00 : f32
    %298 = vector.broadcast %cst_59 : f32 to vector<4x192xf32>
    %299 = arith.addf %298, %297 : vector<4x192xf32>
    %300 = arith.divf %298, %299 : vector<4x192xf32>
    %301 = vector.extract_strided_slice %300 {offsets = [0, 0], sizes = [4, 64], strides = [1, 1]} : vector<4x192xf32> to vector<4x64xf32>
    %302 = vector.extract_strided_slice %300 {offsets = [0, 64], sizes = [4, 64], strides = [1, 1]} : vector<4x192xf32> to vector<4x64xf32>
    %303 = vector.extract_strided_slice %300 {offsets = [0, 128], sizes = [4, 64], strides = [1, 1]} : vector<4x192xf32> to vector<4x64xf32>
    %304 = vector.extract_strided_slice %294 {offsets = [0, 192], sizes = [4, 64], strides = [1, 1]} : vector<4x256xf32> to vector<4x64xf32>
    %305 = math.tanh %304 : vector<4x64xf32>
    %306 = arith.mulf %302, %284 : vector<4x64xf32>
    %307 = arith.mulf %301, %305 : vector<4x64xf32>
    %308 = arith.addf %306, %307 : vector<4x64xf32>
    %309 = math.tanh %308 : vector<4x64xf32>
    %310 = arith.mulf %303, %309 : vector<4x64xf32>
    %311 = tpu.concatenate %310, %310 in 1 : vector<4x64xf32>, vector<4x64xf32> -> vector<4x128xf32>
    %312 = arith.mulf %311, %16 : vector<4x128xf32>
    %313 = vector.extract_strided_slice %238 {offsets = [6, 0], sizes = [2, 256], strides = [1, 1]} : vector<16x512xf32> to vector<2x256xf32>
    %314 = vector.extract_strided_slice %238 {offsets = [8, 256], sizes = [2, 256], strides = [1, 1]} : vector<16x512xf32> to vector<2x256xf32>
    %315 = tpu.concatenate %313, %314 in 0 : vector<2x256xf32>, vector<2x256xf32> -> vector<4x256xf32>
    %c0_60 = arith.constant 0 : index
    %c0_61 = arith.constant 0 : index
    %316 = vector.load %arg6[%c0_60, %c0_61] : memref<128x256xf32, #tpu.memory_space<vmem>>, vector<128x256xf32>
    %cst_62 = arith.constant dense<0.000000e+00> : vector<4x256xf32>
    %317 = tpu.matmul %312, %316, %cst_62 {dimension_numbers = #tpu.dot_dimension_numbers<[1], [0], [0], [1], [0, 0, 1, 1], [], []>} : vector<4x128xf32>, vector<128x256xf32>, vector<4x256xf32> -> vector<4x256xf32>
    %318 = arith.addf %315, %317 : vector<4x256xf32>
    %319 = vector.extract_strided_slice %318 {offsets = [0, 0], sizes = [4, 192], strides = [1, 1]} : vector<4x256xf32> to vector<4x192xf32>
    %320 = arith.negf %319 : vector<4x192xf32>
    %321 = math.exp %320 : vector<4x192xf32>
    %cst_63 = arith.constant 1.000000e+00 : f32
    %322 = vector.broadcast %cst_63 : f32 to vector<4x192xf32>
    %323 = arith.addf %322, %321 : vector<4x192xf32>
    %324 = arith.divf %322, %323 : vector<4x192xf32>
    %325 = vector.extract_strided_slice %324 {offsets = [0, 0], sizes = [4, 64], strides = [1, 1]} : vector<4x192xf32> to vector<4x64xf32>
    %326 = vector.extract_strided_slice %324 {offsets = [0, 64], sizes = [4, 64], strides = [1, 1]} : vector<4x192xf32> to vector<4x64xf32>
    %327 = vector.extract_strided_slice %324 {offsets = [0, 128], sizes = [4, 64], strides = [1, 1]} : vector<4x192xf32> to vector<4x64xf32>
    %328 = vector.extract_strided_slice %318 {offsets = [0, 192], sizes = [4, 64], strides = [1, 1]} : vector<4x256xf32> to vector<4x64xf32>
    %329 = math.tanh %328 : vector<4x64xf32>
    %330 = arith.mulf %326, %308 : vector<4x64xf32>
    %331 = arith.mulf %325, %329 : vector<4x64xf32>
    %332 = arith.addf %330, %331 : vector<4x64xf32>
    %333 = math.tanh %332 : vector<4x64xf32>
    %334 = arith.mulf %327, %333 : vector<4x64xf32>
    %335 = tpu.concatenate %334, %334 in 1 : vector<4x64xf32>, vector<4x64xf32> -> vector<4x128xf32>
    %336 = arith.mulf %335, %16 : vector<4x128xf32>
    %337 = vector.extract_strided_slice %238 {offsets = [8, 0], sizes = [2, 256], strides = [1, 1]} : vector<16x512xf32> to vector<2x256xf32>
    %338 = vector.extract_strided_slice %238 {offsets = [6, 256], sizes = [2, 256], strides = [1, 1]} : vector<16x512xf32> to vector<2x256xf32>
    %339 = tpu.concatenate %337, %338 in 0 : vector<2x256xf32>, vector<2x256xf32> -> vector<4x256xf32>
    %c0_64 = arith.constant 0 : index
    %c0_65 = arith.constant 0 : index
    %340 = vector.load %arg6[%c0_64, %c0_65] : memref<128x256xf32, #tpu.memory_space<vmem>>, vector<128x256xf32>
    %cst_66 = arith.constant dense<0.000000e+00> : vector<4x256xf32>
    %341 = tpu.matmul %336, %340, %cst_66 {dimension_numbers = #tpu.dot_dimension_numbers<[1], [0], [0], [1], [0, 0, 1, 1], [], []>} : vector<4x128xf32>, vector<128x256xf32>, vector<4x256xf32> -> vector<4x256xf32>
    %342 = arith.addf %339, %341 : vector<4x256xf32>
    %343 = vector.extract_strided_slice %342 {offsets = [0, 0], sizes = [4, 192], strides = [1, 1]} : vector<4x256xf32> to vector<4x192xf32>
    %344 = arith.negf %343 : vector<4x192xf32>
    %345 = math.exp %344 : vector<4x192xf32>
    %cst_67 = arith.constant 1.000000e+00 : f32
    %346 = vector.broadcast %cst_67 : f32 to vector<4x192xf32>
    %347 = arith.addf %346, %345 : vector<4x192xf32>
    %348 = arith.divf %346, %347 : vector<4x192xf32>
    %349 = vector.extract_strided_slice %348 {offsets = [0, 0], sizes = [4, 64], strides = [1, 1]} : vector<4x192xf32> to vector<4x64xf32>
    %350 = vector.extract_strided_slice %348 {offsets = [0, 64], sizes = [4, 64], strides = [1, 1]} : vector<4x192xf32> to vector<4x64xf32>
    %351 = vector.extract_strided_slice %348 {offsets = [0, 128], sizes = [4, 64], strides = [1, 1]} : vector<4x192xf32> to vector<4x64xf32>
    %352 = vector.extract_strided_slice %342 {offsets = [0, 192], sizes = [4, 64], strides = [1, 1]} : vector<4x256xf32> to vector<4x64xf32>
    %353 = math.tanh %352 : vector<4x64xf32>
    %354 = arith.mulf %350, %332 : vector<4x64xf32>
    %355 = arith.mulf %349, %353 : vector<4x64xf32>
    %356 = arith.addf %354, %355 : vector<4x64xf32>
    %357 = math.tanh %356 : vector<4x64xf32>
    %358 = arith.mulf %351, %357 : vector<4x64xf32>
    %359 = tpu.concatenate %358, %358 in 1 : vector<4x64xf32>, vector<4x64xf32> -> vector<4x128xf32>
    %360 = arith.mulf %359, %16 : vector<4x128xf32>
    %361 = vector.extract_strided_slice %238 {offsets = [10, 0], sizes = [2, 256], strides = [1, 1]} : vector<16x512xf32> to vector<2x256xf32>
    %362 = vector.extract_strided_slice %238 {offsets = [4, 256], sizes = [2, 256], strides = [1, 1]} : vector<16x512xf32> to vector<2x256xf32>
    %363 = tpu.concatenate %361, %362 in 0 : vector<2x256xf32>, vector<2x256xf32> -> vector<4x256xf32>
    %c0_68 = arith.constant 0 : index
    %c0_69 = arith.constant 0 : index
    %364 = vector.load %arg6[%c0_68, %c0_69] : memref<128x256xf32, #tpu.memory_space<vmem>>, vector<128x256xf32>
    %cst_70 = arith.constant dense<0.000000e+00> : vector<4x256xf32>
    %365 = tpu.matmul %360, %364, %cst_70 {dimension_numbers = #tpu.dot_dimension_numbers<[1], [0], [0], [1], [0, 0, 1, 1], [], []>} : vector<4x128xf32>, vector<128x256xf32>, vector<4x256xf32> -> vector<4x256xf32>
    %366 = arith.addf %363, %365 : vector<4x256xf32>
    %367 = vector.extract_strided_slice %366 {offsets = [0, 0], sizes = [4, 192], strides = [1, 1]} : vector<4x256xf32> to vector<4x192xf32>
    %368 = arith.negf %367 : vector<4x192xf32>
    %369 = math.exp %368 : vector<4x192xf32>
    %cst_71 = arith.constant 1.000000e+00 : f32
    %370 = vector.broadcast %cst_71 : f32 to vector<4x192xf32>
    %371 = arith.addf %370, %369 : vector<4x192xf32>
    %372 = arith.divf %370, %371 : vector<4x192xf32>
    %373 = vector.extract_strided_slice %372 {offsets = [0, 0], sizes = [4, 64], strides = [1, 1]} : vector<4x192xf32> to vector<4x64xf32>
    %374 = vector.extract_strided_slice %372 {offsets = [0, 64], sizes = [4, 64], strides = [1, 1]} : vector<4x192xf32> to vector<4x64xf32>
    %375 = vector.extract_strided_slice %372 {offsets = [0, 128], sizes = [4, 64], strides = [1, 1]} : vector<4x192xf32> to vector<4x64xf32>
    %376 = vector.extract_strided_slice %366 {offsets = [0, 192], sizes = [4, 64], strides = [1, 1]} : vector<4x256xf32> to vector<4x64xf32>
    %377 = math.tanh %376 : vector<4x64xf32>
    %378 = arith.mulf %374, %356 : vector<4x64xf32>
    %379 = arith.mulf %373, %377 : vector<4x64xf32>
    %380 = arith.addf %378, %379 : vector<4x64xf32>
    %381 = math.tanh %380 : vector<4x64xf32>
    %382 = arith.mulf %375, %381 : vector<4x64xf32>
    %383 = tpu.concatenate %382, %382 in 1 : vector<4x64xf32>, vector<4x64xf32> -> vector<4x128xf32>
    %384 = arith.mulf %383, %16 : vector<4x128xf32>
    %385 = vector.extract_strided_slice %238 {offsets = [12, 0], sizes = [2, 256], strides = [1, 1]} : vector<16x512xf32> to vector<2x256xf32>
    %386 = vector.extract_strided_slice %238 {offsets = [2, 256], sizes = [2, 256], strides = [1, 1]} : vector<16x512xf32> to vector<2x256xf32>
    %387 = tpu.concatenate %385, %386 in 0 : vector<2x256xf32>, vector<2x256xf32> -> vector<4x256xf32>
    %c0_72 = arith.constant 0 : index
    %c0_73 = arith.constant 0 : index
    %388 = vector.load %arg6[%c0_72, %c0_73] : memref<128x256xf32, #tpu.memory_space<vmem>>, vector<128x256xf32>
    %cst_74 = arith.constant dense<0.000000e+00> : vector<4x256xf32>
    %389 = tpu.matmul %384, %388, %cst_74 {dimension_numbers = #tpu.dot_dimension_numbers<[1], [0], [0], [1], [0, 0, 1, 1], [], []>} : vector<4x128xf32>, vector<128x256xf32>, vector<4x256xf32> -> vector<4x256xf32>
    %390 = arith.addf %387, %389 : vector<4x256xf32>
    %391 = vector.extract_strided_slice %390 {offsets = [0, 0], sizes = [4, 192], strides = [1, 1]} : vector<4x256xf32> to vector<4x192xf32>
    %392 = arith.negf %391 : vector<4x192xf32>
    %393 = math.exp %392 : vector<4x192xf32>
    %cst_75 = arith.constant 1.000000e+00 : f32
    %394 = vector.broadcast %cst_75 : f32 to vector<4x192xf32>
    %395 = arith.addf %394, %393 : vector<4x192xf32>
    %396 = arith.divf %394, %395 : vector<4x192xf32>
    %397 = vector.extract_strided_slice %396 {offsets = [0, 0], sizes = [4, 64], strides = [1, 1]} : vector<4x192xf32> to vector<4x64xf32>
    %398 = vector.extract_strided_slice %396 {offsets = [0, 64], sizes = [4, 64], strides = [1, 1]} : vector<4x192xf32> to vector<4x64xf32>
    %399 = vector.extract_strided_slice %396 {offsets = [0, 128], sizes = [4, 64], strides = [1, 1]} : vector<4x192xf32> to vector<4x64xf32>
    %400 = vector.extract_strided_slice %390 {offsets = [0, 192], sizes = [4, 64], strides = [1, 1]} : vector<4x256xf32> to vector<4x64xf32>
    %401 = math.tanh %400 : vector<4x64xf32>
    %402 = arith.mulf %398, %380 : vector<4x64xf32>
    %403 = arith.mulf %397, %401 : vector<4x64xf32>
    %404 = arith.addf %402, %403 : vector<4x64xf32>
    %405 = math.tanh %404 : vector<4x64xf32>
    %406 = arith.mulf %399, %405 : vector<4x64xf32>
    %407 = tpu.concatenate %406, %406 in 1 : vector<4x64xf32>, vector<4x64xf32> -> vector<4x128xf32>
    %408 = arith.mulf %407, %16 : vector<4x128xf32>
    %409 = vector.extract_strided_slice %238 {offsets = [14, 0], sizes = [2, 256], strides = [1, 1]} : vector<16x512xf32> to vector<2x256xf32>
    %410 = vector.extract_strided_slice %238 {offsets = [0, 256], sizes = [2, 256], strides = [1, 1]} : vector<16x512xf32> to vector<2x256xf32>
    %411 = tpu.concatenate %409, %410 in 0 : vector<2x256xf32>, vector<2x256xf32> -> vector<4x256xf32>
    %c0_76 = arith.constant 0 : index
    %c0_77 = arith.constant 0 : index
    %412 = vector.load %arg6[%c0_76, %c0_77] : memref<128x256xf32, #tpu.memory_space<vmem>>, vector<128x256xf32>
    %cst_78 = arith.constant dense<0.000000e+00> : vector<4x256xf32>
    %413 = tpu.matmul %408, %412, %cst_78 {dimension_numbers = #tpu.dot_dimension_numbers<[1], [0], [0], [1], [0, 0, 1, 1], [], []>} : vector<4x128xf32>, vector<128x256xf32>, vector<4x256xf32> -> vector<4x256xf32>
    %414 = arith.addf %411, %413 : vector<4x256xf32>
    %415 = vector.extract_strided_slice %414 {offsets = [0, 0], sizes = [4, 192], strides = [1, 1]} : vector<4x256xf32> to vector<4x192xf32>
    %416 = arith.negf %415 : vector<4x192xf32>
    %417 = math.exp %416 : vector<4x192xf32>
    %cst_79 = arith.constant 1.000000e+00 : f32
    %418 = vector.broadcast %cst_79 : f32 to vector<4x192xf32>
    %419 = arith.addf %418, %417 : vector<4x192xf32>
    %420 = arith.divf %418, %419 : vector<4x192xf32>
    %421 = vector.extract_strided_slice %420 {offsets = [0, 0], sizes = [4, 64], strides = [1, 1]} : vector<4x192xf32> to vector<4x64xf32>
    %422 = vector.extract_strided_slice %420 {offsets = [0, 64], sizes = [4, 64], strides = [1, 1]} : vector<4x192xf32> to vector<4x64xf32>
    %423 = vector.extract_strided_slice %420 {offsets = [0, 128], sizes = [4, 64], strides = [1, 1]} : vector<4x192xf32> to vector<4x64xf32>
    %424 = vector.extract_strided_slice %414 {offsets = [0, 192], sizes = [4, 64], strides = [1, 1]} : vector<4x256xf32> to vector<4x64xf32>
    %425 = math.tanh %424 : vector<4x64xf32>
    %426 = arith.mulf %422, %404 : vector<4x64xf32>
    %427 = arith.mulf %421, %425 : vector<4x64xf32>
    %428 = arith.addf %426, %427 : vector<4x64xf32>
    %429 = math.tanh %428 : vector<4x64xf32>
    %430 = arith.mulf %423, %429 : vector<4x64xf32>
    %431 = vector.extract_strided_slice %430 {offsets = [0, 0], sizes = [2, 64], strides = [1, 1]} : vector<4x64xf32> to vector<2x64xf32>
    %432 = vector.extract_strided_slice %262 {offsets = [2, 0], sizes = [2, 64], strides = [1, 1]} : vector<4x64xf32> to vector<2x64xf32>
    %433 = tpu.concatenate %431, %432 in 1 : vector<2x64xf32>, vector<2x64xf32> -> vector<2x128xf32>
    %cst_80 = arith.constant dense<0.000000e+00> : vector<2xf32>
    %434 = vector.multi_reduction <add>, %433, %cst_80 [1] : vector<2x128xf32> to vector<2xf32>
    %435 = vector.shape_cast %434 : vector<2xf32> to vector<2x1xf32>
    %cst_81 = arith.constant 1.280000e+02 : f32
    %436 = vector.broadcast %cst_81 : f32 to vector<2x1xf32>
    %437 = arith.divf %435, %436 : vector<2x1xf32>
    %438 = vector.broadcast %437 : vector<2x1xf32> to vector<2x128xf32>
    %439 = arith.subf %433, %438 : vector<2x128xf32>
    %440 = arith.mulf %439, %439 : vector<2x128xf32>
    %cst_82 = arith.constant dense<0.000000e+00> : vector<2xf32>
    %441 = vector.multi_reduction <add>, %440, %cst_82 [1] : vector<2x128xf32> to vector<2xf32>
    %442 = vector.shape_cast %441 : vector<2xf32> to vector<2x1xf32>
    %cst_83 = arith.constant 1.280000e+02 : f32
    %443 = vector.broadcast %cst_83 : f32 to vector<2x1xf32>
    %444 = arith.divf %442, %443 : vector<2x1xf32>
    %cst_84 = arith.constant 9.99999974E-6 : f32
    %445 = vector.broadcast %cst_84 : f32 to vector<2x1xf32>
    %446 = arith.addf %444, %445 : vector<2x1xf32>
    %447 = math.rsqrt %446 : vector<2x1xf32>
    %448 = vector.broadcast %447 : vector<2x1xf32> to vector<2x128xf32>
    %449 = arith.mulf %439, %448 : vector<2x128xf32>
    %c0_85 = arith.constant 0 : index
    %c0_86 = arith.constant 0 : index
    %450 = vector.load %arg7[%c0_85, %c0_86] : memref<1x128xf32, #tpu.memory_space<vmem>>, vector<1x128xf32>
    %451 = vector.broadcast %450 : vector<1x128xf32> to vector<2x128xf32>
    %452 = arith.mulf %449, %451 : vector<2x128xf32>
    %c0_87 = arith.constant 0 : index
    %c0_88 = arith.constant 0 : index
    %453 = vector.load %arg8[%c0_87, %c0_88] : memref<1x128xf32, #tpu.memory_space<vmem>>, vector<1x128xf32>
    %454 = vector.broadcast %453 : vector<1x128xf32> to vector<2x128xf32>
    %455 = arith.addf %452, %454 : vector<2x128xf32>
    %c0_89 = arith.constant 0 : index
    %c0_90 = arith.constant 0 : index
    %456 = vector.load %arg9[%c0_89, %c0_90] : memref<128x32xf32, #tpu.memory_space<vmem>>, vector<128x32xf32>
    %cst_91 = arith.constant dense<0.000000e+00> : vector<2x32xf32>
    %457 = tpu.matmul %455, %456, %cst_91 {dimension_numbers = #tpu.dot_dimension_numbers<[1], [0], [0], [1], [0, 0, 1, 1], [], []>} : vector<2x128xf32>, vector<128x32xf32>, vector<2x32xf32> -> vector<2x32xf32>
    %c0_92 = arith.constant 0 : index
    %c0_93 = arith.constant 0 : index
    %458 = vector.load %arg10[%c0_92, %c0_93] : memref<1x32xf32, #tpu.memory_space<vmem>>, vector<1x32xf32>
    %459 = vector.broadcast %458 : vector<1x32xf32> to vector<2x32xf32>
    %460 = arith.addf %457, %459 : vector<2x32xf32>
    %461 = math.tanh %460 : vector<2x32xf32>
    %c0_94 = arith.constant 0 : index
    %c0_95 = arith.constant 0 : index
    %462 = vector.load %arg11[%c0_94, %c0_95] : memref<1x32xf32, #tpu.memory_space<vmem>>, vector<1x32xf32>
    %463 = vector.broadcast %462 : vector<1x32xf32> to vector<2x32xf32>
    %464 = arith.mulf %461, %463 : vector<2x32xf32>
    %cst_96 = arith.constant dense<0.000000e+00> : vector<2xf32>
    %465 = vector.multi_reduction <add>, %464, %cst_96 [1] : vector<2x32xf32> to vector<2xf32>
    %466 = vector.shape_cast %465 : vector<2xf32> to vector<2x1xf32>
    %c0_97 = arith.constant 0 : index
    %c0_98 = arith.constant 0 : index
    %467 = vector.load %arg12[%c0_97, %c0_98] : memref<1x1xf32, #tpu.memory_space<vmem>>, vector<1x1xf32>
    %468 = vector.broadcast %467 : vector<1x1xf32> to vector<2x1xf32>
    %469 = arith.addf %466, %468 : vector<2x1xf32>
    %c0_99 = arith.constant 0 : index
    %c0_100 = arith.constant 0 : index
    %470 = vector.load %arg13[%c0_99, %c0_100] : memref<2x1xf32, #tpu.memory_space<vmem>>, vector<2x1xf32>
    tpu.vector_store %arg13[%c0_99, %c0_100], %469 {strides = array<i32>} : memref<2x1xf32, #tpu.memory_space<vmem>>, vector<2x1xf32>,
    return
  }
}

</mosaic_0001>

<llo_original>
// kernel: tpu_custom_call.1
$region0: #{tpu_custom_call.1}
  #allocation0 [shape = 'u32[]', space=smem, size = 0x4, offset = 0x4, fixed_abs, tag = 'smem constant byte address 0x4 - core index']
  #allocation1 [shape = 'u32[144,128]{1,0:T(1,128)}', space=vmem, size = 0x12000, scoped, tag = 'internal scratch']
  #allocation2 [shape = 'f32[1,1]{1,0:T(1,128)S(1)}', space=vmem, size = 0x200, scoped, tag = 'scoped memory for tpu_custom_call.1']
  %s0 = inlined_call_operand.vmem [shape: f32[16,8], index: 0, kind: input, shape index: {}]
  %s1 = inlined_call_operand.vmem [shape: f32[8,512], index: 1, kind: input, shape index: {}]
  %s2 = inlined_call_operand.vmem [shape: f32[1,512], index: 2, kind: input, shape index: {}]
  %s3 = inlined_call_operand.hbm [shape: f32[128,256], index: 3, kind: input, shape index: {}]
  %s4 = inlined_call_operand.hbm [shape: f32[128,512], index: 4, kind: input, shape index: {}]
  %s5 = inlined_call_operand.vmem [shape: f32[1,512], index: 5, kind: input, shape index: {}]
  %s6 = inlined_call_operand.hbm [shape: f32[128,256], index: 6, kind: input, shape index: {}]
  %s7 = inlined_call_operand.vmem [shape: f32[1,128], index: 7, kind: input, shape index: {}]
  %s8 = inlined_call_operand.vmem [shape: f32[1,128], index: 8, kind: input, shape index: {}]
  %s9 = inlined_call_operand.vmem [shape: f32[128,32], index: 9, kind: input, shape index: {}]
  %s10 = inlined_call_operand.vmem [shape: f32[1,32], index: 10, kind: input, shape index: {}]
  %s11 = inlined_call_operand.vmem [shape: f32[1,32], index: 11, kind: input, shape index: {}]
  %s12 = inlined_call_operand.<no memory space> [shape: f32[1,1], index: 12, kind: input, shape index: {}]
  %s13 = inlined_call_operand.vmem [shape: f32[2,1], index: 13, kind: output, shape index: {}]
  %s14 = sld [smem:[#allocation0]]
  $region74: #{tpu_custom_call.1} parent=0
    _
  %s16 = ssub.s32 1, %s14
  %s17 = scalar_select 0, %s16, %s14
  %v18 = vstv %s12
  %19 = vst [vmem:[#allocation2] sm:$0x1] %v18
  $region1: #{tpu_custom_call.1} parent=0
    #allocation3 [shape = 'u8[131072]{0}', space=vmem, size = 0x20000, scoped, tag = 'input window, operand 3, single buffered']
    #allocation4 [shape = 's32[1]{0}', space=sflag, size = 0x4, scoped, tag = 'scoped memory for tpu_custom_call.1']
    #allocation5 [shape = 'u8[262144]{0}', space=vmem, size = 0x40000, scoped, tag = 'input window, operand 4, single buffered']
    #allocation6 [shape = 's32[1]{0}', space=sflag, size = 0x4, scoped, tag = 'scoped memory for tpu_custom_call.1']
    #allocation7 [shape = 'u8[131072]{0}', space=vmem, size = 0x20000, scoped, tag = 'input window, operand 6, single buffered']
    %20 = vsyncpa [#allocation4], 0
    %21 = vsyncpa [#allocation6], 0
    // Predicated region
    $region2: #{tpu_custom_call.1} parent=1 // pred_check
      _
    $region3: #{tpu_custom_call.1} parent=1 // pred_check_branch
      %23 = sbr.rel (0) target = $region5
    $region4: #{tpu_custom_call.1} parent=1 // pred_region
      _
    $region5: #{tpu_custom_call.1} parent=1 // pred_fallthru
      _
    // Predicated region
    $region6: #{tpu_custom_call.1} parent=1 // pred_check
      _
    $region7: #{tpu_custom_call.1} parent=1 // pred_check_branch
      %25 = sbr.rel (0) target = $region9
    $region8: #{tpu_custom_call.1} parent=1 // pred_region
      _
    $region9: #{tpu_custom_call.1} parent=1 // pred_fallthru
      _
    // Predicated region
    $region10: #{tpu_custom_call.1} parent=1 // pred_check
      _
    $region11: #{tpu_custom_call.1} parent=1 // pred_check_branch
      %27 = sbr.rel (0) target = $region13
    $region12: #{tpu_custom_call.1} parent=1 // pred_region
      _
    $region13: #{tpu_custom_call.1} parent=1 // pred_fallthru
      _
    // Predicated region
    $region14: #{tpu_custom_call.1} parent=1 // pred_check
      _
    $region15: #{tpu_custom_call.1} parent=1 // pred_check_branch
      %29 = sbr.rel (0) target = $region17
    $region16: #{tpu_custom_call.1} parent=1 // pred_region
      %s31 = ssub.s32 4096, 4096
      %32 = vsyncadd [#allocation4], %s31
      %s33 = sshll.u32 [#allocation3], 4
      %s34 = int_to_ptr.vmem [resolvable:$true] %s33
      %39 = dma.hbm_to_vmem [thread:$0]  %s3, 4096, %s34, [#allocation4], 256, 256, 16
    $region17: #{tpu_custom_call.1} parent=1 // pred_fallthru
      _
    // Predicated region
    $region18: #{tpu_custom_call.1} parent=1 // pred_check
      _
    $region19: #{tpu_custom_call.1} parent=1 // pred_check_branch
      %41 = sbr.rel (0) target = $region21
    $region20: #{tpu_custom_call.1} parent=1 // pred_region
      %s43 = ssub.s32 8192, 8192
      %44 = vsyncadd [#allocation6], %s43
      %s45 = sshll.u32 [#allocation5], 4
      %s46 = int_to_ptr.vmem [resolvable:$true] %s45
      %51 = dma.hbm_to_vmem [thread:$0]  %s4, 8192, %s46, [#allocation6], 512, 512, 32
    $region21: #{tpu_custom_call.1} parent=1 // pred_fallthru
      _
    // Predicated region
    $region22: #{tpu_custom_call.1} parent=1 // pred_check
      _
    $region23: #{tpu_custom_call.1} parent=1 // pred_check_branch
      %53 = sbr.rel (0) target = $region25
    $region24: #{tpu_custom_call.1} parent=1 // pred_region
      _
    $region25: #{tpu_custom_call.1} parent=1 // pred_fallthru
      _
    // Predicated region
    $region26: #{tpu_custom_call.1} parent=1 // pred_check
      _
    $region27: #{tpu_custom_call.1} parent=1 // pred_check_branch
      %55 = sbr.rel (0) target = $region29
    $region28: #{tpu_custom_call.1} parent=1 // pred_region
      %s57 = ssub.s32 4096, 4096
      %58 = vsyncadd [#allocation6], %s57
      %s59 = sshll.u32 [#allocation7], 4
      %s60 = int_to_ptr.vmem [resolvable:$true] %s59
      %65 = dma.hbm_to_vmem [thread:$0]  %s6, 4096, %s60, [#allocation6], 256, 256, 16
    $region29: #{tpu_custom_call.1} parent=1 // pred_fallthru
      _
    // Predicated region
    $region30: #{tpu_custom_call.1} parent=1 // pred_check
      _
    $region31: #{tpu_custom_call.1} parent=1 // pred_check_branch
      %67 = sbr.rel (0) target = $region33
    $region32: #{tpu_custom_call.1} parent=1 // pred_region
      _
    $region33: #{tpu_custom_call.1} parent=1 // pred_fallthru
      _
    // Predicated region
    $region34: #{tpu_custom_call.1} parent=1 // pred_check
      _
    $region35: #{tpu_custom_call.1} parent=1 // pred_check_branch
      %69 = sbr.rel (0) target = $region37
    $region36: #{tpu_custom_call.1} parent=1 // pred_region
      _
    $region37: #{tpu_custom_call.1} parent=1 // pred_fallthru
      _
    // Predicated region
    $region38: #{tpu_custom_call.1} parent=1 // pred_check
      _
    $region39: #{tpu_custom_call.1} parent=1 // pred_check_branch
      %71 = sbr.rel (0) target = $region41
    $region40: #{tpu_custom_call.1} parent=1 // pred_region
      _
    $region41: #{tpu_custom_call.1} parent=1 // pred_fallthru
      _
    // Predicated region
    $region42: #{tpu_custom_call.1} parent=1 // pred_check
      _
    $region43: #{tpu_custom_call.1} parent=1 // pred_check_branch
      %73 = sbr.rel (0) target = $region45
    $region44: #{tpu_custom_call.1} parent=1 // pred_region
      _
    $region45: #{tpu_custom_call.1} parent=1 // pred_fallthru
      _
    // Predicated region
    $region46: #{tpu_custom_call.1} parent=1 // pred_check
      _
    $region47: #{tpu_custom_call.1} parent=1 // pred_check_branch
      %75 = sbr.rel (0) target = $region49
    $region48: #{tpu_custom_call.1} parent=1 // pred_region
      _
    $region49: #{tpu_custom_call.1} parent=1 // pred_fallthru
      _
    // Predicated region
    $region50: #{tpu_custom_call.1} parent=1 // pred_check
      _
    $region51: #{tpu_custom_call.1} parent=1 // pred_check_branch
      %77 = sbr.rel (0) target = $region53
    $region52: #{tpu_custom_call.1} parent=1 // pred_region
      _
    $region53: #{tpu_custom_call.1} parent=1 // pred_fallthru
      _
    // Predicated region
    $region54: #{tpu_custom_call.1} parent=1 // pred_check
      _
    $region55: #{tpu_custom_call.1} parent=1 // pred_check_branch
      %79 = sbr.rel (0) target = $region57
    $region56: #{tpu_custom_call.1} parent=1 // pred_region
      %80 = dma.done [#allocation4], 4096
    $region57: #{tpu_custom_call.1} parent=1 // pred_fallthru
      _
    // Predicated region
    $region58: #{tpu_custom_call.1} parent=1 // pred_check
      _
    $region59: #{tpu_custom_call.1} parent=1 // pred_check_branch
      %82 = sbr.rel (0) target = $region61
    $region60: #{tpu_custom_call.1} parent=1 // pred_region
      %83 = dma.done [#allocation6], 8192
    $region61: #{tpu_custom_call.1} parent=1 // pred_fallthru
      _
    // Predicated region
    $region62: #{tpu_custom_call.1} parent=1 // pred_check
      _
    $region63: #{tpu_custom_call.1} parent=1 // pred_check_branch
      %85 = sbr.rel (0) target = $region65
    $region64: #{tpu_custom_call.1} parent=1 // pred_region
      %86 = dma.done [#allocation6], 4096
    $region65: #{tpu_custom_call.1} parent=1 // pred_fallthru
      _
    %v87 = vlaneseq
    %v88 = vshrl.u32 %v87, 7
    %v89 = vlaneseq
    %v90 = vand.u32 %v89, 127
    %vm91 = vcmp.lt.s32.totalorder %v88, 2
    %v92 = vsel %vm91, 1, 0
    %v93 = vcvt.s32.f32 %v92
    %vm94 = vcmp.lt.s32.totalorder %v90, 64
    %v95 = vsel %vm94, 1, 0
    %v96 = vcvt.s32.f32 %v95
    %v97 = vmul.f32 %v93, %v96
    %v98 = vsub.f32 1.0, %v93
    %v99 = vsub.f32 1.0, %v96
    %v100 = vmul.f32 %v98, %v99
    %v101 = vadd.f32 %v97, %v100
    %v102 = vld [vmem:[%s0] sm:$0xff]
    %v103 = vld [vmem:[%s0 + $0x8] sm:$0xff]
    %v104 = vld [vmem:[%s1] sm:$0xff]
    %v105 = vld [vmem:[%s1 + $0x8] sm:$0xff]
    %v106 = vld [vmem:[%s1 + $0x10] sm:$0xff]
    %v107 = vld [vmem:[%s1 + $0x18] sm:$0xff]
    %v108 = vld [vmem:[%s2] sm:$0xf]
    %v110 = vlaneseq
    %v111 = vshrl.u32 %v110, 7
    %v112 = vsub.s32 0, %v111
    %v113 = vrot.slane %v108, %v112
    %v114 = vlaneseq
    %v115 = vshrl.u32 %v114, 7
    %v116 = vsub.s32 1, %v115
    %v117 = vrot.slane %v108, %v116
    %v118 = vlaneseq
    %v119 = vshrl.u32 %v118, 7
    %v120 = vsub.s32 2, %v119
    %v121 = vrot.slane %v108, %v120
    %v122 = vlaneseq
    %v123 = vshrl.u32 %v122, 7
    %v124 = vsub.s32 3, %v123
    %v125 = vrot.slane %v108, %v124
    %vm130 = vcmask 64512
    %v132 = vsel %vm130, %v102, 0
    %v135 = vsel %vm130, %v103, 0
    %137 = vmatprep.subr.mxu0 0.0
    %138 = vmatpush1.msra.mxu0 0.0
    %139 = vmatprep.subr.mxu0 0.0
    %140 = vmatpush1.msra.mxu0 0.0
    %141 = vmatprep.subr.mxu0 0.0
    %142 = vmatpush1.msra.mxu0 0.0
    %143 = vmatprep.subr.mxu0 0.0
    %144 = vmatpush1.msra.mxu0 0.0
    %145 = vmatprep.subr.mxu0 0.0
    %146 = vmatpush1.msra.mxu0 0.0
    %147 = vmatprep.subr.mxu0 0.0
    %148 = vmatpush1.msra.mxu0 0.0
    %149 = vmatprep.subr.mxu0 0.0
    %150 = vmatpush1.msra.mxu0 0.0
    %151 = vmatprep.subr.mxu0 0.0
    %152 = vmatpush1.msra.mxu0 0.0
    %153 = vmatprep.subr.mxu0 0.0
    %154 = vmatpush1.msra.mxu0 0.0
    %155 = vmatprep.subr.mxu0 0.0
    %156 = vmatpush1.msra.mxu0 0.0
    %157 = vmatprep.subr.mxu0 0.0
    %158 = vmatpush1.msra.mxu0 0.0
    %159 = vmatprep.subr.mxu0 0.0
    %160 = vmatpush1.msra.mxu0 0.0
    %161 = vmatprep.subr.mxu0 0.0
    %162 = vmatpush1.msra.mxu0 0.0
    %163 = vmatprep.subr.mxu0 0.0
    %164 = vmatpush1.msra.mxu0 0.0
    %165 = vmatprep.subr.mxu0 0.0
    %166 = vmatpush1.msra.mxu0 0.0
    %167 = vmatprep.subr.mxu0 %v105
    %168 = vmatpush1.msra.mxu0 %v104
    %169 = vmatprep.subr.mxu0 0.0
    %170 = vmatpush2.msra.mxu0 0.0
    %171 = vmatprep.subr.mxu0 0.0
    %172 = vmatpush2.msra.mxu0 0.0
    %173 = vmatprep.subr.mxu0 0.0
    %174 = vmatpush2.msra.mxu0 0.0
    %175 = vmatprep.subr.mxu0 0.0
    %176 = vmatpush2.msra.mxu0 0.0
    %177 = vmatprep.subr.mxu0 0.0
    %178 = vmatpush2.msra.mxu0 0.0
    %179 = vmatprep.subr.mxu0 0.0
    %180 = vmatpush2.msra.mxu0 0.0
    %181 = vmatprep.subr.mxu0 0.0
    %182 = vmatpush2.msra.mxu0 0.0
    %183 = vmatprep.subr.mxu0 0.0
    %184 = vmatpush2.msra.mxu0 0.0
    %185 = vmatprep.subr.mxu0 0.0
    %186 = vmatpush2.msra.mxu0 0.0
    %187 = vmatprep.subr.mxu0 0.0
    %188 = vmatpush2.msra.mxu0 0.0
    %189 = vmatprep.subr.mxu0 0.0
    %190 = vmatpush2.msra.mxu0 0.0
    %191 = vmatprep.subr.mxu0 0.0
    %192 = vmatpush2.msra.mxu0 0.0
    %193 = vmatprep.subr.mxu0 0.0
    %194 = vmatpush2.msra.mxu0 0.0
    %195 = vmatprep.subr.mxu0 0.0
    %196 = vmatpush2.msra.mxu0 0.0
    %197 = vmatprep.subr.mxu0 0.0
    %198 = vmatpush2.msra.mxu0 0.0
    %199 = vmatprep.subr.mxu0 0.0
    %200 = vmatpush2.msra.mxu0 0.0
    %201 = vmatprep.mubr.f32.mxu0 0.0
    %202 = vmatmul.mubr.f32.gmra.mxu0 %v132
    %v203 = vpop.f32.mrf.mxu0
    %v204 = vadd.f32 %v113, %v203
    %v205 = vpop.f32.mrf.mxu0
    %v206 = vadd.f32 %v117, %v205
    %207 = vmatprep.mubr.f32.mxu0 0.0
    %208 = vmatmul.mubr.f32.gmra.mxu0 %v135
    %v209 = vpop.f32.mrf.mxu0
    %v210 = vadd.f32 %v113, %v209
    %v211 = vpop.f32.mrf.mxu0
    %v212 = vadd.f32 %v117, %v211
    %213 = vdwg.mxu0
    %214 = vmatprep.subr.mxu0 0.0
    %215 = vmatpush1.msra.mxu0 0.0
    %216 = vmatprep.subr.mxu0 0.0
    %217 = vmatpush1.msra.mxu0 0.0
    %218 = vmatprep.subr.mxu0 0.0
    %219 = vmatpush1.msra.mxu0 0.0
    %220 = vmatprep.subr.mxu0 0.0
    %221 = vmatpush1.msra.mxu0 0.0
    %222 = vmatprep.subr.mxu0 0.0
    %223 = vmatpush1.msra.mxu0 0.0
    %224 = vmatprep.subr.mxu0 0.0
    %225 = vmatpush1.msra.mxu0 0.0
    %226 = vmatprep.subr.mxu0 0.0
    %227 = vmatpush1.msra.mxu0 0.0
    %228 = vmatprep.subr.mxu0 0.0
    %229 = vmatpush1.msra.mxu0 0.0
    %230 = vmatprep.subr.mxu0 0.0
    %231 = vmatpush1.msra.mxu0 0.0
    %232 = vmatprep.subr.mxu0 0.0
    %233 = vmatpush1.msra.mxu0 0.0
    %234 = vmatprep.subr.mxu0 0.0
    %235 = vmatpush1.msra.mxu0 0.0
    %236 = vmatprep.subr.mxu0 0.0
    %237 = vmatpush1.msra.mxu0 0.0
    %238 = vmatprep.subr.mxu0 0.0
    %239 = vmatpush1.msra.mxu0 0.0
    %240 = vmatprep.subr.mxu0 0.0
    %241 = vmatpush1.msra.mxu0 0.0
    %242 = vmatprep.subr.mxu0 0.0
    %243 = vmatpush1.msra.mxu0 0.0
    %244 = vmatprep.subr.mxu0 %v107
    %245 = vmatpush1.msra.mxu0 %v106
    %246 = vmatprep.subr.mxu0 0.0
    %247 = vmatpush2.msra.mxu0 0.0
    %248 = vmatprep.subr.mxu0 0.0
    %249 = vmatpush2.msra.mxu0 0.0
    %250 = vmatprep.subr.mxu0 0.0
    %251 = vmatpush2.msra.mxu0 0.0
    %252 = vmatprep.subr.mxu0 0.0
    %253 = vmatpush2.msra.mxu0 0.0
    %254 = vmatprep.subr.mxu0 0.0
    %255 = vmatpush2.msra.mxu0 0.0
    %256 = vmatprep.subr.mxu0 0.0
    %257 = vmatpush2.msra.mxu0 0.0
    %258 = vmatprep.subr.mxu0 0.0
    %259 = vmatpush2.msra.mxu0 0.0
    %260 = vmatprep.subr.mxu0 0.0
    %261 = vmatpush2.msra.mxu0 0.0
    %262 = vmatprep.subr.mxu0 0.0
    %263 = vmatpush2.msra.mxu0 0.0
    %264 = vmatprep.subr.mxu0 0.0
    %265 = vmatpush2.msra.mxu0 0.0
    %266 = vmatprep.subr.mxu0 0.0
    %267 = vmatpush2.msra.mxu0 0.0
    %268 = vmatprep.subr.mxu0 0.0
    %269 = vmatpush2.msra.mxu0 0.0
    %270 = vmatprep.subr.mxu0 0.0
    %271 = vmatpush2.msra.mxu0 0.0
    %272 = vmatprep.subr.mxu0 0.0
    %273 = vmatpush2.msra.mxu0 0.0
    %274 = vmatprep.subr.mxu0 0.0
    %275 = vmatpush2.msra.mxu0 0.0
    %276 = vmatprep.subr.mxu0 0.0
    %277 = vmatpush2.msra.mxu0 0.0
    %278 = vmatprep.mubr.f32.mxu0 0.0
    %279 = vmatmul.mubr.f32.gmra.mxu0 %v132
    %v280 = vpop.f32.mrf.mxu0
    %v281 = vadd.f32 %v121, %v280
    %v282 = vpop.f32.mrf.mxu0
    %v283 = vadd.f32 %v125, %v282
    %284 = vmatprep.mubr.f32.mxu0 0.0
    %285 = vmatmul.mubr.f32.gmra.mxu0 %v135
    %v286 = vpop.f32.mrf.mxu0
    %v287 = vadd.f32 %v121, %v286
    %v288 = vpop.f32.mrf.mxu0
    %v289 = vadd.f32 %v125, %v288
    %290 = vdwg.mxu0
    %v293 = vrot.slane %v287, 4
    %v294 = vrot.slane %v289, 4
    %vm297 = vcmask 1041408
    %v298 = vsel %vm297, %v204, %v293
    %v299 = vsel %vm297, %v206, %v294
    %v300 = vld [vmem:[#allocation3] sm:$0xff]
    %v301 = vld [vmem:[#allocation3 + $0x8] sm:$0xff]
    %v302 = vld [vmem:[#allocation3 + $0x10] sm:$0xff]
    %v303 = vld [vmem:[#allocation3 + $0x18] sm:$0xff]
    %v304 = vld [vmem:[#allocation3 + $0x20] sm:$0xff]
    %v305 = vld [vmem:[#allocation3 + $0x28] sm:$0xff]
    %v306 = vld [vmem:[#allocation3 + $0x30] sm:$0xff]
    %v307 = vld [vmem:[#allocation3 + $0x38] sm:$0xff]
    %v308 = vld [vmem:[#allocation3 + $0x40] sm:$0xff]
    %v309 = vld [vmem:[#allocation3 + $0x48] sm:$0xff]
    %v310 = vld [vmem:[#allocation3 + $0x50] sm:$0xff]
    %v311 = vld [vmem:[#allocation3 + $0x58] sm:$0xff]
    %v312 = vld [vmem:[#allocation3 + $0x60] sm:$0xff]
    %v313 = vld [vmem:[#allocation3 + $0x68] sm:$0xff]
    %v314 = vld [vmem:[#allocation3 + $0x70] sm:$0xff]
    %v315 = vld [vmem:[#allocation3 + $0x78] sm:$0xff]
    %v316 = vld [vmem:[#allocation3 + $0x80] sm:$0xff]
    %v317 = vld [vmem:[#allocation3 + $0x88] sm:$0xff]
    %v318 = vld [vmem:[#allocation3 + $0x90] sm:$0xff]
    %v319 = vld [vmem:[#allocation3 + $0x98] sm:$0xff]
    %v320 = vld [vmem:[#allocation3 + $0xa0] sm:$0xff]
    %v321 = vld [vmem:[#allocation3 + $0xa8] sm:$0xff]
    %v322 = vld [vmem:[#allocation3 + $0xb0] sm:$0xff]
    %v323 = vld [vmem:[#allocation3 + $0xb8] sm:$0xff]
    %v324 = vld [vmem:[#allocation3 + $0xc0] sm:$0xff]
    %v325 = vld [vmem:[#allocation3 + $0xc8] sm:$0xff]
    %v326 = vld [vmem:[#allocation3 + $0xd0] sm:$0xff]
    %v327 = vld [vmem:[#allocation3 + $0xd8] sm:$0xff]
    %v328 = vld [vmem:[#allocation3 + $0xe0] sm:$0xff]
    %v329 = vld [vmem:[#allocation3 + $0xe8] sm:$0xff]
    %v330 = vld [vmem:[#allocation3 + $0xf0] sm:$0xff]
    %v331 = vld [vmem:[#allocation3 + $0xf8] sm:$0xff]
    %332 = vmatprep.subr.mxu0 %v331
    %333 = vmatpush1.msra.mxu0 %v330
    %334 = vmatprep.subr.mxu0 %v329
    %335 = vmatpush1.msra.mxu0 %v328
    %336 = vmatprep.subr.mxu0 %v327
    %337 = vmatpush1.msra.mxu0 %v326
    %338 = vmatprep.subr.mxu0 %v325
    %339 = vmatpush1.msra.mxu0 %v324
    %340 = vmatprep.subr.mxu0 %v323
    %341 = vmatpush1.msra.mxu0 %v322
    %342 = vmatprep.subr.mxu0 %v321
    %343 = vmatpush1.msra.mxu0 %v320
    %344 = vmatprep.subr.mxu0 %v319
    %345 = vmatpush1.msra.mxu0 %v318
    %346 = vmatprep.subr.mxu0 %v317
    %347 = vmatpush1.msra.mxu0 %v316
    %348 = vmatprep.subr.mxu0 %v315
    %349 = vmatpush1.msra.mxu0 %v314
    %350 = vmatprep.subr.mxu0 %v313
    %351 = vmatpush1.msra.mxu0 %v312
    %352 = vmatprep.subr.mxu0 %v311
    %353 = vmatpush1.msra.mxu0 %v310
    %354 = vmatprep.subr.mxu0 %v309
    %355 = vmatpush1.msra.mxu0 %v308
    %356 = vmatprep.subr.mxu0 %v307
    %357 = vmatpush1.msra.mxu0 %v306
    %358 = vmatprep.subr.mxu0 %v305
    %359 = vmatpush1.msra.mxu0 %v304
    %360 = vmatprep.subr.mxu0 %v303
    %361 = vmatpush1.msra.mxu0 %v302
    %362 = vmatprep.subr.mxu0 %v301
    %363 = vmatpush1.msra.mxu0 %v300
    %364 = vmatprep.subr.mxu0 0.0
    %365 = vmatpush2.msra.mxu0 0.0
    %366 = vmatprep.subr.mxu0 0.0
    %367 = vmatpush2.msra.mxu0 0.0
    %368 = vmatprep.subr.mxu0 0.0
    %369 = vmatpush2.msra.mxu0 0.0
    %370 = vmatprep.subr.mxu0 0.0
    %371 = vmatpush2.msra.mxu0 0.0
    %372 = vmatprep.subr.mxu0 0.0
    %373 = vmatpush2.msra.mxu0 0.0
    %374 = vmatprep.subr.mxu0 0.0
    %375 = vmatpush2.msra.mxu0 0.0
    %376 = vmatprep.subr.mxu0 0.0
    %377 = vmatpush2.msra.mxu0 0.0
    %378 = vmatprep.subr.mxu0 0.0
    %379 = vmatpush2.msra.mxu0 0.0
    %380 = vmatprep.subr.mxu0 0.0
    %381 = vmatpush2.msra.mxu0 0.0
    %382 = vmatprep.subr.mxu0 0.0
    %383 = vmatpush2.msra.mxu0 0.0
    %384 = vmatprep.subr.mxu0 0.0
    %385 = vmatpush2.msra.mxu0 0.0
    %386 = vmatprep.subr.mxu0 0.0
    %387 = vmatpush2.msra.mxu0 0.0
    %388 = vmatprep.subr.mxu0 0.0
    %389 = vmatpush2.msra.mxu0 0.0
    %390 = vmatprep.subr.mxu0 0.0
    %391 = vmatpush2.msra.mxu0 0.0
    %392 = vmatprep.subr.mxu0 0.0
    %393 = vmatpush2.msra.mxu0 0.0
    %394 = vmatprep.subr.mxu0 0.0
    %395 = vmatpush2.msra.mxu0 0.0
    %396 = vmatprep.mubr.f32.mxu0 0.0
    %397 = vmatmul.mubr.f32.gmra.mxu0 0.0
    %v398 = vpop.f32.mrf.mxu0
    %v399 = vadd.f32 0.0, %v398
    %v400 = vpop.f32.mrf.mxu0
    %v401 = vadd.f32 0.0, %v400
    %402 = vdwg.mxu0
    %v403 = vadd.f32 %v298, %v399
    %v404 = vadd.f32 %v299, %v401
    %v405 = vxor.u32 %v403, 2147483648
    %v406 = vxor.u32 %v404, 2147483648
    %v407 = vmul.f32 %v405, 1.442695
    %v408 = vpow.pop %v407
    %v409 = vmul.f32 %v406, 1.442695
    %v410 = vpow.pop %v409
    %v411 = vadd.f32 %v408, 1.0
    %v412 = vadd.f32 %v410, 1.0
    %v413 = vrcp.pop %v411
    %v414 = vmul.f32 1.0, %v413
    %v415 = vrcp.pop %v412
    %v416 = vmul.f32 1.0, %v415
    %v417 = vtanh.pop %v404
    %v418 = vmul.f32 %v414, 0.0
    %420 = vrot.lane.b32.xlu0 %v417, 64
    %v421 = vpop.permute.xlu0 %420
    %v423 = vmul.f32 %v414, %v421
    %425 = vrot.lane.b32.xlu0 %v423, 64
    %v426 = vpop.permute.xlu0 %425
    %v428 = vadd.f32 %v418, %v426
    %v429 = vtanh.pop %v428
    %431 = vrot.lane.b32.xlu0 %v429, 64
    %v432 = vpop.permute.xlu0 %431
    %v434 = vmul.f32 %v416, %v432
    %436 = vrot.lane.b32.xlu0 %v434, 64
    %v437 = vpop.permute.xlu0 %436
    %vm439 = vcmask 523264
    %v440 = vsel %vm439, %v434, %v437
    %v441 = vmul.f32 %v440, %v101
    %v444 = vrot.slane %v204, 2
    %v445 = vrot.slane %v206, 2
    %v448 = vrot.slane %v287, 2
    %v449 = vrot.slane %v289, 2
    %v452 = vsel %vm297, %v444, %v448
    %v453 = vsel %vm297, %v445, %v449
    %454 = vmatprep.subr.mxu0 %v331
    %455 = vmatpush1.msra.mxu0 %v330
    %456 = vmatprep.subr.mxu0 %v329
    %457 = vmatpush1.msra.mxu0 %v328
    %458 = vmatprep.subr.mxu0 %v327
    %459 = vmatpush1.msra.mxu0 %v326
    %460 = vmatprep.subr.mxu0 %v325
    %461 = vmatpush1.msra.mxu0 %v324
    %462 = vmatprep.subr.mxu0 %v323
    %463 = vmatpush1.msra.mxu0 %v322
    %464 = vmatprep.subr.mxu0 %v321
    %465 = vmatpush1.msra.mxu0 %v320
    %466 = vmatprep.subr.mxu0 %v319
    %467 = vmatpush1.msra.mxu0 %v318
    %468 = vmatprep.subr.mxu0 %v317
    %469 = vmatpush1.msra.mxu0 %v316
    %470 = vmatprep.subr.mxu0 %v315
    %471 = vmatpush1.msra.mxu0 %v314
    %472 = vmatprep.subr.mxu0 %v313
    %473 = vmatpush1.msra.mxu0 %v312
    %474 = vmatprep.subr.mxu0 %v311
    %475 = vmatpush1.msra.mxu0 %v310
    %476 = vmatprep.subr.mxu0 %v309
    %477 = vmatpush1.msra.mxu0 %v308
    %478 = vmatprep.subr.mxu0 %v307
    %479 = vmatpush1.msra.mxu0 %v306
    %480 = vmatprep.subr.mxu0 %v305
    %481 = vmatpush1.msra.mxu0 %v304
    %482 = vmatprep.subr.mxu0 %v303
    %483 = vmatpush1.msra.mxu0 %v302
    %484 = vmatprep.subr.mxu0 %v301
    %485 = vmatpush1.msra.mxu0 %v300
    %486 = vmatprep.subr.mxu0 0.0
    %487 = vmatpush2.msra.mxu0 0.0
    %488 = vmatprep.subr.mxu0 0.0
    %489 = vmatpush2.msra.mxu0 0.0
    %490 = vmatprep.subr.mxu0 0.0
    %491 = vmatpush2.msra.mxu0 0.0
    %492 = vmatprep.subr.mxu0 0.0
    %493 = vmatpush2.msra.mxu0 0.0
    %494 = vmatprep.subr.mxu0 0.0
    %495 = vmatpush2.msra.mxu0 0.0
    %496 = vmatprep.subr.mxu0 0.0
    %497 = vmatpush2.msra.mxu0 0.0
    %498 = vmatprep.subr.mxu0 0.0
    %499 = vmatpush2.msra.mxu0 0.0
    %500 = vmatprep.subr.mxu0 0.0
    %501 = vmatpush2.msra.mxu0 0.0
    %502 = vmatprep.subr.mxu0 0.0
    %503 = vmatpush2.msra.mxu0 0.0
    %504 = vmatprep.subr.mxu0 0.0
    %505 = vmatpush2.msra.mxu0 0.0
    %506 = vmatprep.subr.mxu0 0.0
    %507 = vmatpush2.msra.mxu0 0.0
    %508 = vmatprep.subr.mxu0 0.0
    %509 = vmatpush2.msra.mxu0 0.0
    %510 = vmatprep.subr.mxu0 0.0
    %511 = vmatpush2.msra.mxu0 0.0
    %512 = vmatprep.subr.mxu0 0.0
    %513 = vmatpush2.msra.mxu0 0.0
    %514 = vmatprep.subr.mxu0 0.0
    %515 = vmatpush2.msra.mxu0 0.0
    %516 = vmatprep.subr.mxu0 0.0
    %517 = vmatpush2.msra.mxu0 0.0
    %518 = vmatprep.mubr.f32.mxu0 0.0
    %519 = vmatmul.mubr.f32.gmra.mxu0 %v441
    %v520 = vpop.f32.mrf.mxu0
    %v521 = vadd.f32 0.0, %v520
    %v522 = vpop.f32.mrf.mxu0
    %v523 = vadd.f32 0.0, %v522
    %524 = vdwg.mxu0
    %v525 = vadd.f32 %v452, %v521
    %v526 = vadd.f32 %v453, %v523
    %v527 = vxor.u32 %v525, 2147483648
    %v528 = vxor.u32 %v526, 2147483648
    %v529 = vmul.f32 %v527, 1.442695
    %v530 = vpow.pop %v529
    %v531 = vmul.f32 %v528, 1.442695
    %v532 = vpow.pop %v531
    %v533 = vadd.f32 %v530, 1.0
    %v534 = vadd.f32 %v532, 1.0
    %v535 = vrcp.pop %v533
    %v536 = vmul.f32 1.0, %v535
    %v537 = vrcp.pop %v534
    %v538 = vmul.f32 1.0, %v537
    %v539 = vtanh.pop %v526
    %v540 = vmul.f32 %v536, %v428
    %542 = vrot.lane.b32.xlu0 %v539, 64
    %v543 = vpop.permute.xlu0 %542
    %v545 = vmul.f32 %v536, %v543
    %547 = vrot.lane.b32.xlu0 %v545, 64
    %v548 = vpop.permute.xlu0 %547
    %v550 = vadd.f32 %v540, %v548
    %v551 = vtanh.pop %v550
    %553 = vrot.lane.b32.xlu0 %v551, 64
    %v554 = vpop.permute.xlu0 %553
    %v556 = vmul.f32 %v538, %v554
    %558 = vrot.lane.b32.xlu0 %v556, 64
    %v559 = vpop.permute.xlu0 %558
    %v561 = vsel %vm439, %v556, %v559
    %v562 = vmul.f32 %v561, %v101
    %v563 = vrot.slane %v204, 4
    %v564 = vrot.slane %v206, 4
    %v567 = vsel %vm297, %v563, %v287
    %v568 = vsel %vm297, %v564, %v289
    %569 = vmatprep.subr.mxu0 %v331
    %570 = vmatpush1.msra.mxu0 %v330
    %571 = vmatprep.subr.mxu0 %v329
    %572 = vmatpush1.msra.mxu0 %v328
    %573 = vmatprep.subr.mxu0 %v327
    %574 = vmatpush1.msra.mxu0 %v326
    %575 = vmatprep.subr.mxu0 %v325
    %576 = vmatpush1.msra.mxu0 %v324
    %577 = vmatprep.subr.mxu0 %v323
    %578 = vmatpush1.msra.mxu0 %v322
    %579 = vmatprep.subr.mxu0 %v321
    %580 = vmatpush1.msra.mxu0 %v320
    %581 = vmatprep.subr.mxu0 %v319
    %582 = vmatpush1.msra.mxu0 %v318
    %583 = vmatprep.subr.mxu0 %v317
    %584 = vmatpush1.msra.mxu0 %v316
    %585 = vmatprep.subr.mxu0 %v315
    %586 = vmatpush1.msra.mxu0 %v314
    %587 = vmatprep.subr.mxu0 %v313
    %588 = vmatpush1.msra.mxu0 %v312
    %589 = vmatprep.subr.mxu0 %v311
    %590 = vmatpush1.msra.mxu0 %v310
    %591 = vmatprep.subr.mxu0 %v309
    %592 = vmatpush1.msra.mxu0 %v308
    %593 = vmatprep.subr.mxu0 %v307
    %594 = vmatpush1.msra.mxu0 %v306
    %595 = vmatprep.subr.mxu0 %v305
    %596 = vmatpush1.msra.mxu0 %v304
    %597 = vmatprep.subr.mxu0 %v303
    %598 = vmatpush1.msra.mxu0 %v302
    %599 = vmatprep.subr.mxu0 %v301
    %600 = vmatpush1.msra.mxu0 %v300
    %601 = vmatprep.subr.mxu0 0.0
    %602 = vmatpush2.msra.mxu0 0.0
    %603 = vmatprep.subr.mxu0 0.0
    %604 = vmatpush2.msra.mxu0 0.0
    %605 = vmatprep.subr.mxu0 0.0
    %606 = vmatpush2.msra.mxu0 0.0
    %607 = vmatprep.subr.mxu0 0.0
    %608 = vmatpush2.msra.mxu0 0.0
    %609 = vmatprep.subr.mxu0 0.0
    %610 = vmatpush2.msra.mxu0 0.0
    %611 = vmatprep.subr.mxu0 0.0
    %612 = vmatpush2.msra.mxu0 0.0
    %613 = vmatprep.subr.mxu0 0.0
    %614 = vmatpush2.msra.mxu0 0.0
    %615 = vmatprep.subr.mxu0 0.0
    %616 = vmatpush2.msra.mxu0 0.0
    %617 = vmatprep.subr.mxu0 0.0
    %618 = vmatpush2.msra.mxu0 0.0
    %619 = vmatprep.subr.mxu0 0.0
    %620 = vmatpush2.msra.mxu0 0.0
    %621 = vmatprep.subr.mxu0 0.0
    %622 = vmatpush2.msra.mxu0 0.0
    %623 = vmatprep.subr.mxu0 0.0
    %624 = vmatpush2.msra.mxu0 0.0
    %625 = vmatprep.subr.mxu0 0.0
    %626 = vmatpush2.msra.mxu0 0.0
    %627 = vmatprep.subr.mxu0 0.0
    %628 = vmatpush2.msra.mxu0 0.0
    %629 = vmatprep.subr.mxu0 0.0
    %630 = vmatpush2.msra.mxu0 0.0
    %631 = vmatprep.subr.mxu0 0.0
    %632 = vmatpush2.msra.mxu0 0.0
    %633 = vmatprep.mubr.f32.mxu0 0.0
    %634 = vmatmul.mubr.f32.gmra.mxu0 %v562
    %v635 = vpop.f32.mrf.mxu0
    %v636 = vadd.f32 0.0, %v635
    %v637 = vpop.f32.mrf.mxu0
    %v638 = vadd.f32 0.0, %v637
    %639 = vdwg.mxu0
    %v640 = vadd.f32 %v567, %v636
    %v641 = vadd.f32 %v568, %v638
    %v642 = vxor.u32 %v640, 2147483648
    %v643 = vxor.u32 %v641, 2147483648
    %v644 = vmul.f32 %v642, 1.442695
    %v645 = vpow.pop %v644
    %v646 = vmul.f32 %v643, 1.442695
    %v647 = vpow.pop %v646
    %v648 = vadd.f32 %v645, 1.0
    %v649 = vadd.f32 %v647, 1.0
    %v650 = vrcp.pop %v648
    %v651 = vmul.f32 1.0, %v650
    %v652 = vrcp.pop %v649
    %v653 = vmul.f32 1.0, %v652
    %v654 = vtanh.pop %v641
    %v655 = vmul.f32 %v651, %v550
    %657 = vrot.lane.b32.xlu0 %v654, 64
    %v658 = vpop.permute.xlu0 %657
    %v660 = vmul.f32 %v651, %v658
    %662 = vrot.lane.b32.xlu0 %v660, 64
    %v663 = vpop.permute.xlu0 %662
    %v665 = vadd.f32 %v655, %v663
    %v666 = vtanh.pop %v665
    %668 = vrot.lane.b32.xlu0 %v666, 64
    %v669 = vpop.permute.xlu0 %668
    %v671 = vmul.f32 %v653, %v669
    %673 = vrot.lane.b32.xlu0 %v671, 64
    %v674 = vpop.permute.xlu0 %673
    %v676 = vsel %vm439, %v671, %v674
    %v677 = vmul.f32 %v676, %v101
    %v678 = vrot.slane %v204, 6
    %v679 = vrot.slane %v206, 6
    %v682 = vrot.slane %v287, 6
    %v683 = vrot.slane %v289, 6
    %v686 = vsel %vm297, %v678, %v682
    %v687 = vsel %vm297, %v679, %v683
    %688 = vmatprep.subr.mxu0 %v331
    %689 = vmatpush1.msra.mxu0 %v330
    %690 = vmatprep.subr.mxu0 %v329
    %691 = vmatpush1.msra.mxu0 %v328
    %692 = vmatprep.subr.mxu0 %v327
    %693 = vmatpush1.msra.mxu0 %v326
    %694 = vmatprep.subr.mxu0 %v325
    %695 = vmatpush1.msra.mxu0 %v324
    %696 = vmatprep.subr.mxu0 %v323
    %697 = vmatpush1.msra.mxu0 %v322
    %698 = vmatprep.subr.mxu0 %v321
    %699 = vmatpush1.msra.mxu0 %v320
    %700 = vmatprep.subr.mxu0 %v319
    %701 = vmatpush1.msra.mxu0 %v318
    %702 = vmatprep.subr.mxu0 %v317
    %703 = vmatpush1.msra.mxu0 %v316
    %704 = vmatprep.subr.mxu0 %v315
    %705 = vmatpush1.msra.mxu0 %v314
    %706 = vmatprep.subr.mxu0 %v313
    %707 = vmatpush1.msra.mxu0 %v312
    %708 = vmatprep.subr.mxu0 %v311
    %709 = vmatpush1.msra.mxu0 %v310
    %710 = vmatprep.subr.mxu0 %v309
    %711 = vmatpush1.msra.mxu0 %v308
    %712 = vmatprep.subr.mxu0 %v307
    %713 = vmatpush1.msra.mxu0 %v306
    %714 = vmatprep.subr.mxu0 %v305
    %715 = vmatpush1.msra.mxu0 %v304
    %716 = vmatprep.subr.mxu0 %v303
    %717 = vmatpush1.msra.mxu0 %v302
    %718 = vmatprep.subr.mxu0 %v301
    %719 = vmatpush1.msra.mxu0 %v300
    %720 = vmatprep.subr.mxu0 0.0
    %721 = vmatpush2.msra.mxu0 0.0
    %722 = vmatprep.subr.mxu0 0.0
    %723 = vmatpush2.msra.mxu0 0.0
    %724 = vmatprep.subr.mxu0 0.0
    %725 = vmatpush2.msra.mxu0 0.0
    %726 = vmatprep.subr.mxu0 0.0
    %727 = vmatpush2.msra.mxu0 0.0
    %728 = vmatprep.subr.mxu0 0.0
    %729 = vmatpush2.msra.mxu0 0.0
    %730 = vmatprep.subr.mxu0 0.0
    %731 = vmatpush2.msra.mxu0 0.0
    %732 = vmatprep.subr.mxu0 0.0
    %733 = vmatpush2.msra.mxu0 0.0
    %734 = vmatprep.subr.mxu0 0.0
    %735 = vmatpush2.msra.mxu0 0.0
    %736 = vmatprep.subr.mxu0 0.0
    %737 = vmatpush2.msra.mxu0 0.0
    %738 = vmatprep.subr.mxu0 0.0
    %739 = vmatpush2.msra.mxu0 0.0
    %740 = vmatprep.subr.mxu0 0.0
    %741 = vmatpush2.msra.mxu0 0.0
    %742 = vmatprep.subr.mxu0 0.0
    %743 = vmatpush2.msra.mxu0 0.0
    %744 = vmatprep.subr.mxu0 0.0
    %745 = vmatpush2.msra.mxu0 0.0
    %746 = vmatprep.subr.mxu0 0.0
    %747 = vmatpush2.msra.mxu0 0.0
    %748 = vmatprep.subr.mxu0 0.0
    %749 = vmatpush2.msra.mxu0 0.0
    %750 = vmatprep.subr.mxu0 0.0
    %751 = vmatpush2.msra.mxu0 0.0
    %752 = vmatprep.mubr.f32.mxu0 0.0
    %753 = vmatmul.mubr.f32.gmra.mxu0 %v677
    %v754 = vpop.f32.mrf.mxu0
    %v755 = vadd.f32 0.0, %v754
    %v756 = vpop.f32.mrf.mxu0
    %v757 = vadd.f32 0.0, %v756
    %758 = vdwg.mxu0
    %v759 = vadd.f32 %v686, %v755
    %v760 = vadd.f32 %v687, %v757
    %v761 = vxor.u32 %v759, 2147483648
    %v762 = vxor.u32 %v760, 2147483648
    %v763 = vmul.f32 %v761, 1.442695
    %v764 = vpow.pop %v763
    %v765 = vmul.f32 %v762, 1.442695
    %v766 = vpow.pop %v765
    %v767 = vadd.f32 %v764, 1.0
    %v768 = vadd.f32 %v766, 1.0
    %v769 = vrcp.pop %v767
    %v770 = vmul.f32 1.0, %v769
    %v771 = vrcp.pop %v768
    %v772 = vmul.f32 1.0, %v771
    %v773 = vtanh.pop %v760
    %v774 = vmul.f32 %v770, %v665
    %776 = vrot.lane.b32.xlu0 %v773, 64
    %v777 = vpop.permute.xlu0 %776
    %v779 = vmul.f32 %v770, %v777
    %781 = vrot.lane.b32.xlu0 %v779, 64
    %v782 = vpop.permute.xlu0 %781
    %v784 = vadd.f32 %v774, %v782
    %v785 = vtanh.pop %v784
    %787 = vrot.lane.b32.xlu0 %v785, 64
    %v788 = vpop.permute.xlu0 %787
    %v790 = vmul.f32 %v772, %v788
    %792 = vrot.lane.b32.xlu0 %v790, 64
    %v793 = vpop.permute.xlu0 %792
    %v795 = vsel %vm439, %v790, %v793
    %v796 = vmul.f32 %v795, %v101
    %v799 = vrot.slane %v281, 4
    %v800 = vrot.slane %v283, 4
    %v803 = vsel %vm297, %v210, %v799
    %v804 = vsel %vm297, %v212, %v800
    %805 = vmatprep.subr.mxu0 %v331
    %806 = vmatpush1.msra.mxu0 %v330
    %807 = vmatprep.subr.mxu0 %v329
    %808 = vmatpush1.msra.mxu0 %v328
    %809 = vmatprep.subr.mxu0 %v327
    %810 = vmatpush1.msra.mxu0 %v326
    %811 = vmatprep.subr.mxu0 %v325
    %812 = vmatpush1.msra.mxu0 %v324
    %813 = vmatprep.subr.mxu0 %v323
    %814 = vmatpush1.msra.mxu0 %v322
    %815 = vmatprep.subr.mxu0 %v321
    %816 = vmatpush1.msra.mxu0 %v320
    %817 = vmatprep.subr.mxu0 %v319
    %818 = vmatpush1.msra.mxu0 %v318
    %819 = vmatprep.subr.mxu0 %v317
    %820 = vmatpush1.msra.mxu0 %v316
    %821 = vmatprep.subr.mxu0 %v315
    %822 = vmatpush1.msra.mxu0 %v314
    %823 = vmatprep.subr.mxu0 %v313
    %824 = vmatpush1.msra.mxu0 %v312
    %825 = vmatprep.subr.mxu0 %v311
    %826 = vmatpush1.msra.mxu0 %v310
    %827 = vmatprep.subr.mxu0 %v309
    %828 = vmatpush1.msra.mxu0 %v308
    %829 = vmatprep.subr.mxu0 %v307
    %830 = vmatpush1.msra.mxu0 %v306
    %831 = vmatprep.subr.mxu0 %v305
    %832 = vmatpush1.msra.mxu0 %v304
    %833 = vmatprep.subr.mxu0 %v303
    %834 = vmatpush1.msra.mxu0 %v302
    %835 = vmatprep.subr.mxu0 %v301
    %836 = vmatpush1.msra.mxu0 %v300
    %837 = vmatprep.subr.mxu0 0.0
    %838 = vmatpush2.msra.mxu0 0.0
    %839 = vmatprep.subr.mxu0 0.0
    %840 = vmatpush2.msra.mxu0 0.0
    %841 = vmatprep.subr.mxu0 0.0
    %842 = vmatpush2.msra.mxu0 0.0
    %843 = vmatprep.subr.mxu0 0.0
    %844 = vmatpush2.msra.mxu0 0.0
    %845 = vmatprep.subr.mxu0 0.0
    %846 = vmatpush2.msra.mxu0 0.0
    %847 = vmatprep.subr.mxu0 0.0
    %848 = vmatpush2.msra.mxu0 0.0
    %849 = vmatprep.subr.mxu0 0.0
    %850 = vmatpush2.msra.mxu0 0.0
    %851 = vmatprep.subr.mxu0 0.0
    %852 = vmatpush2.msra.mxu0 0.0
    %853 = vmatprep.subr.mxu0 0.0
    %854 = vmatpush2.msra.mxu0 0.0
    %855 = vmatprep.subr.mxu0 0.0
    %856 = vmatpush2.msra.mxu0 0.0
    %857 = vmatprep.subr.mxu0 0.0
    %858 = vmatpush2.msra.mxu0 0.0
    %859 = vmatprep.subr.mxu0 0.0
    %860 = vmatpush2.msra.mxu0 0.0
    %861 = vmatprep.subr.mxu0 0.0
    %862 = vmatpush2.msra.mxu0 0.0
    %863 = vmatprep.subr.mxu0 0.0
    %864 = vmatpush2.msra.mxu0 0.0
    %865 = vmatprep.subr.mxu0 0.0
    %866 = vmatpush2.msra.mxu0 0.0
    %867 = vmatprep.subr.mxu0 0.0
    %868 = vmatpush2.msra.mxu0 0.0
    %869 = vmatprep.mubr.f32.mxu0 0.0
    %870 = vmatmul.mubr.f32.gmra.mxu0 %v796
    %v871 = vpop.f32.mrf.mxu0
    %v872 = vadd.f32 0.0, %v871
    %v873 = vpop.f32.mrf.mxu0
    %v874 = vadd.f32 0.0, %v873
    %875 = vdwg.mxu0
    %v876 = vadd.f32 %v803, %v872
    %v877 = vadd.f32 %v804, %v874
    %v878 = vxor.u32 %v876, 2147483648
    %v879 = vxor.u32 %v877, 2147483648
    %v880 = vmul.f32 %v878, 1.442695
    %v881 = vpow.pop %v880
    %v882 = vmul.f32 %v879, 1.442695
    %v883 = vpow.pop %v882
    %v884 = vadd.f32 %v881, 1.0
    %v885 = vadd.f32 %v883, 1.0
    %v886 = vrcp.pop %v884
    %v887 = vmul.f32 1.0, %v886
    %v888 = vrcp.pop %v885
    %v889 = vmul.f32 1.0, %v888
    %v890 = vtanh.pop %v877
    %v891 = vmul.f32 %v887, %v784
    %893 = vrot.lane.b32.xlu0 %v890, 64
    %v894 = vpop.permute.xlu0 %893
    %v896 = vmul.f32 %v887, %v894
    %898 = vrot.lane.b32.xlu0 %v896, 64
    %v899 = vpop.permute.xlu0 %898
    %v901 = vadd.f32 %v891, %v899
    %v902 = vtanh.pop %v901
    %904 = vrot.lane.b32.xlu0 %v902, 64
    %v905 = vpop.permute.xlu0 %904
    %v907 = vmul.f32 %v889, %v905
    %909 = vrot.lane.b32.xlu0 %v907, 64
    %v910 = vpop.permute.xlu0 %909
    %v912 = vsel %vm439, %v907, %v910
    %v913 = vmul.f32 %v912, %v101
    %v916 = vrot.slane %v210, 2
    %v917 = vrot.slane %v212, 2
    %v920 = vrot.slane %v281, 2
    %v921 = vrot.slane %v283, 2
    %v924 = vsel %vm297, %v916, %v920
    %v925 = vsel %vm297, %v917, %v921
    %926 = vmatprep.subr.mxu0 %v331
    %927 = vmatpush1.msra.mxu0 %v330
    %928 = vmatprep.subr.mxu0 %v329
    %929 = vmatpush1.msra.mxu0 %v328
    %930 = vmatprep.subr.mxu0 %v327
    %931 = vmatpush1.msra.mxu0 %v326
    %932 = vmatprep.subr.mxu0 %v325
    %933 = vmatpush1.msra.mxu0 %v324
    %934 = vmatprep.subr.mxu0 %v323
    %935 = vmatpush1.msra.mxu0 %v322
    %936 = vmatprep.subr.mxu0 %v321
    %937 = vmatpush1.msra.mxu0 %v320
    %938 = vmatprep.subr.mxu0 %v319
    %939 = vmatpush1.msra.mxu0 %v318
    %940 = vmatprep.subr.mxu0 %v317
    %941 = vmatpush1.msra.mxu0 %v316
    %942 = vmatprep.subr.mxu0 %v315
    %943 = vmatpush1.msra.mxu0 %v314
    %944 = vmatprep.subr.mxu0 %v313
    %945 = vmatpush1.msra.mxu0 %v312
    %946 = vmatprep.subr.mxu0 %v311
    %947 = vmatpush1.msra.mxu0 %v310
    %948 = vmatprep.subr.mxu0 %v309
    %949 = vmatpush1.msra.mxu0 %v308
    %950 = vmatprep.subr.mxu0 %v307
    %951 = vmatpush1.msra.mxu0 %v306
    %952 = vmatprep.subr.mxu0 %v305
    %953 = vmatpush1.msra.mxu0 %v304
    %954 = vmatprep.subr.mxu0 %v303
    %955 = vmatpush1.msra.mxu0 %v302
    %956 = vmatprep.subr.mxu0 %v301
    %957 = vmatpush1.msra.mxu0 %v300
    %958 = vmatprep.subr.mxu0 0.0
    %959 = vmatpush2.msra.mxu0 0.0
    %960 = vmatprep.subr.mxu0 0.0
    %961 = vmatpush2.msra.mxu0 0.0
    %962 = vmatprep.subr.mxu0 0.0
    %963 = vmatpush2.msra.mxu0 0.0
    %964 = vmatprep.subr.mxu0 0.0
    %965 = vmatpush2.msra.mxu0 0.0
    %966 = vmatprep.subr.mxu0 0.0
    %967 = vmatpush2.msra.mxu0 0.0
    %968 = vmatprep.subr.mxu0 0.0
    %969 = vmatpush2.msra.mxu0 0.0
    %970 = vmatprep.subr.mxu0 0.0
    %971 = vmatpush2.msra.mxu0 0.0
    %972 = vmatprep.subr.mxu0 0.0
    %973 = vmatpush2.msra.mxu0 0.0
    %974 = vmatprep.subr.mxu0 0.0
    %975 = vmatpush2.msra.mxu0 0.0
    %976 = vmatprep.subr.mxu0 0.0
    %977 = vmatpush2.msra.mxu0 0.0
    %978 = vmatprep.subr.mxu0 0.0
    %979 = vmatpush2.msra.mxu0 0.0
    %980 = vmatprep.subr.mxu0 0.0
    %981 = vmatpush2.msra.mxu0 0.0
    %982 = vmatprep.subr.mxu0 0.0
    %983 = vmatpush2.msra.mxu0 0.0
    %984 = vmatprep.subr.mxu0 0.0
    %985 = vmatpush2.msra.mxu0 0.0
    %986 = vmatprep.subr.mxu0 0.0
    %987 = vmatpush2.msra.mxu0 0.0
    %988 = vmatprep.subr.mxu0 0.0
    %989 = vmatpush2.msra.mxu0 0.0
    %990 = vmatprep.mubr.f32.mxu0 0.0
    %991 = vmatmul.mubr.f32.gmra.mxu0 %v913
    %v992 = vpop.f32.mrf.mxu0
    %v993 = vadd.f32 0.0, %v992
    %v994 = vpop.f32.mrf.mxu0
    %v995 = vadd.f32 0.0, %v994
    %996 = vdwg.mxu0
    %v997 = vadd.f32 %v924, %v993
    %v998 = vadd.f32 %v925, %v995
    %v999 = vxor.u32 %v997, 2147483648
    %v1000 = vxor.u32 %v998, 2147483648
    %v1001 = vmul.f32 %v999, 1.442695
    %v1002 = vpow.pop %v1001
    %v1003 = vmul.f32 %v1000, 1.442695
    %v1004 = vpow.pop %v1003
    %v1005 = vadd.f32 %v1002, 1.0
    %v1006 = vadd.f32 %v1004, 1.0
    %v1007 = vrcp.pop %v1005
    %v1008 = vmul.f32 1.0, %v1007
    %v1009 = vrcp.pop %v1006
    %v1010 = vmul.f32 1.0, %v1009
    %v1011 = vtanh.pop %v998
    %v1012 = vmul.f32 %v1008, %v901
    %1014 = vrot.lane.b32.xlu0 %v1011, 64
    %v1015 = vpop.permute.xlu0 %1014
    %v1017 = vmul.f32 %v1008, %v1015
    %1019 = vrot.lane.b32.xlu0 %v1017, 64
    %v1020 = vpop.permute.xlu0 %1019
    %v1022 = vadd.f32 %v1012, %v1020
    %v1023 = vtanh.pop %v1022
    %1025 = vrot.lane.b32.xlu0 %v1023, 64
    %v1026 = vpop.permute.xlu0 %1025
    %v1028 = vmul.f32 %v1010, %v1026
    %1030 = vrot.lane.b32.xlu0 %v1028, 64
    %v1031 = vpop.permute.xlu0 %1030
    %v1033 = vsel %vm439, %v1028, %v1031
    %v1034 = vmul.f32 %v1033, %v101
    %v1035 = vrot.slane %v210, 4
    %v1036 = vrot.slane %v212, 4
    %v1039 = vsel %vm297, %v1035, %v281
    %v1040 = vsel %vm297, %v1036, %v283
    %1041 = vmatprep.subr.mxu0 %v331
    %1042 = vmatpush1.msra.mxu0 %v330
    %1043 = vmatprep.subr.mxu0 %v329
    %1044 = vmatpush1.msra.mxu0 %v328
    %1045 = vmatprep.subr.mxu0 %v327
    %1046 = vmatpush1.msra.mxu0 %v326
    %1047 = vmatprep.subr.mxu0 %v325
    %1048 = vmatpush1.msra.mxu0 %v324
    %1049 = vmatprep.subr.mxu0 %v323
    %1050 = vmatpush1.msra.mxu0 %v322
    %1051 = vmatprep.subr.mxu0 %v321
    %1052 = vmatpush1.msra.mxu0 %v320
    %1053 = vmatprep.subr.mxu0 %v319
    %1054 = vmatpush1.msra.mxu0 %v318
    %1055 = vmatprep.subr.mxu0 %v317
    %1056 = vmatpush1.msra.mxu0 %v316
    %1057 = vmatprep.subr.mxu0 %v315
    %1058 = vmatpush1.msra.mxu0 %v314
    %1059 = vmatprep.subr.mxu0 %v313
    %1060 = vmatpush1.msra.mxu0 %v312
    %1061 = vmatprep.subr.mxu0 %v311
    %1062 = vmatpush1.msra.mxu0 %v310
    %1063 = vmatprep.subr.mxu0 %v309
    %1064 = vmatpush1.msra.mxu0 %v308
    %1065 = vmatprep.subr.mxu0 %v307
    %1066 = vmatpush1.msra.mxu0 %v306
    %1067 = vmatprep.subr.mxu0 %v305
    %1068 = vmatpush1.msra.mxu0 %v304
    %1069 = vmatprep.subr.mxu0 %v303
    %1070 = vmatpush1.msra.mxu0 %v302
    %1071 = vmatprep.subr.mxu0 %v301
    %1072 = vmatpush1.msra.mxu0 %v300
    %1073 = vmatprep.subr.mxu0 0.0
    %1074 = vmatpush2.msra.mxu0 0.0
    %1075 = vmatprep.subr.mxu0 0.0
    %1076 = vmatpush2.msra.mxu0 0.0
    %1077 = vmatprep.subr.mxu0 0.0
    %1078 = vmatpush2.msra.mxu0 0.0
    %1079 = vmatprep.subr.mxu0 0.0
    %1080 = vmatpush2.msra.mxu0 0.0
    %1081 = vmatprep.subr.mxu0 0.0
    %1082 = vmatpush2.msra.mxu0 0.0
    %1083 = vmatprep.subr.mxu0 0.0
    %1084 = vmatpush2.msra.mxu0 0.0
    %1085 = vmatprep.subr.mxu0 0.0
    %1086 = vmatpush2.msra.mxu0 0.0
    %1087 = vmatprep.subr.mxu0 0.0
    %1088 = vmatpush2.msra.mxu0 0.0
    %1089 = vmatprep.subr.mxu0 0.0
    %1090 = vmatpush2.msra.mxu0 0.0
    %1091 = vmatprep.subr.mxu0 0.0
    %1092 = vmatpush2.msra.mxu0 0.0
    %1093 = vmatprep.subr.mxu0 0.0
    %1094 = vmatpush2.msra.mxu0 0.0
    %1095 = vmatprep.subr.mxu0 0.0
    %1096 = vmatpush2.msra.mxu0 0.0
    %1097 = vmatprep.subr.mxu0 0.0
    %1098 = vmatpush2.msra.mxu0 0.0
    %1099 = vmatprep.subr.mxu0 0.0
    %1100 = vmatpush2.msra.mxu0 0.0
    %1101 = vmatprep.subr.mxu0 0.0
    %1102 = vmatpush2.msra.mxu0 0.0
    %1103 = vmatprep.subr.mxu0 0.0
    %1104 = vmatpush2.msra.mxu0 0.0
    %1105 = vmatprep.mubr.f32.mxu0 0.0
    %1106 = vmatmul.mubr.f32.gmra.mxu0 %v1034
    %v1107 = vpop.f32.mrf.mxu0
    %v1108 = vadd.f32 0.0, %v1107
    %v1109 = vpop.f32.mrf.mxu0
    %v1110 = vadd.f32 0.0, %v1109
    %1111 = vdwg.mxu0
    %v1112 = vadd.f32 %v1039, %v1108
    %v1113 = vadd.f32 %v1040, %v1110
    %v1114 = vxor.u32 %v1112, 2147483648
    %v1115 = vxor.u32 %v1113, 2147483648
    %v1116 = vmul.f32 %v1114, 1.442695
    %v1117 = vpow.pop %v1116
    %v1118 = vmul.f32 %v1115, 1.442695
    %v1119 = vpow.pop %v1118
    %v1120 = vadd.f32 %v1117, 1.0
    %v1121 = vadd.f32 %v1119, 1.0
    %v1122 = vrcp.pop %v1120
    %v1123 = vmul.f32 1.0, %v1122
    %v1124 = vrcp.pop %v1121
    %v1125 = vmul.f32 1.0, %v1124
    %v1126 = vtanh.pop %v1113
    %v1127 = vmul.f32 %v1123, %v1022
    %1129 = vrot.lane.b32.xlu0 %v1126, 64
    %v1130 = vpop.permute.xlu0 %1129
    %v1132 = vmul.f32 %v1123, %v1130
    %1134 = vrot.lane.b32.xlu0 %v1132, 64
    %v1135 = vpop.permute.xlu0 %1134
    %v1137 = vadd.f32 %v1127, %v1135
    %v1138 = vtanh.pop %v1137
    %1140 = vrot.lane.b32.xlu0 %v1138, 64
    %v1141 = vpop.permute.xlu0 %1140
    %v1143 = vmul.f32 %v1125, %v1141
    %1145 = vrot.lane.b32.xlu0 %v1143, 64
    %v1146 = vpop.permute.xlu0 %1145
    %v1148 = vsel %vm439, %v1143, %v1146
    %v1149 = vmul.f32 %v1148, %v101
    %v1150 = vrot.slane %v210, 6
    %v1151 = vrot.slane %v212, 6
    %v1154 = vrot.slane %v281, 6
    %v1155 = vrot.slane %v283, 6
    %v1158 = vsel %vm297, %v1150, %v1154
    %v1159 = vsel %vm297, %v1151, %v1155
    %1160 = vmatprep.subr.mxu0 %v331
    %1161 = vmatpush1.msra.mxu0 %v330
    %1162 = vmatprep.subr.mxu0 %v329
    %1163 = vmatpush1.msra.mxu0 %v328
    %1164 = vmatprep.subr.mxu0 %v327
    %1165 = vmatpush1.msra.mxu0 %v326
    %1166 = vmatprep.subr.mxu0 %v325
    %1167 = vmatpush1.msra.mxu0 %v324
    %1168 = vmatprep.subr.mxu0 %v323
    %1169 = vmatpush1.msra.mxu0 %v322
    %1170 = vmatprep.subr.mxu0 %v321
    %1171 = vmatpush1.msra.mxu0 %v320
    %1172 = vmatprep.subr.mxu0 %v319
    %1173 = vmatpush1.msra.mxu0 %v318
    %1174 = vmatprep.subr.mxu0 %v317
    %1175 = vmatpush1.msra.mxu0 %v316
    %1176 = vmatprep.subr.mxu0 %v315
    %1177 = vmatpush1.msra.mxu0 %v314
    %1178 = vmatprep.subr.mxu0 %v313
    %1179 = vmatpush1.msra.mxu0 %v312
    %1180 = vmatprep.subr.mxu0 %v311
    %1181 = vmatpush1.msra.mxu0 %v310
    %1182 = vmatprep.subr.mxu0 %v309
    %1183 = vmatpush1.msra.mxu0 %v308
    %1184 = vmatprep.subr.mxu0 %v307
    %1185 = vmatpush1.msra.mxu0 %v306
    %1186 = vmatprep.subr.mxu0 %v305
    %1187 = vmatpush1.msra.mxu0 %v304
    %1188 = vmatprep.subr.mxu0 %v303
    %1189 = vmatpush1.msra.mxu0 %v302
    %1190 = vmatprep.subr.mxu0 %v301
    %1191 = vmatpush1.msra.mxu0 %v300
    %1192 = vmatprep.subr.mxu0 0.0
    %1193 = vmatpush2.msra.mxu0 0.0
    %1194 = vmatprep.subr.mxu0 0.0
    %1195 = vmatpush2.msra.mxu0 0.0
    %1196 = vmatprep.subr.mxu0 0.0
    %1197 = vmatpush2.msra.mxu0 0.0
    %1198 = vmatprep.subr.mxu0 0.0
    %1199 = vmatpush2.msra.mxu0 0.0
    %1200 = vmatprep.subr.mxu0 0.0
    %1201 = vmatpush2.msra.mxu0 0.0
    %1202 = vmatprep.subr.mxu0 0.0
    %1203 = vmatpush2.msra.mxu0 0.0
    %1204 = vmatprep.subr.mxu0 0.0
    %1205 = vmatpush2.msra.mxu0 0.0
    %1206 = vmatprep.subr.mxu0 0.0
    %1207 = vmatpush2.msra.mxu0 0.0
    %1208 = vmatprep.subr.mxu0 0.0
    %1209 = vmatpush2.msra.mxu0 0.0
    %1210 = vmatprep.subr.mxu0 0.0
    %1211 = vmatpush2.msra.mxu0 0.0
    %1212 = vmatprep.subr.mxu0 0.0
    %1213 = vmatpush2.msra.mxu0 0.0
    %1214 = vmatprep.subr.mxu0 0.0
    %1215 = vmatpush2.msra.mxu0 0.0
    %1216 = vmatprep.subr.mxu0 0.0
    %1217 = vmatpush2.msra.mxu0 0.0
    %1218 = vmatprep.subr.mxu0 0.0
    %1219 = vmatpush2.msra.mxu0 0.0
    %1220 = vmatprep.subr.mxu0 0.0
    %1221 = vmatpush2.msra.mxu0 0.0
    %1222 = vmatprep.subr.mxu0 0.0
    %1223 = vmatpush2.msra.mxu0 0.0
    %1224 = vmatprep.mubr.f32.mxu0 0.0
    %1225 = vmatmul.mubr.f32.gmra.mxu0 %v1149
    %v1226 = vpop.f32.mrf.mxu0
    %v1227 = vadd.f32 0.0, %v1226
    %v1228 = vpop.f32.mrf.mxu0
    %v1229 = vadd.f32 0.0, %v1228
    %1230 = vdwg.mxu0
    %v1231 = vadd.f32 %v1158, %v1227
    %v1232 = vadd.f32 %v1159, %v1229
    %v1233 = vxor.u32 %v1231, 2147483648
    %v1234 = vxor.u32 %v1232, 2147483648
    %v1235 = vmul.f32 %v1233, 1.442695
    %v1236 = vpow.pop %v1235
    %v1237 = vmul.f32 %v1234, 1.442695
    %v1238 = vpow.pop %v1237
    %v1239 = vadd.f32 %v1236, 1.0
    %v1240 = vadd.f32 %v1238, 1.0
    %v1241 = vrcp.pop %v1239
    %v1242 = vmul.f32 1.0, %v1241
    %v1243 = vrcp.pop %v1240
    %v1244 = vmul.f32 1.0, %v1243
    %v1245 = vtanh.pop %v1232
    %v1246 = vmul.f32 %v1242, %v1137
    %1248 = vrot.lane.b32.xlu0 %v1245, 64
    %v1249 = vpop.permute.xlu0 %1248
    %v1251 = vmul.f32 %v1242, %v1249
    %1253 = vrot.lane.b32.xlu0 %v1251, 64
    %v1254 = vpop.permute.xlu0 %1253
    %v1256 = vadd.f32 %v1246, %v1254
    %v1257 = vtanh.pop %v1256
    %1259 = vrot.lane.b32.xlu0 %v1257, 64
    %v1260 = vpop.permute.xlu0 %1259
    %v1262 = vmul.f32 %v1244, %v1260
    %v1263 = vrot.slane %v556, 6
    %v1265 = vrot.slane %v671, 4
    %v1267 = vrot.slane %v790, 2
    %v1269 = vrot.slane %v1028, 6
    %v1271 = vrot.slane %v1143, 4
    %v1274 = vrot.slane %v1262, 2
    %v1276 = vsel %vm297, %v434, %v1263
    %vm1277 = vcmask 1043456
    %v1278 = vsel %vm1277, %v1276, %v1265
    %vm1279 = vcmask 1045504
    %v1280 = vsel %vm1279, %v1278, %v1267
    %v1281 = vsel %vm297, %v907, %v1269
    %v1282 = vsel %vm1277, %v1281, %v1271
    %v1283 = vsel %vm1279, %v1282, %v1274
    %v1284 = vrot.slane %v907, 4
    %v1286 = vrot.slane %v434, 4
    %v1288 = vsel %vm297, %v1274, %v1143
    %v1289 = vsel %vm1277, %v1288, %v1269
    %v1290 = vsel %vm1279, %v1289, %v1284
    %v1291 = vsel %vm297, %v1267, %v671
    %v1292 = vsel %vm1277, %v1291, %v1263
    %v1293 = vsel %vm1279, %v1292, %v1286
    %1296 = vrot.lane.b32.xlu0 %v1290, 64
    %v1297 = vpop.permute.xlu0 %1296
    %1298 = vrot.lane.b32.xlu0 %v1293, 64
    %v1299 = vpop.permute.xlu0 %1298
    %v1302 = vsel %vm439, %v1280, %v1297
    %v1303 = vsel %vm439, %v1283, %v1299
    %v1304 = vld [vmem:[#allocation5] sm:$0xff]
    %v1305 = vld [vmem:[#allocation5 + $0x8] sm:$0xff]
    %v1306 = vld [vmem:[#allocation5 + $0x10] sm:$0xff]
    %v1307 = vld [vmem:[#allocation5 + $0x18] sm:$0xff]
    %v1308 = vld [vmem:[#allocation5 + $0x20] sm:$0xff]
    %v1309 = vld [vmem:[#allocation5 + $0x28] sm:$0xff]
    %v1310 = vld [vmem:[#allocation5 + $0x30] sm:$0xff]
    %v1311 = vld [vmem:[#allocation5 + $0x38] sm:$0xff]
    %v1312 = vld [vmem:[#allocation5 + $0x40] sm:$0xff]
    %v1313 = vld [vmem:[#allocation5 + $0x48] sm:$0xff]
    %v1314 = vld [vmem:[#allocation5 + $0x50] sm:$0xff]
    %v1315 = vld [vmem:[#allocation5 + $0x58] sm:$0xff]
    %v1316 = vld [vmem:[#allocation5 + $0x60] sm:$0xff]
    %v1317 = vld [vmem:[#allocation5 + $0x68] sm:$0xff]
    %v1318 = vld [vmem:[#allocation5 + $0x70] sm:$0xff]
    %v1319 = vld [vmem:[#allocation5 + $0x78] sm:$0xff]
    %v1320 = vld [vmem:[#allocation5 + $0x80] sm:$0xff]
    %v1321 = vld [vmem:[#allocation5 + $0x88] sm:$0xff]
    %v1322 = vld [vmem:[#allocation5 + $0x90] sm:$0xff]
    %v1323 = vld [vmem:[#allocation5 + $0x98] sm:$0xff]
    %v1324 = vld [vmem:[#allocation5 + $0xa0] sm:$0xff]
    %v1325 = vld [vmem:[#allocation5 + $0xa8] sm:$0xff]
    %v1326 = vld [vmem:[#allocation5 + $0xb0] sm:$0xff]
    %v1327 = vld [vmem:[#allocation5 + $0xb8] sm:$0xff]
    %v1328 = vld [vmem:[#allocation5 + $0xc0] sm:$0xff]
    %v1329 = vld [vmem:[#allocation5 + $0xc8] sm:$0xff]
    %v1330 = vld [vmem:[#allocation5 + $0xd0] sm:$0xff]
    %v1331 = vld [vmem:[#allocation5 + $0xd8] sm:$0xff]
    %v1332 = vld [vmem:[#allocation5 + $0xe0] sm:$0xff]
    %v1333 = vld [vmem:[#allocation5 + $0xe8] sm:$0xff]
    %v1334 = vld [vmem:[#allocation5 + $0xf0] sm:$0xff]
    %v1335 = vld [vmem:[#allocation5 + $0xf8] sm:$0xff]
    %v1336 = vld [vmem:[#allocation5 + $0x100] sm:$0xff]
    %v1337 = vld [vmem:[#allocation5 + $0x108] sm:$0xff]
    %v1338 = vld [vmem:[#allocation5 + $0x110] sm:$0xff]
    %v1339 = vld [vmem:[#allocation5 + $0x118] sm:$0xff]
    %v1340 = vld [vmem:[#allocation5 + $0x120] sm:$0xff]
    %v1341 = vld [vmem:[#allocation5 + $0x128] sm:$0xff]
    %v1342 = vld [vmem:[#allocation5 + $0x130] sm:$0xff]
    %v1343 = vld [vmem:[#allocation5 + $0x138] sm:$0xff]
    %v1344 = vld [vmem:[#allocation5 + $0x140] sm:$0xff]
    %v1345 = vld [vmem:[#allocation5 + $0x148] sm:$0xff]
    %v1346 = vld [vmem:[#allocation5 + $0x150] sm:$0xff]
    %v1347 = vld [vmem:[#allocation5 + $0x158] sm:$0xff]
    %v1348 = vld [vmem:[#allocation5 + $0x160] sm:$0xff]
    %v1349 = vld [vmem:[#allocation5 + $0x168] sm:$0xff]
    %v1350 = vld [vmem:[#allocation5 + $0x170] sm:$0xff]
    %v1351 = vld [vmem:[#allocation5 + $0x178] sm:$0xff]
    %v1352 = vld [vmem:[#allocation5 + $0x180] sm:$0xff]
    %v1353 = vld [vmem:[#allocation5 + $0x188] sm:$0xff]
    %v1354 = vld [vmem:[#allocation5 + $0x190] sm:$0xff]
    %v1355 = vld [vmem:[#allocation5 + $0x198] sm:$0xff]
    %v1356 = vld [vmem:[#allocation5 + $0x1a0] sm:$0xff]
    %v1357 = vld [vmem:[#allocation5 + $0x1a8] sm:$0xff]
    %v1358 = vld [vmem:[#allocation5 + $0x1b0] sm:$0xff]
    %v1359 = vld [vmem:[#allocation5 + $0x1b8] sm:$0xff]
    %v1360 = vld [vmem:[#allocation5 + $0x1c0] sm:$0xff]
    %v1361 = vld [vmem:[#allocation5 + $0x1c8] sm:$0xff]
    %v1362 = vld [vmem:[#allocation5 + $0x1d0] sm:$0xff]
    %v1363 = vld [vmem:[#allocation5 + $0x1d8] sm:$0xff]
    %v1364 = vld [vmem:[#allocation5 + $0x1e0] sm:$0xff]
    %v1365 = vld [vmem:[#allocation5 + $0x1e8] sm:$0xff]
    %v1366 = vld [vmem:[#allocation5 + $0x1f0] sm:$0xff]
    %v1367 = vld [vmem:[#allocation5 + $0x1f8] sm:$0xff]
    %v1368 = vld [vmem:[%s5] sm:$0xf]
    %v1370 = vlaneseq
    %v1371 = vshrl.u32 %v1370, 7
    %v1372 = vsub.s32 0, %v1371
    %v1373 = vrot.slane %v1368, %v1372
    %v1374 = vlaneseq
    %v1375 = vshrl.u32 %v1374, 7
    %v1376 = vsub.s32 1, %v1375
    %v1377 = vrot.slane %v1368, %v1376
    %v1378 = vlaneseq
    %v1379 = vshrl.u32 %v1378, 7
    %v1380 = vsub.s32 2, %v1379
    %v1381 = vrot.slane %v1368, %v1380
    %v1382 = vlaneseq
    %v1383 = vshrl.u32 %v1382, 7
    %v1384 = vsub.s32 3, %v1383
    %v1385 = vrot.slane %v1368, %v1384
    %1390 = vmatprep.subr.mxu0 %v1365
    %1391 = vmatpush1.msra.mxu0 %v1364
    %1392 = vmatprep.subr.mxu0 %v1361
    %1393 = vmatpush1.msra.mxu0 %v1360
    %1394 = vmatprep.subr.mxu0 %v1357
    %1395 = vmatpush1.msra.mxu0 %v1356
    %1396 = vmatprep.subr.mxu0 %v1353
    %1397 = vmatpush1.msra.mxu0 %v1352
    %1398 = vmatprep.subr.mxu0 %v1349
    %1399 = vmatpush1.msra.mxu0 %v1348
    %1400 = vmatprep.subr.mxu0 %v1345
    %1401 = vmatpush1.msra.mxu0 %v1344
    %1402 = vmatprep.subr.mxu0 %v1341
    %1403 = vmatpush1.msra.mxu0 %v1340
    %1404 = vmatprep.subr.mxu0 %v1337
    %1405 = vmatpush1.msra.mxu0 %v1336
    %1406 = vmatprep.subr.mxu0 %v1333
    %1407 = vmatpush1.msra.mxu0 %v1332
    %1408 = vmatprep.subr.mxu0 %v1329
    %1409 = vmatpush1.msra.mxu0 %v1328
    %1410 = vmatprep.subr.mxu0 %v1325
    %1411 = vmatpush1.msra.mxu0 %v1324
    %1412 = vmatprep.subr.mxu0 %v1321
    %1413 = vmatpush1.msra.mxu0 %v1320
    %1414 = vmatprep.subr.mxu0 %v1317
    %1415 = vmatpush1.msra.mxu0 %v1316
    %1416 = vmatprep.subr.mxu0 %v1313
    %1417 = vmatpush1.msra.mxu0 %v1312
    %1418 = vmatprep.subr.mxu0 %v1309
    %1419 = vmatpush1.msra.mxu0 %v1308
    %1420 = vmatprep.subr.mxu0 %v1305
    %1421 = vmatpush1.msra.mxu0 %v1304
    %1422 = vmatprep.subr.mxu0 0.0
    %1423 = vmatpush2.msra.mxu0 0.0
    %1424 = vmatprep.subr.mxu0 0.0
    %1425 = vmatpush2.msra.mxu0 0.0
    %1426 = vmatprep.subr.mxu0 0.0
    %1427 = vmatpush2.msra.mxu0 0.0
    %1428 = vmatprep.subr.mxu0 0.0
    %1429 = vmatpush2.msra.mxu0 0.0
    %1430 = vmatprep.subr.mxu0 0.0
    %1431 = vmatpush2.msra.mxu0 0.0
    %1432 = vmatprep.subr.mxu0 0.0
    %1433 = vmatpush2.msra.mxu0 0.0
    %1434 = vmatprep.subr.mxu0 0.0
    %1435 = vmatpush2.msra.mxu0 0.0
    %1436 = vmatprep.subr.mxu0 0.0
    %1437 = vmatpush2.msra.mxu0 0.0
    %1438 = vmatprep.subr.mxu0 0.0
    %1439 = vmatpush2.msra.mxu0 0.0
    %1440 = vmatprep.subr.mxu0 0.0
    %1441 = vmatpush2.msra.mxu0 0.0
    %1442 = vmatprep.subr.mxu0 0.0
    %1443 = vmatpush2.msra.mxu0 0.0
    %1444 = vmatprep.subr.mxu0 0.0
    %1445 = vmatpush2.msra.mxu0 0.0
    %1446 = vmatprep.subr.mxu0 0.0
    %1447 = vmatpush2.msra.mxu0 0.0
    %1448 = vmatprep.subr.mxu0 0.0
    %1449 = vmatpush2.msra.mxu0 0.0
    %1450 = vmatprep.subr.mxu0 0.0
    %1451 = vmatpush2.msra.mxu0 0.0
    %1452 = vmatprep.subr.mxu0 0.0
    %1453 = vmatpush2.msra.mxu0 0.0
    %1454 = vmatprep.mubr.f32.mxu0 0.0
    %1455 = vmatmul.mubr.f32.gmra.mxu0 %v1302
    %v1456 = vpop.f32.mrf.mxu0
    %v1457 = vadd.f32 %v1373, %v1456
    %v1458 = vpop.f32.mrf.mxu0
    %v1459 = vadd.f32 %v1377, %v1458
    %1460 = vmatprep.mubr.f32.mxu0 0.0
    %1461 = vmatmul.mubr.f32.gmra.mxu0 %v1303
    %v1462 = vpop.f32.mrf.mxu0
    %v1463 = vadd.f32 %v1373, %v1462
    %v1464 = vpop.f32.mrf.mxu0
    %v1465 = vadd.f32 %v1377, %v1464
    %1466 = vdwg.mxu0
    %1467 = vmatprep.subr.mxu0 %v1367
    %1468 = vmatpush1.msra.mxu0 %v1366
    %1469 = vmatprep.subr.mxu0 %v1363
    %1470 = vmatpush1.msra.mxu0 %v1362
    %1471 = vmatprep.subr.mxu0 %v1359
    %1472 = vmatpush1.msra.mxu0 %v1358
    %1473 = vmatprep.subr.mxu0 %v1355
    %1474 = vmatpush1.msra.mxu0 %v1354
    %1475 = vmatprep.subr.mxu0 %v1351
    %1476 = vmatpush1.msra.mxu0 %v1350
    %1477 = vmatprep.subr.mxu0 %v1347
    %1478 = vmatpush1.msra.mxu0 %v1346
    %1479 = vmatprep.subr.mxu0 %v1343
    %1480 = vmatpush1.msra.mxu0 %v1342
    %1481 = vmatprep.subr.mxu0 %v1339
    %1482 = vmatpush1.msra.mxu0 %v1338
    %1483 = vmatprep.subr.mxu0 %v1335
    %1484 = vmatpush1.msra.mxu0 %v1334
    %1485 = vmatprep.subr.mxu0 %v1331
    %1486 = vmatpush1.msra.mxu0 %v1330
    %1487 = vmatprep.subr.mxu0 %v1327
    %1488 = vmatpush1.msra.mxu0 %v1326
    %1489 = vmatprep.subr.mxu0 %v1323
    %1490 = vmatpush1.msra.mxu0 %v1322
    %1491 = vmatprep.subr.mxu0 %v1319
    %1492 = vmatpush1.msra.mxu0 %v1318
    %1493 = vmatprep.subr.mxu0 %v1315
    %1494 = vmatpush1.msra.mxu0 %v1314
    %1495 = vmatprep.subr.mxu0 %v1311
    %1496 = vmatpush1.msra.mxu0 %v1310
    %1497 = vmatprep.subr.mxu0 %v1307
    %1498 = vmatpush1.msra.mxu0 %v1306
    %1499 = vmatprep.subr.mxu0 0.0
    %1500 = vmatpush2.msra.mxu0 0.0
    %1501 = vmatprep.subr.mxu0 0.0
    %1502 = vmatpush2.msra.mxu0 0.0
    %1503 = vmatprep.subr.mxu0 0.0
    %1504 = vmatpush2.msra.mxu0 0.0
    %1505 = vmatprep.subr.mxu0 0.0
    %1506 = vmatpush2.msra.mxu0 0.0
    %1507 = vmatprep.subr.mxu0 0.0
    %1508 = vmatpush2.msra.mxu0 0.0
    %1509 = vmatprep.subr.mxu0 0.0
    %1510 = vmatpush2.msra.mxu0 0.0
    %1511 = vmatprep.subr.mxu0 0.0
    %1512 = vmatpush2.msra.mxu0 0.0
    %1513 = vmatprep.subr.mxu0 0.0
    %1514 = vmatpush2.msra.mxu0 0.0
    %1515 = vmatprep.subr.mxu0 0.0
    %1516 = vmatpush2.msra.mxu0 0.0
    %1517 = vmatprep.subr.mxu0 0.0
    %1518 = vmatpush2.msra.mxu0 0.0
    %1519 = vmatprep.subr.mxu0 0.0
    %1520 = vmatpush2.msra.mxu0 0.0
    %1521 = vmatprep.subr.mxu0 0.0
    %1522 = vmatpush2.msra.mxu0 0.0
    %1523 = vmatprep.subr.mxu0 0.0
    %1524 = vmatpush2.msra.mxu0 0.0
    %1525 = vmatprep.subr.mxu0 0.0
    %1526 = vmatpush2.msra.mxu0 0.0
    %1527 = vmatprep.subr.mxu0 0.0
    %1528 = vmatpush2.msra.mxu0 0.0
    %1529 = vmatprep.subr.mxu0 0.0
    %1530 = vmatpush2.msra.mxu0 0.0
    %1531 = vmatprep.mubr.f32.mxu0 0.0
    %1532 = vmatmul.mubr.f32.gmra.mxu0 %v1302
    %v1533 = vpop.f32.mrf.mxu0
    %v1534 = vadd.f32 %v1381, %v1533
    %v1535 = vpop.f32.mrf.mxu0
    %v1536 = vadd.f32 %v1385, %v1535
    %1537 = vmatprep.mubr.f32.mxu0 0.0
    %1538 = vmatmul.mubr.f32.gmra.mxu0 %v1303
    %v1539 = vpop.f32.mrf.mxu0
    %v1540 = vadd.f32 %v1381, %v1539
    %v1541 = vpop.f32.mrf.mxu0
    %v1542 = vadd.f32 %v1385, %v1541
    %1543 = vdwg.mxu0
    %v1546 = vrot.slane %v1540, 4
    %v1547 = vrot.slane %v1542, 4
    %v1550 = vsel %vm297, %v1457, %v1546
    %v1551 = vsel %vm297, %v1459, %v1547
    %v1552 = vld [vmem:[#allocation7] sm:$0xff]
    %v1553 = vld [vmem:[#allocation7 + $0x8] sm:$0xff]
    %v1554 = vld [vmem:[#allocation7 + $0x10] sm:$0xff]
    %v1555 = vld [vmem:[#allocation7 + $0x18] sm:$0xff]
    %v1556 = vld [vmem:[#allocation7 + $0x20] sm:$0xff]
    %v1557 = vld [vmem:[#allocation7 + $0x28] sm:$0xff]
    %v1558 = vld [vmem:[#allocation7 + $0x30] sm:$0xff]
    %v1559 = vld [vmem:[#allocation7 + $0x38] sm:$0xff]
    %v1560 = vld [vmem:[#allocation7 + $0x40] sm:$0xff]
    %v1561 = vld [vmem:[#allocation7 + $0x48] sm:$0xff]
    %v1562 = vld [vmem:[#allocation7 + $0x50] sm:$0xff]
    %v1563 = vld [vmem:[#allocation7 + $0x58] sm:$0xff]
    %v1564 = vld [vmem:[#allocation7 + $0x60] sm:$0xff]
    %v1565 = vld [vmem:[#allocation7 + $0x68] sm:$0xff]
    %v1566 = vld [vmem:[#allocation7 + $0x70] sm:$0xff]
    %v1567 = vld [vmem:[#allocation7 + $0x78] sm:$0xff]
    %v1568 = vld [vmem:[#allocation7 + $0x80] sm:$0xff]
    %v1569 = vld [vmem:[#allocation7 + $0x88] sm:$0xff]
    %v1570 = vld [vmem:[#allocation7 + $0x90] sm:$0xff]
    %v1571 = vld [vmem:[#allocation7 + $0x98] sm:$0xff]
    %v1572 = vld [vmem:[#allocation7 + $0xa0] sm:$0xff]
    %v1573 = vld [vmem:[#allocation7 + $0xa8] sm:$0xff]
    %v1574 = vld [vmem:[#allocation7 + $0xb0] sm:$0xff]
    %v1575 = vld [vmem:[#allocation7 + $0xb8] sm:$0xff]
    %v1576 = vld [vmem:[#allocation7 + $0xc0] sm:$0xff]
    %v1577 = vld [vmem:[#allocation7 + $0xc8] sm:$0xff]
    %v1578 = vld [vmem:[#allocation7 + $0xd0] sm:$0xff]
    %v1579 = vld [vmem:[#allocation7 + $0xd8] sm:$0xff]
    %v1580 = vld [vmem:[#allocation7 + $0xe0] sm:$0xff]
    %v1581 = vld [vmem:[#allocation7 + $0xe8] sm:$0xff]
    %v1582 = vld [vmem:[#allocation7 + $0xf0] sm:$0xff]
    %v1583 = vld [vmem:[#allocation7 + $0xf8] sm:$0xff]
    %1584 = vmatprep.subr.mxu0 %v1583
    %1585 = vmatpush1.msra.mxu0 %v1582
    %1586 = vmatprep.subr.mxu0 %v1581
    %1587 = vmatpush1.msra.mxu0 %v1580
    %1588 = vmatprep.subr.mxu0 %v1579
    %1589 = vmatpush1.msra.mxu0 %v1578
    %1590 = vmatprep.subr.mxu0 %v1577
    %1591 = vmatpush1.msra.mxu0 %v1576
    %1592 = vmatprep.subr.mxu0 %v1575
    %1593 = vmatpush1.msra.mxu0 %v1574
    %1594 = vmatprep.subr.mxu0 %v1573
    %1595 = vmatpush1.msra.mxu0 %v1572
    %1596 = vmatprep.subr.mxu0 %v1571
    %1597 = vmatpush1.msra.mxu0 %v1570
    %1598 = vmatprep.subr.mxu0 %v1569
    %1599 = vmatpush1.msra.mxu0 %v1568
    %1600 = vmatprep.subr.mxu0 %v1567
    %1601 = vmatpush1.msra.mxu0 %v1566
    %1602 = vmatprep.subr.mxu0 %v1565
    %1603 = vmatpush1.msra.mxu0 %v1564
    %1604 = vmatprep.subr.mxu0 %v1563
    %1605 = vmatpush1.msra.mxu0 %v1562
    %1606 = vmatprep.subr.mxu0 %v1561
    %1607 = vmatpush1.msra.mxu0 %v1560
    %1608 = vmatprep.subr.mxu0 %v1559
    %1609 = vmatpush1.msra.mxu0 %v1558
    %1610 = vmatprep.subr.mxu0 %v1557
    %1611 = vmatpush1.msra.mxu0 %v1556
    %1612 = vmatprep.subr.mxu0 %v1555
    %1613 = vmatpush1.msra.mxu0 %v1554
    %1614 = vmatprep.subr.mxu0 %v1553
    %1615 = vmatpush1.msra.mxu0 %v1552
    %1616 = vmatprep.subr.mxu0 0.0
    %1617 = vmatpush2.msra.mxu0 0.0
    %1618 = vmatprep.subr.mxu0 0.0
    %1619 = vmatpush2.msra.mxu0 0.0
    %1620 = vmatprep.subr.mxu0 0.0
    %1621 = vmatpush2.msra.mxu0 0.0
    %1622 = vmatprep.subr.mxu0 0.0
    %1623 = vmatpush2.msra.mxu0 0.0
    %1624 = vmatprep.subr.mxu0 0.0
    %1625 = vmatpush2.msra.mxu0 0.0
    %1626 = vmatprep.subr.mxu0 0.0
    %1627 = vmatpush2.msra.mxu0 0.0
    %1628 = vmatprep.subr.mxu0 0.0
    %1629 = vmatpush2.msra.mxu0 0.0
    %1630 = vmatprep.subr.mxu0 0.0
    %1631 = vmatpush2.msra.mxu0 0.0
    %1632 = vmatprep.subr.mxu0 0.0
    %1633 = vmatpush2.msra.mxu0 0.0
    %1634 = vmatprep.subr.mxu0 0.0
    %1635 = vmatpush2.msra.mxu0 0.0
    %1636 = vmatprep.subr.mxu0 0.0
    %1637 = vmatpush2.msra.mxu0 0.0
    %1638 = vmatprep.subr.mxu0 0.0
    %1639 = vmatpush2.msra.mxu0 0.0
    %1640 = vmatprep.subr.mxu0 0.0
    %1641 = vmatpush2.msra.mxu0 0.0
    %1642 = vmatprep.subr.mxu0 0.0
    %1643 = vmatpush2.msra.mxu0 0.0
    %1644 = vmatprep.subr.mxu0 0.0
    %1645 = vmatpush2.msra.mxu0 0.0
    %1646 = vmatprep.subr.mxu0 0.0
    %1647 = vmatpush2.msra.mxu0 0.0
    %1648 = vmatprep.mubr.f32.mxu0 0.0
    %1649 = vmatmul.mubr.f32.gmra.mxu0 0.0
    %v1650 = vpop.f32.mrf.mxu0
    %v1651 = vadd.f32 0.0, %v1650
    %v1652 = vpop.f32.mrf.mxu0
    %v1653 = vadd.f32 0.0, %v1652
    %1654 = vdwg.mxu0
    %v1655 = vadd.f32 %v1550, %v1651
    %v1656 = vadd.f32 %v1551, %v1653
    %v1657 = vxor.u32 %v1655, 2147483648
    %v1658 = vxor.u32 %v1656, 2147483648
    %v1659 = vmul.f32 %v1657, 1.442695
    %v1660 = vpow.pop %v1659
    %v1661 = vmul.f32 %v1658, 1.442695
    %v1662 = vpow.pop %v1661
    %v1663 = vadd.f32 %v1660, 1.0
    %v1664 = vadd.f32 %v1662, 1.0
    %v1665 = vrcp.pop %v1663
    %v1666 = vmul.f32 1.0, %v1665
    %v1667 = vrcp.pop %v1664
    %v1668 = vmul.f32 1.0, %v1667
    %v1669 = vtanh.pop %v1656
    %v1670 = vmul.f32 %v1666, 0.0
    %1672 = vrot.lane.b32.xlu0 %v1669, 64
    %v1673 = vpop.permute.xlu0 %1672
    %v1675 = vmul.f32 %v1666, %v1673
    %1677 = vrot.lane.b32.xlu0 %v1675, 64
    %v1678 = vpop.permute.xlu0 %1677
    %v1680 = vadd.f32 %v1670, %v1678
    %v1681 = vtanh.pop %v1680
    %1683 = vrot.lane.b32.xlu0 %v1681, 64
    %v1684 = vpop.permute.xlu0 %1683
    %v1686 = vmul.f32 %v1668, %v1684
    %1688 = vrot.lane.b32.xlu0 %v1686, 64
    %v1689 = vpop.permute.xlu0 %1688
    %v1691 = vsel %vm439, %v1686, %v1689
    %v1692 = vmul.f32 %v1691, %v101
    %v1695 = vrot.slane %v1457, 2
    %v1696 = vrot.slane %v1459, 2
    %v1699 = vrot.slane %v1540, 2
    %v1700 = vrot.slane %v1542, 2
    %v1703 = vsel %vm297, %v1695, %v1699
    %v1704 = vsel %vm297, %v1696, %v1700
    %1705 = vmatprep.subr.mxu0 %v1583
    %1706 = vmatpush1.msra.mxu0 %v1582
    %1707 = vmatprep.subr.mxu0 %v1581
    %1708 = vmatpush1.msra.mxu0 %v1580
    %1709 = vmatprep.subr.mxu0 %v1579
    %1710 = vmatpush1.msra.mxu0 %v1578
    %1711 = vmatprep.subr.mxu0 %v1577
    %1712 = vmatpush1.msra.mxu0 %v1576
    %1713 = vmatprep.subr.mxu0 %v1575
    %1714 = vmatpush1.msra.mxu0 %v1574
    %1715 = vmatprep.subr.mxu0 %v1573
    %1716 = vmatpush1.msra.mxu0 %v1572
    %1717 = vmatprep.subr.mxu0 %v1571
    %1718 = vmatpush1.msra.mxu0 %v1570
    %1719 = vmatprep.subr.mxu0 %v1569
    %1720 = vmatpush1.msra.mxu0 %v1568
    %1721 = vmatprep.subr.mxu0 %v1567
    %1722 = vmatpush1.msra.mxu0 %v1566
    %1723 = vmatprep.subr.mxu0 %v1565
    %1724 = vmatpush1.msra.mxu0 %v1564
    %1725 = vmatprep.subr.mxu0 %v1563
    %1726 = vmatpush1.msra.mxu0 %v1562
    %1727 = vmatprep.subr.mxu0 %v1561
    %1728 = vmatpush1.msra.mxu0 %v1560
    %1729 = vmatprep.subr.mxu0 %v1559
    %1730 = vmatpush1.msra.mxu0 %v1558
    %1731 = vmatprep.subr.mxu0 %v1557
    %1732 = vmatpush1.msra.mxu0 %v1556
    %1733 = vmatprep.subr.mxu0 %v1555
    %1734 = vmatpush1.msra.mxu0 %v1554
    %1735 = vmatprep.subr.mxu0 %v1553
    %1736 = vmatpush1.msra.mxu0 %v1552
    %1737 = vmatprep.subr.mxu0 0.0
    %1738 = vmatpush2.msra.mxu0 0.0
    %1739 = vmatprep.subr.mxu0 0.0
    %1740 = vmatpush2.msra.mxu0 0.0
    %1741 = vmatprep.subr.mxu0 0.0
    %1742 = vmatpush2.msra.mxu0 0.0
    %1743 = vmatprep.subr.mxu0 0.0
    %1744 = vmatpush2.msra.mxu0 0.0
    %1745 = vmatprep.subr.mxu0 0.0
    %1746 = vmatpush2.msra.mxu0 0.0
    %1747 = vmatprep.subr.mxu0 0.0
    %1748 = vmatpush2.msra.mxu0 0.0
    %1749 = vmatprep.subr.mxu0 0.0
    %1750 = vmatpush2.msra.mxu0 0.0
    %1751 = vmatprep.subr.mxu0 0.0
    %1752 = vmatpush2.msra.mxu0 0.0
    %1753 = vmatprep.subr.mxu0 0.0
    %1754 = vmatpush2.msra.mxu0 0.0
    %1755 = vmatprep.subr.mxu0 0.0
    %1756 = vmatpush2.msra.mxu0 0.0
    %1757 = vmatprep.subr.mxu0 0.0
    %1758 = vmatpush2.msra.mxu0 0.0
    %1759 = vmatprep.subr.mxu0 0.0
    %1760 = vmatpush2.msra.mxu0 0.0
    %1761 = vmatprep.subr.mxu0 0.0
    %1762 = vmatpush2.msra.mxu0 0.0
    %1763 = vmatprep.subr.mxu0 0.0
    %1764 = vmatpush2.msra.mxu0 0.0
    %1765 = vmatprep.subr.mxu0 0.0
    %1766 = vmatpush2.msra.mxu0 0.0
    %1767 = vmatprep.subr.mxu0 0.0
    %1768 = vmatpush2.msra.mxu0 0.0
    %1769 = vmatprep.mubr.f32.mxu0 0.0
    %1770 = vmatmul.mubr.f32.gmra.mxu0 %v1692
    %v1771 = vpop.f32.mrf.mxu0
    %v1772 = vadd.f32 0.0, %v1771
    %v1773 = vpop.f32.mrf.mxu0
    %v1774 = vadd.f32 0.0, %v1773
    %1775 = vdwg.mxu0
    %v1776 = vadd.f32 %v1703, %v1772
    %v1777 = vadd.f32 %v1704, %v1774
    %v1778 = vxor.u32 %v1776, 2147483648
    %v1779 = vxor.u32 %v1777, 2147483648
    %v1780 = vmul.f32 %v1778, 1.442695
    %v1781 = vpow.pop %v1780
    %v1782 = vmul.f32 %v1779, 1.442695
    %v1783 = vpow.pop %v1782
    %v1784 = vadd.f32 %v1781, 1.0
    %v1785 = vadd.f32 %v1783, 1.0
    %v1786 = vrcp.pop %v1784
    %v1787 = vmul.f32 1.0, %v1786
    %v1788 = vrcp.pop %v1785
    %v1789 = vmul.f32 1.0, %v1788
    %v1790 = vtanh.pop %v1777
    %v1791 = vmul.f32 %v1787, %v1680
    %1793 = vrot.lane.b32.xlu0 %v1790, 64
    %v1794 = vpop.permute.xlu0 %1793
    %v1796 = vmul.f32 %v1787, %v1794
    %1798 = vrot.lane.b32.xlu0 %v1796, 64
    %v1799 = vpop.permute.xlu0 %1798
    %v1801 = vadd.f32 %v1791, %v1799
    %v1802 = vtanh.pop %v1801
    %1804 = vrot.lane.b32.xlu0 %v1802, 64
    %v1805 = vpop.permute.xlu0 %1804
    %v1807 = vmul.f32 %v1789, %v1805
    %1809 = vrot.lane.b32.xlu0 %v1807, 64
    %v1810 = vpop.permute.xlu0 %1809
    %v1812 = vsel %vm439, %v1807, %v1810
    %v1813 = vmul.f32 %v1812, %v101
    %v1814 = vrot.slane %v1457, 4
    %v1815 = vrot.slane %v1459, 4
    %v1818 = vsel %vm297, %v1814, %v1540
    %v1819 = vsel %vm297, %v1815, %v1542
    %1820 = vmatprep.subr.mxu0 %v1583
    %1821 = vmatpush1.msra.mxu0 %v1582
    %1822 = vmatprep.subr.mxu0 %v1581
    %1823 = vmatpush1.msra.mxu0 %v1580
    %1824 = vmatprep.subr.mxu0 %v1579
    %1825 = vmatpush1.msra.mxu0 %v1578
    %1826 = vmatprep.subr.mxu0 %v1577
    %1827 = vmatpush1.msra.mxu0 %v1576
    %1828 = vmatprep.subr.mxu0 %v1575
    %1829 = vmatpush1.msra.mxu0 %v1574
    %1830 = vmatprep.subr.mxu0 %v1573
    %1831 = vmatpush1.msra.mxu0 %v1572
    %1832 = vmatprep.subr.mxu0 %v1571
    %1833 = vmatpush1.msra.mxu0 %v1570
    %1834 = vmatprep.subr.mxu0 %v1569
    %1835 = vmatpush1.msra.mxu0 %v1568
    %1836 = vmatprep.subr.mxu0 %v1567
    %1837 = vmatpush1.msra.mxu0 %v1566
    %1838 = vmatprep.subr.mxu0 %v1565
    %1839 = vmatpush1.msra.mxu0 %v1564
    %1840 = vmatprep.subr.mxu0 %v1563
    %1841 = vmatpush1.msra.mxu0 %v1562
    %1842 = vmatprep.subr.mxu0 %v1561
    %1843 = vmatpush1.msra.mxu0 %v1560
    %1844 = vmatprep.subr.mxu0 %v1559
    %1845 = vmatpush1.msra.mxu0 %v1558
    %1846 = vmatprep.subr.mxu0 %v1557
    %1847 = vmatpush1.msra.mxu0 %v1556
    %1848 = vmatprep.subr.mxu0 %v1555
    %1849 = vmatpush1.msra.mxu0 %v1554
    %1850 = vmatprep.subr.mxu0 %v1553
    %1851 = vmatpush1.msra.mxu0 %v1552
    %1852 = vmatprep.subr.mxu0 0.0
    %1853 = vmatpush2.msra.mxu0 0.0
    %1854 = vmatprep.subr.mxu0 0.0
    %1855 = vmatpush2.msra.mxu0 0.0
    %1856 = vmatprep.subr.mxu0 0.0
    %1857 = vmatpush2.msra.mxu0 0.0
    %1858 = vmatprep.subr.mxu0 0.0
    %1859 = vmatpush2.msra.mxu0 0.0
    %1860 = vmatprep.subr.mxu0 0.0
    %1861 = vmatpush2.msra.mxu0 0.0
    %1862 = vmatprep.subr.mxu0 0.0
    %1863 = vmatpush2.msra.mxu0 0.0
    %1864 = vmatprep.subr.mxu0 0.0
    %1865 = vmatpush2.msra.mxu0 0.0
    %1866 = vmatprep.subr.mxu0 0.0
    %1867 = vmatpush2.msra.mxu0 0.0
    %1868 = vmatprep.subr.mxu0 0.0
    %1869 = vmatpush2.msra.mxu0 0.0
    %1870 = vmatprep.subr.mxu0 0.0
    %1871 = vmatpush2.msra.mxu0 0.0
    %1872 = vmatprep.subr.mxu0 0.0
    %1873 = vmatpush2.msra.mxu0 0.0
    %1874 = vmatprep.subr.mxu0 0.0
    %1875 = vmatpush2.msra.mxu0 0.0
    %1876 = vmatprep.subr.mxu0 0.0
    %1877 = vmatpush2.msra.mxu0 0.0
    %1878 = vmatprep.subr.mxu0 0.0
    %1879 = vmatpush2.msra.mxu0 0.0
    %1880 = vmatprep.subr.mxu0 0.0
    %1881 = vmatpush2.msra.mxu0 0.0
    %1882 = vmatprep.subr.mxu0 0.0
    %1883 = vmatpush2.msra.mxu0 0.0
    %1884 = vmatprep.mubr.f32.mxu0 0.0
    %1885 = vmatmul.mubr.f32.gmra.mxu0 %v1813
    %v1886 = vpop.f32.mrf.mxu0
    %v1887 = vadd.f32 0.0, %v1886
    %v1888 = vpop.f32.mrf.mxu0
    %v1889 = vadd.f32 0.0, %v1888
    %1890 = vdwg.mxu0
    %v1891 = vadd.f32 %v1818, %v1887
    %v1892 = vadd.f32 %v1819, %v1889
    %v1893 = vxor.u32 %v1891, 2147483648
    %v1894 = vxor.u32 %v1892, 2147483648
    %v1895 = vmul.f32 %v1893, 1.442695
    %v1896 = vpow.pop %v1895
    %v1897 = vmul.f32 %v1894, 1.442695
    %v1898 = vpow.pop %v1897
    %v1899 = vadd.f32 %v1896, 1.0
    %v1900 = vadd.f32 %v1898, 1.0
    %v1901 = vrcp.pop %v1899
    %v1902 = vmul.f32 1.0, %v1901
    %v1903 = vrcp.pop %v1900
    %v1904 = vmul.f32 1.0, %v1903
    %v1905 = vtanh.pop %v1892
    %v1906 = vmul.f32 %v1902, %v1801
    %1908 = vrot.lane.b32.xlu0 %v1905, 64
    %v1909 = vpop.permute.xlu0 %1908
    %v1911 = vmul.f32 %v1902, %v1909
    %1913 = vrot.lane.b32.xlu0 %v1911, 64
    %v1914 = vpop.permute.xlu0 %1913
    %v1916 = vadd.f32 %v1906, %v1914
    %v1917 = vtanh.pop %v1916
    %1919 = vrot.lane.b32.xlu0 %v1917, 64
    %v1920 = vpop.permute.xlu0 %1919
    %v1922 = vmul.f32 %v1904, %v1920
    %1924 = vrot.lane.b32.xlu0 %v1922, 64
    %v1925 = vpop.permute.xlu0 %1924
    %v1927 = vsel %vm439, %v1922, %v1925
    %v1928 = vmul.f32 %v1927, %v101
    %v1929 = vrot.slane %v1457, 6
    %v1930 = vrot.slane %v1459, 6
    %v1933 = vrot.slane %v1540, 6
    %v1934 = vrot.slane %v1542, 6
    %v1937 = vsel %vm297, %v1929, %v1933
    %v1938 = vsel %vm297, %v1930, %v1934
    %1939 = vmatprep.subr.mxu0 %v1583
    %1940 = vmatpush1.msra.mxu0 %v1582
    %1941 = vmatprep.subr.mxu0 %v1581
    %1942 = vmatpush1.msra.mxu0 %v1580
    %1943 = vmatprep.subr.mxu0 %v1579
    %1944 = vmatpush1.msra.mxu0 %v1578
    %1945 = vmatprep.subr.mxu0 %v1577
    %1946 = vmatpush1.msra.mxu0 %v1576
    %1947 = vmatprep.subr.mxu0 %v1575
    %1948 = vmatpush1.msra.mxu0 %v1574
    %1949 = vmatprep.subr.mxu0 %v1573
    %1950 = vmatpush1.msra.mxu0 %v1572
    %1951 = vmatprep.subr.mxu0 %v1571
    %1952 = vmatpush1.msra.mxu0 %v1570
    %1953 = vmatprep.subr.mxu0 %v1569
    %1954 = vmatpush1.msra.mxu0 %v1568
    %1955 = vmatprep.subr.mxu0 %v1567
    %1956 = vmatpush1.msra.mxu0 %v1566
    %1957 = vmatprep.subr.mxu0 %v1565
    %1958 = vmatpush1.msra.mxu0 %v1564
    %1959 = vmatprep.subr.mxu0 %v1563
    %1960 = vmatpush1.msra.mxu0 %v1562
    %1961 = vmatprep.subr.mxu0 %v1561
    %1962 = vmatpush1.msra.mxu0 %v1560
    %1963 = vmatprep.subr.mxu0 %v1559
    %1964 = vmatpush1.msra.mxu0 %v1558
    %1965 = vmatprep.subr.mxu0 %v1557
    %1966 = vmatpush1.msra.mxu0 %v1556
    %1967 = vmatprep.subr.mxu0 %v1555
    %1968 = vmatpush1.msra.mxu0 %v1554
    %1969 = vmatprep.subr.mxu0 %v1553
    %1970 = vmatpush1.msra.mxu0 %v1552
    %1971 = vmatprep.subr.mxu0 0.0
    %1972 = vmatpush2.msra.mxu0 0.0
    %1973 = vmatprep.subr.mxu0 0.0
    %1974 = vmatpush2.msra.mxu0 0.0
    %1975 = vmatprep.subr.mxu0 0.0
    %1976 = vmatpush2.msra.mxu0 0.0
    %1977 = vmatprep.subr.mxu0 0.0
    %1978 = vmatpush2.msra.mxu0 0.0
    %1979 = vmatprep.subr.mxu0 0.0
    %1980 = vmatpush2.msra.mxu0 0.0
    %1981 = vmatprep.subr.mxu0 0.0
    %1982 = vmatpush2.msra.mxu0 0.0
    %1983 = vmatprep.subr.mxu0 0.0
    %1984 = vmatpush2.msra.mxu0 0.0
    %1985 = vmatprep.subr.mxu0 0.0
    %1986 = vmatpush2.msra.mxu0 0.0
    %1987 = vmatprep.subr.mxu0 0.0
    %1988 = vmatpush2.msra.mxu0 0.0
    %1989 = vmatprep.subr.mxu0 0.0
    %1990 = vmatpush2.msra.mxu0 0.0
    %1991 = vmatprep.subr.mxu0 0.0
    %1992 = vmatpush2.msra.mxu0 0.0
    %1993 = vmatprep.subr.mxu0 0.0
    %1994 = vmatpush2.msra.mxu0 0.0
    %1995 = vmatprep.subr.mxu0 0.0
    %1996 = vmatpush2.msra.mxu0 0.0
    %1997 = vmatprep.subr.mxu0 0.0
    %1998 = vmatpush2.msra.mxu0 0.0
    %1999 = vmatprep.subr.mxu0 0.0
    %2000 = vmatpush2.msra.mxu0 0.0
    %2001 = vmatprep.subr.mxu0 0.0
    %2002 = vmatpush2.msra.mxu0 0.0
    %2003 = vmatprep.mubr.f32.mxu0 0.0
    %2004 = vmatmul.mubr.f32.gmra.mxu0 %v1928
    %v2005 = vpop.f32.mrf.mxu0
    %v2006 = vadd.f32 0.0, %v2005
    %v2007 = vpop.f32.mrf.mxu0
    %v2008 = vadd.f32 0.0, %v2007
    %2009 = vdwg.mxu0
    %v2010 = vadd.f32 %v1937, %v2006
    %v2011 = vadd.f32 %v1938, %v2008
    %v2012 = vxor.u32 %v2010, 2147483648
    %v2013 = vxor.u32 %v2011, 2147483648
    %v2014 = vmul.f32 %v2012, 1.442695
    %v2015 = vpow.pop %v2014
    %v2016 = vmul.f32 %v2013, 1.442695
    %v2017 = vpow.pop %v2016
    %v2018 = vadd.f32 %v2015, 1.0
    %v2019 = vadd.f32 %v2017, 1.0
    %v2020 = vrcp.pop %v2018
    %v2021 = vmul.f32 1.0, %v2020
    %v2022 = vrcp.pop %v2019
    %v2023 = vmul.f32 1.0, %v2022
    %v2024 = vtanh.pop %v2011
    %v2025 = vmul.f32 %v2021, %v1916
    %2027 = vrot.lane.b32.xlu0 %v2024, 64
    %v2028 = vpop.permute.xlu0 %2027
    %v2030 = vmul.f32 %v2021, %v2028
    %2032 = vrot.lane.b32.xlu0 %v2030, 64
    %v2033 = vpop.permute.xlu0 %2032
    %v2035 = vadd.f32 %v2025, %v2033
    %v2036 = vtanh.pop %v2035
    %2038 = vrot.lane.b32.xlu0 %v2036, 64
    %v2039 = vpop.permute.xlu0 %2038
    %v2041 = vmul.f32 %v2023, %v2039
    %2043 = vrot.lane.b32.xlu0 %v2041, 64
    %v2044 = vpop.permute.xlu0 %2043
    %v2046 = vsel %vm439, %v2041, %v2044
    %v2047 = vmul.f32 %v2046, %v101
    %v2050 = vrot.slane %v1534, 4
    %v2051 = vrot.slane %v1536, 4
    %v2054 = vsel %vm297, %v1463, %v2050
    %v2055 = vsel %vm297, %v1465, %v2051
    %2056 = vmatprep.subr.mxu0 %v1583
    %2057 = vmatpush1.msra.mxu0 %v1582
    %2058 = vmatprep.subr.mxu0 %v1581
    %2059 = vmatpush1.msra.mxu0 %v1580
    %2060 = vmatprep.subr.mxu0 %v1579
    %2061 = vmatpush1.msra.mxu0 %v1578
    %2062 = vmatprep.subr.mxu0 %v1577
    %2063 = vmatpush1.msra.mxu0 %v1576
    %2064 = vmatprep.subr.mxu0 %v1575
    %2065 = vmatpush1.msra.mxu0 %v1574
    %2066 = vmatprep.subr.mxu0 %v1573
    %2067 = vmatpush1.msra.mxu0 %v1572
    %2068 = vmatprep.subr.mxu0 %v1571
    %2069 = vmatpush1.msra.mxu0 %v1570
    %2070 = vmatprep.subr.mxu0 %v1569
    %2071 = vmatpush1.msra.mxu0 %v1568
    %2072 = vmatprep.subr.mxu0 %v1567
    %2073 = vmatpush1.msra.mxu0 %v1566
    %2074 = vmatprep.subr.mxu0 %v1565
    %2075 = vmatpush1.msra.mxu0 %v1564
    %2076 = vmatprep.subr.mxu0 %v1563
    %2077 = vmatpush1.msra.mxu0 %v1562
    %2078 = vmatprep.subr.mxu0 %v1561
    %2079 = vmatpush1.msra.mxu0 %v1560
    %2080 = vmatprep.subr.mxu0 %v1559
    %2081 = vmatpush1.msra.mxu0 %v1558
    %2082 = vmatprep.subr.mxu0 %v1557
    %2083 = vmatpush1.msra.mxu0 %v1556
    %2084 = vmatprep.subr.mxu0 %v1555
    %2085 = vmatpush1.msra.mxu0 %v1554
    %2086 = vmatprep.subr.mxu0 %v1553
    %2087 = vmatpush1.msra.mxu0 %v1552
    %2088 = vmatprep.subr.mxu0 0.0
    %2089 = vmatpush2.msra.mxu0 0.0
    %2090 = vmatprep.subr.mxu0 0.0
    %2091 = vmatpush2.msra.mxu0 0.0
    %2092 = vmatprep.subr.mxu0 0.0
    %2093 = vmatpush2.msra.mxu0 0.0
    %2094 = vmatprep.subr.mxu0 0.0
    %2095 = vmatpush2.msra.mxu0 0.0
    %2096 = vmatprep.subr.mxu0 0.0
    %2097 = vmatpush2.msra.mxu0 0.0
    %2098 = vmatprep.subr.mxu0 0.0
    %2099 = vmatpush2.msra.mxu0 0.0
    %2100 = vmatprep.subr.mxu0 0.0
    %2101 = vmatpush2.msra.mxu0 0.0
    %2102 = vmatprep.subr.mxu0 0.0
    %2103 = vmatpush2.msra.mxu0 0.0
    %2104 = vmatprep.subr.mxu0 0.0
    %2105 = vmatpush2.msra.mxu0 0.0
    %2106 = vmatprep.subr.mxu0 0.0
    %2107 = vmatpush2.msra.mxu0 0.0
    %2108 = vmatprep.subr.mxu0 0.0
    %2109 = vmatpush2.msra.mxu0 0.0
    %2110 = vmatprep.subr.mxu0 0.0
    %2111 = vmatpush2.msra.mxu0 0.0
    %2112 = vmatprep.subr.mxu0 0.0
    %2113 = vmatpush2.msra.mxu0 0.0
    %2114 = vmatprep.subr.mxu0 0.0
    %2115 = vmatpush2.msra.mxu0 0.0
    %2116 = vmatprep.subr.mxu0 0.0
    %2117 = vmatpush2.msra.mxu0 0.0
    %2118 = vmatprep.subr.mxu0 0.0
    %2119 = vmatpush2.msra.mxu0 0.0
    %2120 = vmatprep.mubr.f32.mxu0 0.0
    %2121 = vmatmul.mubr.f32.gmra.mxu0 %v2047
    %v2122 = vpop.f32.mrf.mxu0
    %v2123 = vadd.f32 0.0, %v2122
    %v2124 = vpop.f32.mrf.mxu0
    %v2125 = vadd.f32 0.0, %v2124
    %2126 = vdwg.mxu0
    %v2127 = vadd.f32 %v2054, %v2123
    %v2128 = vadd.f32 %v2055, %v2125
    %v2129 = vxor.u32 %v2127, 2147483648
    %v2130 = vxor.u32 %v2128, 2147483648
    %v2131 = vmul.f32 %v2129, 1.442695
    %v2132 = vpow.pop %v2131
    %v2133 = vmul.f32 %v2130, 1.442695
    %v2134 = vpow.pop %v2133
    %v2135 = vadd.f32 %v2132, 1.0
    %v2136 = vadd.f32 %v2134, 1.0
    %v2137 = vrcp.pop %v2135
    %v2138 = vmul.f32 1.0, %v2137
    %v2139 = vrcp.pop %v2136
    %v2140 = vmul.f32 1.0, %v2139
    %v2141 = vtanh.pop %v2128
    %v2142 = vmul.f32 %v2138, %v2035
    %2144 = vrot.lane.b32.xlu0 %v2141, 64
    %v2145 = vpop.permute.xlu0 %2144
    %v2147 = vmul.f32 %v2138, %v2145
    %2149 = vrot.lane.b32.xlu0 %v2147, 64
    %v2150 = vpop.permute.xlu0 %2149
    %v2152 = vadd.f32 %v2142, %v2150
    %v2153 = vtanh.pop %v2152
    %2155 = vrot.lane.b32.xlu0 %v2153, 64
    %v2156 = vpop.permute.xlu0 %2155
    %v2158 = vmul.f32 %v2140, %v2156
    %2160 = vrot.lane.b32.xlu0 %v2158, 64
    %v2161 = vpop.permute.xlu0 %2160
    %v2163 = vsel %vm439, %v2158, %v2161
    %v2164 = vmul.f32 %v2163, %v101
    %v2167 = vrot.slane %v1463, 2
    %v2168 = vrot.slane %v1465, 2
    %v2171 = vrot.slane %v1534, 2
    %v2172 = vrot.slane %v1536, 2
    %v2175 = vsel %vm297, %v2167, %v2171
    %v2176 = vsel %vm297, %v2168, %v2172
    %2177 = vmatprep.subr.mxu0 %v1583
    %2178 = vmatpush1.msra.mxu0 %v1582
    %2179 = vmatprep.subr.mxu0 %v1581
    %2180 = vmatpush1.msra.mxu0 %v1580
    %2181 = vmatprep.subr.mxu0 %v1579
    %2182 = vmatpush1.msra.mxu0 %v1578
    %2183 = vmatprep.subr.mxu0 %v1577
    %2184 = vmatpush1.msra.mxu0 %v1576
    %2185 = vmatprep.subr.mxu0 %v1575
    %2186 = vmatpush1.msra.mxu0 %v1574
    %2187 = vmatprep.subr.mxu0 %v1573
    %2188 = vmatpush1.msra.mxu0 %v1572
    %2189 = vmatprep.subr.mxu0 %v1571
    %2190 = vmatpush1.msra.mxu0 %v1570
    %2191 = vmatprep.subr.mxu0 %v1569
    %2192 = vmatpush1.msra.mxu0 %v1568
    %2193 = vmatprep.subr.mxu0 %v1567
    %2194 = vmatpush1.msra.mxu0 %v1566
    %2195 = vmatprep.subr.mxu0 %v1565
    %2196 = vmatpush1.msra.mxu0 %v1564
    %2197 = vmatprep.subr.mxu0 %v1563
    %2198 = vmatpush1.msra.mxu0 %v1562
    %2199 = vmatprep.subr.mxu0 %v1561
    %2200 = vmatpush1.msra.mxu0 %v1560
    %2201 = vmatprep.subr.mxu0 %v1559
    %2202 = vmatpush1.msra.mxu0 %v1558
    %2203 = vmatprep.subr.mxu0 %v1557
    %2204 = vmatpush1.msra.mxu0 %v1556
    %2205 = vmatprep.subr.mxu0 %v1555
    %2206 = vmatpush1.msra.mxu0 %v1554
    %2207 = vmatprep.subr.mxu0 %v1553
    %2208 = vmatpush1.msra.mxu0 %v1552
    %2209 = vmatprep.subr.mxu0 0.0
    %2210 = vmatpush2.msra.mxu0 0.0
    %2211 = vmatprep.subr.mxu0 0.0
    %2212 = vmatpush2.msra.mxu0 0.0
    %2213 = vmatprep.subr.mxu0 0.0
    %2214 = vmatpush2.msra.mxu0 0.0
    %2215 = vmatprep.subr.mxu0 0.0
    %2216 = vmatpush2.msra.mxu0 0.0
    %2217 = vmatprep.subr.mxu0 0.0
    %2218 = vmatpush2.msra.mxu0 0.0
    %2219 = vmatprep.subr.mxu0 0.0
    %2220 = vmatpush2.msra.mxu0 0.0
    %2221 = vmatprep.subr.mxu0 0.0
    %2222 = vmatpush2.msra.mxu0 0.0
    %2223 = vmatprep.subr.mxu0 0.0
    %2224 = vmatpush2.msra.mxu0 0.0
    %2225 = vmatprep.subr.mxu0 0.0
    %2226 = vmatpush2.msra.mxu0 0.0
    %2227 = vmatprep.subr.mxu0 0.0
    %2228 = vmatpush2.msra.mxu0 0.0
    %2229 = vmatprep.subr.mxu0 0.0
    %2230 = vmatpush2.msra.mxu0 0.0
    %2231 = vmatprep.subr.mxu0 0.0
    %2232 = vmatpush2.msra.mxu0 0.0
    %2233 = vmatprep.subr.mxu0 0.0
    %2234 = vmatpush2.msra.mxu0 0.0
    %2235 = vmatprep.subr.mxu0 0.0
    %2236 = vmatpush2.msra.mxu0 0.0
    %2237 = vmatprep.subr.mxu0 0.0
    %2238 = vmatpush2.msra.mxu0 0.0
    %2239 = vmatprep.subr.mxu0 0.0
    %2240 = vmatpush2.msra.mxu0 0.0
    %2241 = vmatprep.mubr.f32.mxu0 0.0
    %2242 = vmatmul.mubr.f32.gmra.mxu0 %v2164
    %v2243 = vpop.f32.mrf.mxu0
    %v2244 = vadd.f32 0.0, %v2243
    %v2245 = vpop.f32.mrf.mxu0
    %v2246 = vadd.f32 0.0, %v2245
    %2247 = vdwg.mxu0
    %v2248 = vadd.f32 %v2175, %v2244
    %v2249 = vadd.f32 %v2176, %v2246
    %v2250 = vxor.u32 %v2248, 2147483648
    %v2251 = vxor.u32 %v2249, 2147483648
    %v2252 = vmul.f32 %v2250, 1.442695
    %v2253 = vpow.pop %v2252
    %v2254 = vmul.f32 %v2251, 1.442695
    %v2255 = vpow.pop %v2254
    %v2256 = vadd.f32 %v2253, 1.0
    %v2257 = vadd.f32 %v2255, 1.0
    %v2258 = vrcp.pop %v2256
    %v2259 = vmul.f32 1.0, %v2258
    %v2260 = vrcp.pop %v2257
    %v2261 = vmul.f32 1.0, %v2260
    %v2262 = vtanh.pop %v2249
    %v2263 = vmul.f32 %v2259, %v2152
    %2265 = vrot.lane.b32.xlu0 %v2262, 64
    %v2266 = vpop.permute.xlu0 %2265
    %v2268 = vmul.f32 %v2259, %v2266
    %2270 = vrot.lane.b32.xlu0 %v2268, 64
    %v2271 = vpop.permute.xlu0 %2270
    %v2273 = vadd.f32 %v2263, %v2271
    %v2274 = vtanh.pop %v2273
    %2276 = vrot.lane.b32.xlu0 %v2274, 64
    %v2277 = vpop.permute.xlu0 %2276
    %v2279 = vmul.f32 %v2261, %v2277
    %2281 = vrot.lane.b32.xlu0 %v2279, 64
    %v2282 = vpop.permute.xlu0 %2281
    %v2284 = vsel %vm439, %v2279, %v2282
    %v2285 = vmul.f32 %v2284, %v101
    %v2286 = vrot.slane %v1463, 4
    %v2287 = vrot.slane %v1465, 4
    %v2290 = vsel %vm297, %v2286, %v1534
    %v2291 = vsel %vm297, %v2287, %v1536
    %2292 = vmatprep.subr.mxu0 %v1583
    %2293 = vmatpush1.msra.mxu0 %v1582
    %2294 = vmatprep.subr.mxu0 %v1581
    %2295 = vmatpush1.msra.mxu0 %v1580
    %2296 = vmatprep.subr.mxu0 %v1579
    %2297 = vmatpush1.msra.mxu0 %v1578
    %2298 = vmatprep.subr.mxu0 %v1577
    %2299 = vmatpush1.msra.mxu0 %v1576
    %2300 = vmatprep.subr.mxu0 %v1575
    %2301 = vmatpush1.msra.mxu0 %v1574
    %2302 = vmatprep.subr.mxu0 %v1573
    %2303 = vmatpush1.msra.mxu0 %v1572
    %2304 = vmatprep.subr.mxu0 %v1571
    %2305 = vmatpush1.msra.mxu0 %v1570
    %2306 = vmatprep.subr.mxu0 %v1569
    %2307 = vmatpush1.msra.mxu0 %v1568
    %2308 = vmatprep.subr.mxu0 %v1567
    %2309 = vmatpush1.msra.mxu0 %v1566
    %2310 = vmatprep.subr.mxu0 %v1565
    %2311 = vmatpush1.msra.mxu0 %v1564
    %2312 = vmatprep.subr.mxu0 %v1563
    %2313 = vmatpush1.msra.mxu0 %v1562
    %2314 = vmatprep.subr.mxu0 %v1561
    %2315 = vmatpush1.msra.mxu0 %v1560
    %2316 = vmatprep.subr.mxu0 %v1559
    %2317 = vmatpush1.msra.mxu0 %v1558
    %2318 = vmatprep.subr.mxu0 %v1557
    %2319 = vmatpush1.msra.mxu0 %v1556
    %2320 = vmatprep.subr.mxu0 %v1555
    %2321 = vmatpush1.msra.mxu0 %v1554
    %2322 = vmatprep.subr.mxu0 %v1553
    %2323 = vmatpush1.msra.mxu0 %v1552
    %2324 = vmatprep.subr.mxu0 0.0
    %2325 = vmatpush2.msra.mxu0 0.0
    %2326 = vmatprep.subr.mxu0 0.0
    %2327 = vmatpush2.msra.mxu0 0.0
    %2328 = vmatprep.subr.mxu0 0.0
    %2329 = vmatpush2.msra.mxu0 0.0
    %2330 = vmatprep.subr.mxu0 0.0
    %2331 = vmatpush2.msra.mxu0 0.0
    %2332 = vmatprep.subr.mxu0 0.0
    %2333 = vmatpush2.msra.mxu0 0.0
    %2334 = vmatprep.subr.mxu0 0.0
    %2335 = vmatpush2.msra.mxu0 0.0
    %2336 = vmatprep.subr.mxu0 0.0
    %2337 = vmatpush2.msra.mxu0 0.0
    %2338 = vmatprep.subr.mxu0 0.0
    %2339 = vmatpush2.msra.mxu0 0.0
    %2340 = vmatprep.subr.mxu0 0.0
    %2341 = vmatpush2.msra.mxu0 0.0
    %2342 = vmatprep.subr.mxu0 0.0
    %2343 = vmatpush2.msra.mxu0 0.0
    %2344 = vmatprep.subr.mxu0 0.0
    %2345 = vmatpush2.msra.mxu0 0.0
    %2346 = vmatprep.subr.mxu0 0.0
    %2347 = vmatpush2.msra.mxu0 0.0
    %2348 = vmatprep.subr.mxu0 0.0
    %2349 = vmatpush2.msra.mxu0 0.0
    %2350 = vmatprep.subr.mxu0 0.0
    %2351 = vmatpush2.msra.mxu0 0.0
    %2352 = vmatprep.subr.mxu0 0.0
    %2353 = vmatpush2.msra.mxu0 0.0
    %2354 = vmatprep.subr.mxu0 0.0
    %2355 = vmatpush2.msra.mxu0 0.0
    %2356 = vmatprep.mubr.f32.mxu0 0.0
    %2357 = vmatmul.mubr.f32.gmra.mxu0 %v2285
    %v2358 = vpop.f32.mrf.mxu0
    %v2359 = vadd.f32 0.0, %v2358
    %v2360 = vpop.f32.mrf.mxu0
    %v2361 = vadd.f32 0.0, %v2360
    %2362 = vdwg.mxu0
    %v2363 = vadd.f32 %v2290, %v2359
    %v2364 = vadd.f32 %v2291, %v2361
    %v2365 = vxor.u32 %v2363, 2147483648
    %v2366 = vxor.u32 %v2364, 2147483648
    %v2367 = vmul.f32 %v2365, 1.442695
    %v2368 = vpow.pop %v2367
    %v2369 = vmul.f32 %v2366, 1.442695
    %v2370 = vpow.pop %v2369
    %v2371 = vadd.f32 %v2368, 1.0
    %v2372 = vadd.f32 %v2370, 1.0
    %v2373 = vrcp.pop %v2371
    %v2374 = vmul.f32 1.0, %v2373
    %v2375 = vrcp.pop %v2372
    %v2376 = vmul.f32 1.0, %v2375
    %v2377 = vtanh.pop %v2364
    %v2378 = vmul.f32 %v2374, %v2273
    %2380 = vrot.lane.b32.xlu0 %v2377, 64
    %v2381 = vpop.permute.xlu0 %2380
    %v2383 = vmul.f32 %v2374, %v2381
    %2385 = vrot.lane.b32.xlu0 %v2383, 64
    %v2386 = vpop.permute.xlu0 %2385
    %v2388 = vadd.f32 %v2378, %v2386
    %v2389 = vtanh.pop %v2388
    %2391 = vrot.lane.b32.xlu0 %v2389, 64
    %v2392 = vpop.permute.xlu0 %2391
    %v2394 = vmul.f32 %v2376, %v2392
    %2396 = vrot.lane.b32.xlu0 %v2394, 64
    %v2397 = vpop.permute.xlu0 %2396
    %v2399 = vsel %vm439, %v2394, %v2397
    %v2400 = vmul.f32 %v2399, %v101
    %v2401 = vrot.slane %v1463, 6
    %v2402 = vrot.slane %v1465, 6
    %v2405 = vrot.slane %v1534, 6
    %v2406 = vrot.slane %v1536, 6
    %v2409 = vsel %vm297, %v2401, %v2405
    %v2410 = vsel %vm297, %v2402, %v2406
    %2411 = vmatprep.subr.mxu0 %v1583
    %2412 = vmatpush1.msra.mxu0 %v1582
    %2413 = vmatprep.subr.mxu0 %v1581
    %2414 = vmatpush1.msra.mxu0 %v1580
    %2415 = vmatprep.subr.mxu0 %v1579
    %2416 = vmatpush1.msra.mxu0 %v1578
    %2417 = vmatprep.subr.mxu0 %v1577
    %2418 = vmatpush1.msra.mxu0 %v1576
    %2419 = vmatprep.subr.mxu0 %v1575
    %2420 = vmatpush1.msra.mxu0 %v1574
    %2421 = vmatprep.subr.mxu0 %v1573
    %2422 = vmatpush1.msra.mxu0 %v1572
    %2423 = vmatprep.subr.mxu0 %v1571
    %2424 = vmatpush1.msra.mxu0 %v1570
    %2425 = vmatprep.subr.mxu0 %v1569
    %2426 = vmatpush1.msra.mxu0 %v1568
    %2427 = vmatprep.subr.mxu0 %v1567
    %2428 = vmatpush1.msra.mxu0 %v1566
    %2429 = vmatprep.subr.mxu0 %v1565
    %2430 = vmatpush1.msra.mxu0 %v1564
    %2431 = vmatprep.subr.mxu0 %v1563
    %2432 = vmatpush1.msra.mxu0 %v1562
    %2433 = vmatprep.subr.mxu0 %v1561
    %2434 = vmatpush1.msra.mxu0 %v1560
    %2435 = vmatprep.subr.mxu0 %v1559
    %2436 = vmatpush1.msra.mxu0 %v1558
    %2437 = vmatprep.subr.mxu0 %v1557
    %2438 = vmatpush1.msra.mxu0 %v1556
    %2439 = vmatprep.subr.mxu0 %v1555
    %2440 = vmatpush1.msra.mxu0 %v1554
    %2441 = vmatprep.subr.mxu0 %v1553
    %2442 = vmatpush1.msra.mxu0 %v1552
    %2443 = vmatprep.subr.mxu0 0.0
    %2444 = vmatpush2.msra.mxu0 0.0
    %2445 = vmatprep.subr.mxu0 0.0
    %2446 = vmatpush2.msra.mxu0 0.0
    %2447 = vmatprep.subr.mxu0 0.0
    %2448 = vmatpush2.msra.mxu0 0.0
    %2449 = vmatprep.subr.mxu0 0.0
    %2450 = vmatpush2.msra.mxu0 0.0
    %2451 = vmatprep.subr.mxu0 0.0
    %2452 = vmatpush2.msra.mxu0 0.0
    %2453 = vmatprep.subr.mxu0 0.0
    %2454 = vmatpush2.msra.mxu0 0.0
    %2455 = vmatprep.subr.mxu0 0.0
    %2456 = vmatpush2.msra.mxu0 0.0
    %2457 = vmatprep.subr.mxu0 0.0
    %2458 = vmatpush2.msra.mxu0 0.0
    %2459 = vmatprep.subr.mxu0 0.0
    %2460 = vmatpush2.msra.mxu0 0.0
    %2461 = vmatprep.subr.mxu0 0.0
    %2462 = vmatpush2.msra.mxu0 0.0
    %2463 = vmatprep.subr.mxu0 0.0
    %2464 = vmatpush2.msra.mxu0 0.0
    %2465 = vmatprep.subr.mxu0 0.0
    %2466 = vmatpush2.msra.mxu0 0.0
    %2467 = vmatprep.subr.mxu0 0.0
    %2468 = vmatpush2.msra.mxu0 0.0
    %2469 = vmatprep.subr.mxu0 0.0
    %2470 = vmatpush2.msra.mxu0 0.0
    %2471 = vmatprep.subr.mxu0 0.0
    %2472 = vmatpush2.msra.mxu0 0.0
    %2473 = vmatprep.subr.mxu0 0.0
    %2474 = vmatpush2.msra.mxu0 0.0
    %2475 = vmatprep.mubr.f32.mxu0 0.0
    %2476 = vmatmul.mubr.f32.gmra.mxu0 %v2400
    %v2477 = vpop.f32.mrf.mxu0
    %v2478 = vadd.f32 0.0, %v2477
    %v2479 = vpop.f32.mrf.mxu0
    %v2480 = vadd.f32 0.0, %v2479
    %2481 = vdwg.mxu0
    %v2482 = vadd.f32 %v2409, %v2478
    %v2483 = vadd.f32 %v2410, %v2480
    %v2484 = vxor.u32 %v2482, 2147483648
    %v2485 = vxor.u32 %v2483, 2147483648
    %v2486 = vmul.f32 %v2484, 1.442695
    %v2487 = vpow.pop %v2486
    %v2488 = vmul.f32 %v2485, 1.442695
    %v2489 = vpow.pop %v2488
    %v2490 = vadd.f32 %v2487, 1.0
    %v2491 = vadd.f32 %v2489, 1.0
    %v2492 = vrcp.pop %v2490
    %v2493 = vmul.f32 1.0, %v2492
    %v2494 = vrcp.pop %v2491
    %v2495 = vmul.f32 1.0, %v2494
    %v2496 = vtanh.pop %v2483
    %v2497 = vmul.f32 %v2493, %v2388
    %2499 = vrot.lane.b32.xlu0 %v2496, 64
    %v2500 = vpop.permute.xlu0 %2499
    %v2502 = vmul.f32 %v2493, %v2500
    %2504 = vrot.lane.b32.xlu0 %v2502, 64
    %v2505 = vpop.permute.xlu0 %2504
    %v2507 = vadd.f32 %v2497, %v2505
    %v2508 = vtanh.pop %v2507
    %2510 = vrot.lane.b32.xlu0 %v2508, 64
    %v2511 = vpop.permute.xlu0 %2510
    %v2513 = vmul.f32 %v2495, %v2511
    %v2514 = vrot.slane %v1686, 2
    %2515 = vrot.lane.b32.xlu0 %v2514, 64
    %v2516 = vpop.permute.xlu0 %2515
    %v2518 = vsel %vm439, %v2513, %v2516
    %v2519 = vsel %vm297, %v2518, 0.0
    %2520 = vadd.xlane.f32.xlu0 %v2519
    %v2521 = vpop.xlane.xlu0 %2520
    %v2522 = vrcp.pop 128.0
    %v2523 = vmul.f32 %v2521, %v2522
    %v2524 = vsub.f32 %v2518, %v2523
    %v2525 = vmul.f32 %v2524, %v2524
    %v2526 = vsel %vm297, %v2525, 0.0
    %2527 = vadd.xlane.f32.xlu0 %v2526
    %v2528 = vpop.xlane.xlu0 %2527
    %v2529 = vmul.f32 %v2528, %v2522
    %v2530 = vadd.f32 %v2529, 1e-05
    %v2531 = vrsqrt.pop %v2530
    %v2532 = vmul.f32 %v2524, %v2531
    %v2533 = vld [vmem:[%s7] sm:$0x1]
    %v2535 = vlaneseq
    %v2536 = vshrl.u32 %v2535, 7
    %v2537 = vsub.s32 0, %v2536
    %v2538 = vrot.slane %v2533, %v2537
    %v2540 = vmul.f32 %v2532, %v2538
    %v2541 = vld [vmem:[%s8] sm:$0x1]
    %v2543 = vlaneseq
    %v2544 = vshrl.u32 %v2543, 7
    %v2545 = vsub.s32 0, %v2544
    %v2546 = vrot.slane %v2541, %v2545
    %v2548 = vadd.f32 %v2540, %v2546
    %v2549 = vld [vmem:[%s9] sm:$0xff]
    %v2550 = vld [vmem:[%s9 + $0x8] sm:$0xff]
    %v2551 = vld [vmem:[%s9 + $0x10] sm:$0xff]
    %v2552 = vld [vmem:[%s9 + $0x18] sm:$0xff]
    %v2553 = vld [vmem:[%s9 + $0x20] sm:$0xff]
    %v2554 = vld [vmem:[%s9 + $0x28] sm:$0xff]
    %v2555 = vld [vmem:[%s9 + $0x30] sm:$0xff]
    %v2556 = vld [vmem:[%s9 + $0x38] sm:$0xff]
    %v2557 = vld [vmem:[%s9 + $0x40] sm:$0xff]
    %v2558 = vld [vmem:[%s9 + $0x48] sm:$0xff]
    %v2559 = vld [vmem:[%s9 + $0x50] sm:$0xff]
    %v2560 = vld [vmem:[%s9 + $0x58] sm:$0xff]
    %v2561 = vld [vmem:[%s9 + $0x60] sm:$0xff]
    %v2562 = vld [vmem:[%s9 + $0x68] sm:$0xff]
    %v2563 = vld [vmem:[%s9 + $0x70] sm:$0xff]
    %v2564 = vld [vmem:[%s9 + $0x78] sm:$0xff]
    %v2565 = vld [vmem:[%s10] sm:$0x1]
    %v2567 = vlaneseq
    %v2568 = vshrl.u32 %v2567, 7
    %v2569 = vsub.s32 0, %v2568
    %v2570 = vrot.slane %v2565, %v2569
    %2572 = vmatprep.subr.mxu0 0.0
    %2573 = vmatpush1.msra.mxu0 %v2564
    %2574 = vmatprep.subr.mxu0 0.0
    %2575 = vmatpush1.msra.mxu0 %v2563
    %2576 = vmatprep.subr.mxu0 0.0
    %2577 = vmatpush1.msra.mxu0 %v2562
    %2578 = vmatprep.subr.mxu0 0.0
    %2579 = vmatpush1.msra.mxu0 %v2561
    %2580 = vmatprep.subr.mxu0 0.0
    %2581 = vmatpush1.msra.mxu0 %v2560
    %2582 = vmatprep.subr.mxu0 0.0
    %2583 = vmatpush1.msra.mxu0 %v2559
    %2584 = vmatprep.subr.mxu0 0.0
    %2585 = vmatpush1.msra.mxu0 %v2558
    %2586 = vmatprep.subr.mxu0 0.0
    %2587 = vmatpush1.msra.mxu0 %v2557
    %2588 = vmatprep.subr.mxu0 0.0
    %2589 = vmatpush1.msra.mxu0 %v2556
    %2590 = vmatprep.subr.mxu0 0.0
    %2591 = vmatpush1.msra.mxu0 %v2555
    %2592 = vmatprep.subr.mxu0 0.0
    %2593 = vmatpush1.msra.mxu0 %v2554
    %2594 = vmatprep.subr.mxu0 0.0
    %2595 = vmatpush1.msra.mxu0 %v2553
    %2596 = vmatprep.subr.mxu0 0.0
    %2597 = vmatpush1.msra.mxu0 %v2552
    %2598 = vmatprep.subr.mxu0 0.0
    %2599 = vmatpush1.msra.mxu0 %v2551
    %2600 = vmatprep.subr.mxu0 0.0
    %2601 = vmatpush1.msra.mxu0 %v2550
    %2602 = vmatprep.subr.mxu0 0.0
    %2603 = vmatpush1.msra.mxu0 %v2549
    %2604 = vmatprep.subr.mxu0 0.0
    %2605 = vmatpush2.msra.mxu0 0.0
    %2606 = vmatprep.subr.mxu0 0.0
    %2607 = vmatpush2.msra.mxu0 0.0
    %2608 = vmatprep.subr.mxu0 0.0
    %2609 = vmatpush2.msra.mxu0 0.0
    %2610 = vmatprep.subr.mxu0 0.0
    %2611 = vmatpush2.msra.mxu0 0.0
    %2612 = vmatprep.subr.mxu0 0.0
    %2613 = vmatpush2.msra.mxu0 0.0
    %2614 = vmatprep.subr.mxu0 0.0
    %2615 = vmatpush2.msra.mxu0 0.0
    %2616 = vmatprep.subr.mxu0 0.0
    %2617 = vmatpush2.msra.mxu0 0.0
    %2618 = vmatprep.subr.mxu0 0.0
    %2619 = vmatpush2.msra.mxu0 0.0
    %2620 = vmatprep.subr.mxu0 0.0
    %2621 = vmatpush2.msra.mxu0 0.0
    %2622 = vmatprep.subr.mxu0 0.0
    %2623 = vmatpush2.msra.mxu0 0.0
    %2624 = vmatprep.subr.mxu0 0.0
    %2625 = vmatpush2.msra.mxu0 0.0
    %2626 = vmatprep.subr.mxu0 0.0
    %2627 = vmatpush2.msra.mxu0 0.0
    %2628 = vmatprep.subr.mxu0 0.0
    %2629 = vmatpush2.msra.mxu0 0.0
    %2630 = vmatprep.subr.mxu0 0.0
    %2631 = vmatpush2.msra.mxu0 0.0
    %2632 = vmatprep.subr.mxu0 0.0
    %2633 = vmatpush2.msra.mxu0 0.0
    %2634 = vmatprep.subr.mxu0 0.0
    %2635 = vmatpush2.msra.mxu0 0.0
    %2636 = vmatprep.mubr.f32.mxu0 0.0
    %2637 = vmatmul.mubr.f32.gmra.mxu0 %v2548
    %v2638 = vpop.f32.mrf.mxu0
    %v2639 = vadd.f32 %v2570, %v2638
    %v2640 = vpop.f32.mrf.mxu0
    %2641 = vdwg.mxu0
    %v2642 = vtanh.pop %v2639
    %v2643 = vld [vmem:[%s11] sm:$0x1]
    %v2645 = vlaneseq
    %v2646 = vshrl.u32 %v2645, 7
    %v2647 = vsub.s32 0, %v2646
    %v2648 = vrot.slane %v2643, %v2647
    %v2650 = vmul.f32 %v2642, %v2648
    %vm2651 = vcmask 254976
    %v2652 = vsel %vm2651, %v2650, 0.0
    %2653 = vadd.xlane.f32.xlu0 %v2652
    %v2654 = vpop.xlane.xlu0 %2653
    %v2655 = vld [vmem:[#allocation2] sm:$0x1]
    %v2657 = vlaneseq
    %v2658 = vshrl.u32 %v2657, 7
    %v2659 = vsub.s32 0, %v2658
    %v2660 = vrot.slane %v2655, %v2659
    %v2662 = vadd.f32 %v2654, %v2660
    %vm2663 = vcmask 1024
    %2664 = vst.msk [vmem:[%s13] sm:$0x3] %vm2663, %v2662
    // Predicated region
    $region66: #{tpu_custom_call.1} parent=1 // pred_check
      _
    $region67: #{tpu_custom_call.1} parent=1 // pred_check_branch
      %2666 = sbr.rel (0) target = $region69
    $region68: #{tpu_custom_call.1} parent=1 // pred_region
      _
    $region69: #{tpu_custom_call.1} parent=1 // pred_fallthru
      _
    // Predicated region
    $region70: #{tpu_custom_call.1} parent=1 // pred_check
      _
    $region71: #{tpu_custom_call.1} parent=1 // pred_check_branch
      %2668 = sbr.rel (0) target = $region73
    $region72: #{tpu_custom_call.1} parent=1 // pred_region
      _
    $region73: #{tpu_custom_call.1} parent=1 // pred_fallthru
      _
    %2669 = vsyncpa [#allocation4], 1
    %2670 = vsyncpa [#allocation6], 1

</llo_original>
